<compile_context>
chip_gen: v7x
topology: tpu7x:2x2x1
jax: 0.10.0
libtpu: 0.0.40
codegen_flags: <defaults>
</compile_context>

<pallas_src>
import functools

import numpy as np
import jax
import jax.numpy as jnp
from jax import lax
from jax.experimental import pallas as pl
from jax.experimental.pallas import tpu as pltpu

# ----- model dimensions (small stand-ins, consistent with the module structure) -----
HIDDEN = 128          # stands in for hidden_dim=768 (kept small, lane-aligned)
NUM_HEADS = 8         # nn.TransformerEncoderLayer(nhead=8)
HEAD_DIM = HIDDEN // NUM_HEADS
NUM_LAYERS = 4
DFF = 256             # stands in for TransformerEncoderLayer default dim_feedforward=2048
FFN_HIDDEN = HIDDEN * 4   # FeedForwardLayer: Linear(hidden, hidden*4)
NUM_CLASSES = 4       # text_num_classes=4 / music_num_classes=4
CLS_PAD = 128         # lane-dense padded classifier output width (do not shrink below 128)
BATCH = 2
SEQ = 8
EPS = 1e-5


def _layernorm(x, w, b):
    mu = jnp.mean(x, axis=-1, keepdims=True)
    var = jnp.mean((x - mu) ** 2, axis=-1, keepdims=True)
    return (x - mu) * lax.rsqrt(var + EPS) * w + b


# ======================================================================
# Fused kernel: 4 x TransformerEncoderLayer (post-norm) + AdaptiveAvgPool1d(1)
#               + FeedForwardLayer + TaskClassifier.  No grid: whole working set
#               (~1.4 MB at these dims, weights in bf16) resident in VMEM.
#
# Attention layout ("k/v expanded" form):
#   R = B*S query rows; E = NH*B*S expanded key/value rows, ordered e = h*(B*S) + b*S + j
#   (the ordering produced by concatenating NH copies of the [R, H] k/v slabs).
#   head_mask[e, f] = [head(e) == head(f)],  batch_mask[r, e] = [batch(r) == batch(e)].
# ======================================================================
def fused_forward_kernel(x_ref, hmask_ref, bmask_ref, pool_ref,
                         wqkv_ref, bqkv_ref, wo_ref, bo_ref,
                         ln1w_ref, ln1b_ref, w1_ref, b1_ref,
                         w2_ref, b2_ref, ln2w_ref, ln2b_ref,
                         wf1_ref, bf1_ref, wf2_ref, bf2_ref,
                         wc_ref, bc_ref,
                         o_ref,
                         *, num_heads, num_layers):
    H = x_ref.shape[-1]
    hd = H // num_heads
    scale = 1.0 / jnp.sqrt(jnp.float32(hd))

    hmask = hmask_ref[...]          # [E, H]  bf16 constant (0/1), loaded once
    bmask = bmask_ref[...]          # [R, E]  f32 constant (0/1)
    x2 = x_ref[...]                 # [R, H]  f32 residual stream

    for l in range(num_layers):     # static unroll; weights stay resident in VMEM
        x_bf = x2.astype(jnp.bfloat16)

        # --- packed qkv projection (bf16 operands, f32 accumulate) ---
        qkv = jnp.dot(x_bf, wqkv_ref[l],
                      preferred_element_type=jnp.float32) + bqkv_ref[l]    # [R, 3H] f32
        q_bf = qkv[:, 0 * H:1 * H].astype(jnp.bfloat16)
        k_bf = qkv[:, 1 * H:2 * H].astype(jnp.bfloat16)
        v_bf = qkv[:, 2 * H:3 * H].astype(jnp.bfloat16)

        # --- expand k/v per head: sublane concat (vreg copies, no MXU) + head mask ---
        k_e = jnp.concatenate([k_bf] * num_heads, axis=0) * hmask          # [E, H] bf16
        v_e = jnp.concatenate([v_bf] * num_heads, axis=0) * hmask          # [E, H] bf16

        # scores[r, e] = <q_r, k_e[e]> restricted (via mask) to head(e)'s columns
        s = lax.dot_general(q_bf, k_e, (((1,), (1,)), ((), ())),
                            preferred_element_type=jnp.float32) * scale    # [R, E] f32
        s = s - jnp.max(s, axis=-1, keepdims=True)      # per-row constant: cancels in ctx/denom
        p = jnp.exp(s) * bmask                          # zero cross-batch entries (f32)

        # context AND per-(batch,head) softmax denominator in ONE matmul:
        #   rhs = [ v_e | head_mask ]  ->  cd = [ sum_j p*v | sum_j p ]
        rhs = jnp.concatenate([v_e, hmask], axis=-1)                       # [E, 2H] bf16
        cd = jnp.dot(p.astype(jnp.bfloat16), rhs,
                     preferred_element_type=jnp.float32)                   # [R, 2H] f32
        ctx = cd[:, :H] * pl.reciprocal(cd[:, H:], approx=False)           # normalized context

        attn = jnp.dot(ctx.astype(jnp.bfloat16), wo_ref[l],
                       preferred_element_type=jnp.float32) + bo_ref[l]

        # --- residual + LayerNorm 1 (post-norm), FFN, residual + LayerNorm 2 ---
        h1 = _layernorm(x2 + attn, ln1w_ref[l], ln1b_ref[l])
        ff = jnp.maximum(jnp.dot(h1.astype(jnp.bfloat16), w1_ref[l],
                                 preferred_element_type=jnp.float32) + b1_ref[l], 0.0)
        ff = jnp.dot(ff.astype(jnp.bfloat16), w2_ref[l],
                     preferred_element_type=jnp.float32) + b2_ref[l]
        x2 = _layernorm(h1 + ff, ln2w_ref[l], ln2b_ref[l])

    # --- AdaptiveAvgPool1d(1) over seq + dropout(id) + FeedForwardLayer + classifier ---
    pooled = jnp.dot(pool_ref[...], x2.astype(jnp.bfloat16),
                     preferred_element_type=jnp.float32)                   # [B, H] f32
    z = jnp.maximum(jnp.dot(pooled.astype(jnp.bfloat16), wf1_ref[...],
                            preferred_element_type=jnp.float32) + bf1_ref[...], 0.0)
    z = jnp.dot(z.astype(jnp.bfloat16), wf2_ref[...],
                preferred_element_type=jnp.float32) + bf2_ref[...]         # [B, H]
    # lane-dense padded classifier output [B, 128]; valid logits in cols [:NUM_CLASSES]
    o_ref[...] = jnp.dot(z.astype(jnp.bfloat16), wc_ref[...],
                         preferred_element_type=jnp.float32) + bc_ref[...]


def _fused_forward(x, masks, layers, ffn_params, clf_w_pad, clf_b_pad):
    B, S, H = x.shape
    x2 = x.reshape(B * S, H)
    head_mask, batch_mask, pool_mat = masks
    wf1, bf1_, wf2, bf2_ = ffn_params
    kern = functools.partial(fused_forward_kernel,
                             num_heads=NUM_HEADS, num_layers=NUM_LAYERS)
    args = (x2, head_mask, batch_mask, pool_mat,
            layers["wqkv"], layers["bqkv"], layers["wo"], layers["bo"],
            layers["ln1w"], layers["ln1b"], layers["w1"], layers["b1"],
            layers["w2"], layers["b2"], layers["ln2w"], layers["ln2b"],
            wf1, bf1_, wf2, bf2_, clf_w_pad, clf_b_pad)
    return pl.pallas_call(
        kern,
        out_shape=jax.ShapeDtypeStruct((B, CLS_PAD), jnp.float32),
        in_specs=[pl.BlockSpec(memory_space=pltpu.MemorySpace.VMEM) for _ in args],
        out_specs=pl.BlockSpec(memory_space=pltpu.MemorySpace.VMEM),
        compiler_params=pltpu.CompilerParams(vmem_limit_bytes=32 * 1024 * 1024),
    )(*args)


# ======================================================================
# Parameter / constant-mask init (deterministic; matrix weights pre-transposed [in, out]
# and stored in bf16; biases / LN params in f32).
# ======================================================================
def _linear(key, in_dim, out_dim):
    kw, kb = jax.random.split(key)
    w = jax.random.normal(kw, (in_dim, out_dim), jnp.float32) * 0.02   # [in, out]
    b = jax.random.normal(kb, (1, out_dim), jnp.float32) * 0.02
    return w, b


def _build_masks():
    """Constant attention/pooling masks (built once on the host, passed into the kernel)."""
    R = BATCH * SEQ
    E = NUM_HEADS * BATCH * SEQ          # expanded rows, ordered e = h*(B*S) + b*S + j
    e = np.arange(E)
    f = np.arange(HIDDEN)
    r = np.arange(R)
    b = np.arange(BATCH)
    head_mask = (e[:, None] // (BATCH * SEQ) == f[None, :] // HEAD_DIM).astype(np.float32)
    batch_mask = (r[:, None] // SEQ == (e[None, :] // SEQ) % BATCH).astype(np.float32)
    pool_mat = (r[None, :] // SEQ == b[:, None]).astype(np.float32) / SEQ
    return (jnp.asarray(head_mask, jnp.bfloat16),   # [E, H]
            jnp.asarray(batch_mask, jnp.float32),   # [R, E]
            jnp.asarray(pool_mat, jnp.bfloat16))    # [B, R]


def init_params(key):
    keys = jax.random.split(key, NUM_LAYERS * 4 + 4)
    names = ("wqkv", "bqkv", "wo", "bo", "ln1w", "ln1b",
             "w1", "b1", "w2", "b2", "ln2w", "ln2b")
    per_layer = {n: [] for n in names}
    for i in range(NUM_LAYERS):
        k0, k1, k2, k3 = keys[4 * i:4 * i + 4]
        wqkv, bqkv = _linear(k0, HIDDEN, 3 * HIDDEN)   # packed in_proj
        wo, bo = _linear(k1, HIDDEN, HIDDEN)           # out_proj
        w1, b1 = _linear(k2, HIDDEN, DFF)              # linear1
        w2, b2 = _linear(k3, DFF, HIDDEN)              # linear2
        vals = (wqkv.astype(jnp.bfloat16), bqkv, wo.astype(jnp.bfloat16), bo,
                jnp.ones((1, HIDDEN), jnp.float32), jnp.zeros((1, HIDDEN), jnp.float32),
                w1.astype(jnp.bfloat16), b1, w2.astype(jnp.bfloat16), b2,
                jnp.ones((1, HIDDEN), jnp.float32), jnp.zeros((1, HIDDEN), jnp.float32))
        for n, v in zip(names, vals):
            per_layer[n].append(v)
    layers = {n: jnp.stack(v, axis=0) for n, v in per_layer.items()}  # leading dim = NUM_LAYERS

    wf1, bf1_ = _linear(keys[-4], HIDDEN, FFN_HIDDEN)   # FeedForwardLayer linear 1
    wf2, bf2_ = _linear(keys[-3], FFN_HIDDEN, HIDDEN)   # FeedForwardLayer linear 2
    wct, bct = _linear(keys[-2], HIDDEN, NUM_CLASSES)   # text_classifier
    wcm, bcm = _linear(keys[-1], HIDDEN, NUM_CLASSES)   # music_classifier

    def _pad_clf(w, b):   # lane-dense padded classifier head, precomputed once (perf feedback)
        wp = jnp.zeros((HIDDEN, CLS_PAD), jnp.float32).at[:, :w.shape[1]].set(w)
        bp = jnp.zeros((1, CLS_PAD), jnp.float32).at[:, :b.shape[1]].set(b)
        return wp.astype(jnp.bfloat16), bp

    return {
        "layers": layers,
        "ffn": (wf1.astype(jnp.bfloat16), bf1_, wf2.astype(jnp.bfloat16), bf2_),
        "clf": {"text": _pad_clf(wct, bct), "music": _pad_clf(wcm, bcm)},
        "masks": _build_masks(),
    }


@functools.partial(jax.jit, static_argnames=("type",))
def shared_model_forward(x, params, type="text"):
    # x: pre-encoded embeddings [B, S, H] (frozen encoders stubbed, see TODO above)
    wc_pad, bc_pad = params["clf"]["music" if type == "music" else "text"]
    out_pad = _fused_forward(x, params["masks"], params["layers"], params["ffn"],
                             wc_pad, bc_pad)
    return out_pad[:, :NUM_CLASSES]


# ---------------- pure-JAX reference (same bf16-operand / f32-accumulate policy) ----------------
def _bdot(a, b):
    return jnp.dot(a.astype(jnp.bfloat16), b, preferred_element_type=jnp.float32)


def reference_forward(x, params, type="text"):
    B, S, H = x.shape
    L = params["layers"]
    h = x
    for l in range(NUM_LAYERS):
        qkv = _bdot(h, L["wqkv"][l]) + L["bqkv"][l]
        q, k, v = jnp.split(qkv, 3, axis=-1)
        qh = q.reshape(B, S, NUM_HEADS, HEAD_DIM).astype(jnp.bfloat16)
        kh = k.reshape(B, S, NUM_HEADS, HEAD_DIM).astype(jnp.bfloat16)
        vh = v.reshape(B, S, NUM_HEADS, HEAD_DIM).astype(jnp.bfloat16)
        s = jnp.einsum("bqhd,bkhd->bhqk", qh, kh,
                       preferred_element_type=jnp.float32) / jnp.sqrt(jnp.float32(HEAD_DIM))
        p = jax.nn.softmax(s, axis=-1)
        ctx = jnp.einsum("bhqk,bkhd->bqhd", p.astype(jnp.bfloat16), vh,
                         preferred_element_type=jnp.float32).reshape(B, S, H)
        attn = _bdot(ctx, L["wo"][l]) + L["bo"][l]
        h1 = _layernorm(h + attn, L["ln1w"][l], L["ln1b"][l])
        ff = jnp.maximum(_bdot(h1, L["w1"][l]) + L["b1"][l], 0.0)
        ff = _bdot(ff, L["w2"][l]) + L["b2"][l]
        h = _layernorm(h1 + ff, L["ln2w"][l], L["ln2b"][l])
    pooled = jnp.mean(h, axis=1)
    wf1, bf1_, wf2, bf2_ = params["ffn"]
    z = jnp.maximum(_bdot(pooled, wf1) + bf1_, 0.0)
    z = _bdot(z, wf2) + bf2_
    wc_pad, bc_pad = params["clf"]["music" if type == "music" else "text"]
    return (_bdot(z, wc_pad) + bc_pad)[:, :NUM_CLASSES]


if __name__ == "__main__":
    key = jax.random.PRNGKey(0)
    k_params, k_x = jax.random.split(key)
    params = init_params(k_params)
    x = jax.random.normal(k_x, (BATCH, SEQ, HIDDEN), jnp.float32)

    out = shared_model_forward(x, params, type="text")
    out = jax.block_until_ready(out)
    assert out.shape == (BATCH, NUM_CLASSES), out.shape

    ref = reference_forward(x, params, type="text")
    max_err = float(jnp.max(jnp.abs(out - ref)))
    assert jnp.allclose(out, ref, atol=1e-2, rtol=1e-2), max_err

    print("KERNEL_OK")
</pallas_src>

<mosaic_0001>
module attributes {stable_mosaic.version = 11 : i64} {
  func.func @fused_forward_kernel(%arg0: memref<16x128xf32, #tpu.memory_space<vmem>>, %arg1: memref<128x128xbf16, #tpu.memory_space<vmem>>, %arg2: memref<16x128xf32, #tpu.memory_space<vmem>>, %arg3: memref<2x16xbf16, #tpu.memory_space<vmem>>, %arg4: memref<4x128x384xbf16, #tpu.memory_space<vmem>>, %arg5: memref<4x1x384xf32, #tpu.memory_space<vmem>>, %arg6: memref<4x128x128xbf16, #tpu.memory_space<vmem>>, %arg7: memref<4x1x128xf32, #tpu.memory_space<vmem>>, %arg8: memref<4x1x128xf32, #tpu.memory_space<vmem>>, %arg9: memref<4x1x128xf32, #tpu.memory_space<vmem>>, %arg10: memref<4x128x256xbf16, #tpu.memory_space<vmem>>, %arg11: memref<4x1x256xf32, #tpu.memory_space<vmem>>, %arg12: memref<4x256x128xbf16, #tpu.memory_space<vmem>>, %arg13: memref<4x1x128xf32, #tpu.memory_space<vmem>>, %arg14: memref<4x1x128xf32, #tpu.memory_space<vmem>>, %arg15: memref<4x1x128xf32, #tpu.memory_space<vmem>>, %arg16: memref<128x512xbf16, #tpu.memory_space<vmem>>, %arg17: memref<1x512xf32, #tpu.memory_space<vmem>>, %arg18: memref<512x128xbf16, #tpu.memory_space<vmem>>, %arg19: memref<1x128xf32, #tpu.memory_space<vmem>>, %arg20: memref<128x128xbf16, #tpu.memory_space<vmem>>, %arg21: memref<1x128xf32, #tpu.memory_space<vmem>>, %arg22: memref<2x128xf32, #tpu.memory_space<vmem>>) attributes {dimension_semantics = [], scalar_prefetch = 0 : i64, scratch_operands = 0 : i64, tpu.core_type = #tpu.core_type<tc>} {
    %cst = arith.constant 1.600000e+01 : f32
    %0 = math.sqrt %cst : f32
    %cst_0 = arith.constant 1.000000e+00 : f32
    %1 = arith.divf %cst_0, %0 : f32
    %c0 = arith.constant 0 : index
    %c0_1 = arith.constant 0 : index
    %2 = vector.load %arg1[%c0, %c0_1] : memref<128x128xbf16, #tpu.memory_space<vmem>>, vector<128x128xbf16>
    %c0_2 = arith.constant 0 : index
    %c0_3 = arith.constant 0 : index
    %3 = vector.load %arg2[%c0_2, %c0_3] : memref<16x128xf32, #tpu.memory_space<vmem>>, vector<16x128xf32>
    %c0_4 = arith.constant 0 : index
    %c0_5 = arith.constant 0 : index
    %4 = vector.load %arg0[%c0_4, %c0_5] : memref<16x128xf32, #tpu.memory_space<vmem>>, vector<16x128xf32>
    %5 = arith.truncf %4 : vector<16x128xf32> to vector<16x128xbf16>
    %c0_6 = arith.constant 0 : index
    %c0_7 = arith.constant 0 : index
    %c0_8 = arith.constant 0 : index
    %6 = vector.load %arg4[%c0_6, %c0_7, %c0_8] : memref<4x128x384xbf16, #tpu.memory_space<vmem>>, vector<1x128x384xbf16>
    %7 = vector.shape_cast %6 : vector<1x128x384xbf16> to vector<128x384xbf16>
    %cst_9 = arith.constant dense<0.000000e+00> : vector<16x384xf32>
    %8 = tpu.matmul %5, %7, %cst_9 {dimension_numbers = #tpu.dot_dimension_numbers<[1], [0], [0], [1], [0, 0, 1, 1], [], []>} : vector<16x128xbf16>, vector<128x384xbf16>, vector<16x384xf32> -> vector<16x384xf32>
    %c0_10 = arith.constant 0 : index
    %c0_11 = arith.constant 0 : index
    %c0_12 = arith.constant 0 : index
    %9 = vector.load %arg5[%c0_10, %c0_11, %c0_12] : memref<4x1x384xf32, #tpu.memory_space<vmem>>, vector<1x1x384xf32>
    %10 = vector.shape_cast %9 : vector<1x1x384xf32> to vector<1x384xf32>
    %11 = vector.broadcast %10 : vector<1x384xf32> to vector<16x384xf32>
    %12 = arith.addf %8, %11 : vector<16x384xf32>
    %13 = vector.extract_strided_slice %12 {offsets = [0, 0], sizes = [16, 128], strides = [1, 1]} : vector<16x384xf32> to vector<16x128xf32>
    %14 = arith.truncf %13 : vector<16x128xf32> to vector<16x128xbf16>
    %15 = vector.extract_strided_slice %12 {offsets = [0, 128], sizes = [16, 128], strides = [1, 1]} : vector<16x384xf32> to vector<16x128xf32>
    %16 = arith.truncf %15 : vector<16x128xf32> to vector<16x128xbf16>
    %17 = vector.extract_strided_slice %12 {offsets = [0, 256], sizes = [16, 128], strides = [1, 1]} : vector<16x384xf32> to vector<16x128xf32>
    %18 = arith.truncf %17 : vector<16x128xf32> to vector<16x128xbf16>
    %19 = tpu.concatenate %16, %16, %16, %16, %16, %16, %16, %16 in 0 : vector<16x128xbf16>, vector<16x128xbf16>, vector<16x128xbf16>, vector<16x128xbf16>, vector<16x128xbf16>, vector<16x128xbf16>, vector<16x128xbf16>, vector<16x128xbf16> -> vector<128x128xbf16>
    %20 = arith.mulf %19, %2 : vector<128x128xbf16>
    %21 = tpu.concatenate %18, %18, %18, %18, %18, %18, %18, %18 in 0 : vector<16x128xbf16>, vector<16x128xbf16>, vector<16x128xbf16>, vector<16x128xbf16>, vector<16x128xbf16>, vector<16x128xbf16>, vector<16x128xbf16>, vector<16x128xbf16> -> vector<128x128xbf16>
    %22 = arith.mulf %21, %2 : vector<128x128xbf16>
    %cst_13 = arith.constant dense<0.000000e+00> : vector<16x128xf32>
    %23 = tpu.matmul %14, %20, %cst_13 {dimension_numbers = #tpu.dot_dimension_numbers<[1], [1], [0], [0], [0, 0, 1, 0], [], []>} : vector<16x128xbf16>, vector<128x128xbf16>, vector<16x128xf32> -> vector<16x128xf32>
    %24 = vector.broadcast %1 : f32 to vector<16x128xf32>
    %25 = arith.mulf %23, %24 : vector<16x128xf32>
    %cst_14 = arith.constant dense<0xFF800000> : vector<16xf32>
    %26 = vector.multi_reduction <maximumf>, %25, %cst_14 [1] : vector<16x128xf32> to vector<16xf32>
    %27 = vector.shape_cast %26 : vector<16xf32> to vector<16x1xf32>
    %28 = vector.broadcast %27 : vector<16x1xf32> to vector<16x128xf32>
    %29 = arith.subf %25, %28 : vector<16x128xf32>
    %30 = math.exp %29 : vector<16x128xf32>
    %31 = arith.mulf %30, %3 : vector<16x128xf32>
    %32 = tpu.concatenate %22, %2 in 1 : vector<128x128xbf16>, vector<128x128xbf16> -> vector<128x256xbf16>
    %33 = arith.truncf %31 : vector<16x128xf32> to vector<16x128xbf16>
    %cst_15 = arith.constant dense<0.000000e+00> : vector<16x256xf32>
    %34 = tpu.matmul %33, %32, %cst_15 {dimension_numbers = #tpu.dot_dimension_numbers<[1], [0], [0], [1], [0, 0, 1, 1], [], []>} : vector<16x128xbf16>, vector<128x256xbf16>, vector<16x256xf32> -> vector<16x256xf32>
    %35 = vector.extract_strided_slice %34 {offsets = [0, 0], sizes = [16, 128], strides = [1, 1]} : vector<16x256xf32> to vector<16x128xf32>
    %36 = vector.extract_strided_slice %34 {offsets = [0, 128], sizes = [16, 128], strides = [1, 1]} : vector<16x256xf32> to vector<16x128xf32>
    %37 = tpu.reciprocal %36 : vector<16x128xf32> -> vector<16x128xf32>
    %38 = arith.mulf %35, %37 : vector<16x128xf32>
    %39 = arith.truncf %38 : vector<16x128xf32> to vector<16x128xbf16>
    %c0_16 = arith.constant 0 : index
    %c0_17 = arith.constant 0 : index
    %c0_18 = arith.constant 0 : index
    %40 = vector.load %arg6[%c0_16, %c0_17, %c0_18] : memref<4x128x128xbf16, #tpu.memory_space<vmem>>, vector<1x128x128xbf16>
    %41 = vector.shape_cast %40 : vector<1x128x128xbf16> to vector<128x128xbf16>
    %cst_19 = arith.constant dense<0.000000e+00> : vector<16x128xf32>
    %42 = tpu.matmul %39, %41, %cst_19 {dimension_numbers = #tpu.dot_dimension_numbers<[1], [0], [0], [1], [0, 0, 1, 1], [], []>} : vector<16x128xbf16>, vector<128x128xbf16>, vector<16x128xf32> -> vector<16x128xf32>
    %c0_20 = arith.constant 0 : index
    %c0_21 = arith.constant 0 : index
    %c0_22 = arith.constant 0 : index
    %43 = vector.load %arg7[%c0_20, %c0_21, %c0_22] : memref<4x1x128xf32, #tpu.memory_space<vmem>>, vector<1x1x128xf32>
    %44 = vector.shape_cast %43 : vector<1x1x128xf32> to vector<1x128xf32>
    %45 = vector.broadcast %44 : vector<1x128xf32> to vector<16x128xf32>
    %46 = arith.addf %42, %45 : vector<16x128xf32>
    %47 = arith.addf %4, %46 : vector<16x128xf32>
    %c0_23 = arith.constant 0 : index
    %c0_24 = arith.constant 0 : index
    %c0_25 = arith.constant 0 : index
    %48 = vector.load %arg8[%c0_23, %c0_24, %c0_25] : memref<4x1x128xf32, #tpu.memory_space<vmem>>, vector<1x1x128xf32>
    %49 = vector.shape_cast %48 : vector<1x1x128xf32> to vector<1x128xf32>
    %c0_26 = arith.constant 0 : index
    %c0_27 = arith.constant 0 : index
    %c0_28 = arith.constant 0 : index
    %50 = vector.load %arg9[%c0_26, %c0_27, %c0_28] : memref<4x1x128xf32, #tpu.memory_space<vmem>>, vector<1x1x128xf32>
    %51 = vector.shape_cast %50 : vector<1x1x128xf32> to vector<1x128xf32>
    %cst_29 = arith.constant dense<0.000000e+00> : vector<16xf32>
    %52 = vector.multi_reduction <add>, %47, %cst_29 [1] : vector<16x128xf32> to vector<16xf32>
    %53 = vector.shape_cast %52 : vector<16xf32> to vector<16x1xf32>
    %cst_30 = arith.constant 1.280000e+02 : f32
    %54 = vector.broadcast %cst_30 : f32 to vector<16x1xf32>
    %55 = arith.divf %53, %54 : vector<16x1xf32>
    %56 = vector.broadcast %55 : vector<16x1xf32> to vector<16x128xf32>
    %57 = arith.subf %47, %56 : vector<16x128xf32>
    %58 = arith.mulf %57, %57 : vector<16x128xf32>
    %cst_31 = arith.constant dense<0.000000e+00> : vector<16xf32>
    %59 = vector.multi_reduction <add>, %58, %cst_31 [1] : vector<16x128xf32> to vector<16xf32>
    %60 = vector.shape_cast %59 : vector<16xf32> to vector<16x1xf32>
    %cst_32 = arith.constant 1.280000e+02 : f32
    %61 = vector.broadcast %cst_32 : f32 to vector<16x1xf32>
    %62 = arith.divf %60, %61 : vector<16x1xf32>
    %63 = vector.broadcast %55 : vector<16x1xf32> to vector<16x128xf32>
    %64 = arith.subf %47, %63 : vector<16x128xf32>
    %cst_33 = arith.constant 9.99999974E-6 : f32
    %65 = vector.broadcast %cst_33 : f32 to vector<16x1xf32>
    %66 = arith.addf %62, %65 : vector<16x1xf32>
    %67 = math.rsqrt %66 : vector<16x1xf32>
    %68 = vector.broadcast %67 : vector<16x1xf32> to vector<16x128xf32>
    %69 = arith.mulf %64, %68 : vector<16x128xf32>
    %70 = vector.broadcast %49 : vector<1x128xf32> to vector<16x128xf32>
    %71 = arith.mulf %69, %70 : vector<16x128xf32>
    %72 = vector.broadcast %51 : vector<1x128xf32> to vector<16x128xf32>
    %73 = arith.addf %71, %72 : vector<16x128xf32>
    %74 = arith.truncf %73 : vector<16x128xf32> to vector<16x128xbf16>
    %c0_34 = arith.constant 0 : index
    %c0_35 = arith.constant 0 : index
    %c0_36 = arith.constant 0 : index
    %75 = vector.load %arg10[%c0_34, %c0_35, %c0_36] : memref<4x128x256xbf16, #tpu.memory_space<vmem>>, vector<1x128x256xbf16>
    %76 = vector.shape_cast %75 : vector<1x128x256xbf16> to vector<128x256xbf16>
    %cst_37 = arith.constant dense<0.000000e+00> : vector<16x256xf32>
    %77 = tpu.matmul %74, %76, %cst_37 {dimension_numbers = #tpu.dot_dimension_numbers<[1], [0], [0], [1], [0, 0, 1, 1], [], []>} : vector<16x128xbf16>, vector<128x256xbf16>, vector<16x256xf32> -> vector<16x256xf32>
    %c0_38 = arith.constant 0 : index
    %c0_39 = arith.constant 0 : index
    %c0_40 = arith.constant 0 : index
    %78 = vector.load %arg11[%c0_38, %c0_39, %c0_40] : memref<4x1x256xf32, #tpu.memory_space<vmem>>, vector<1x1x256xf32>
    %79 = vector.shape_cast %78 : vector<1x1x256xf32> to vector<1x256xf32>
    %80 = vector.broadcast %79 : vector<1x256xf32> to vector<16x256xf32>
    %81 = arith.addf %77, %80 : vector<16x256xf32>
    %cst_41 = arith.constant 0.000000e+00 : f32
    %82 = vector.broadcast %cst_41 : f32 to vector<16x256xf32>
    %83 = arith.maximumf %81, %82 : vector<16x256xf32>
    %84 = arith.truncf %83 : vector<16x256xf32> to vector<16x256xbf16>
    %c0_42 = arith.constant 0 : index
    %c0_43 = arith.constant 0 : index
    %c0_44 = arith.constant 0 : index
    %85 = vector.load %arg12[%c0_42, %c0_43, %c0_44] : memref<4x256x128xbf16, #tpu.memory_space<vmem>>, vector<1x256x128xbf16>
    %86 = vector.shape_cast %85 : vector<1x256x128xbf16> to vector<256x128xbf16>
    %cst_45 = arith.constant dense<0.000000e+00> : vector<16x128xf32>
    %87 = tpu.matmul %84, %86, %cst_45 {dimension_numbers = #tpu.dot_dimension_numbers<[1], [0], [0], [1], [0, 0, 1, 1], [], []>} : vector<16x256xbf16>, vector<256x128xbf16>, vector<16x128xf32> -> vector<16x128xf32>
    %c0_46 = arith.constant 0 : index
    %c0_47 = arith.constant 0 : index
    %c0_48 = arith.constant 0 : index
    %88 = vector.load %arg13[%c0_46, %c0_47, %c0_48] : memref<4x1x128xf32, #tpu.memory_space<vmem>>, vector<1x1x128xf32>
    %89 = vector.shape_cast %88 : vector<1x1x128xf32> to vector<1x128xf32>
    %90 = vector.broadcast %89 : vector<1x128xf32> to vector<16x128xf32>
    %91 = arith.addf %87, %90 : vector<16x128xf32>
    %92 = arith.addf %73, %91 : vector<16x128xf32>
    %c0_49 = arith.constant 0 : index
    %c0_50 = arith.constant 0 : index
    %c0_51 = arith.constant 0 : index
    %93 = vector.load %arg14[%c0_49, %c0_50, %c0_51] : memref<4x1x128xf32, #tpu.memory_space<vmem>>, vector<1x1x128xf32>
    %94 = vector.shape_cast %93 : vector<1x1x128xf32> to vector<1x128xf32>
    %c0_52 = arith.constant 0 : index
    %c0_53 = arith.constant 0 : index
    %c0_54 = arith.constant 0 : index
    %95 = vector.load %arg15[%c0_52, %c0_53, %c0_54] : memref<4x1x128xf32, #tpu.memory_space<vmem>>, vector<1x1x128xf32>
    %96 = vector.shape_cast %95 : vector<1x1x128xf32> to vector<1x128xf32>
    %cst_55 = arith.constant dense<0.000000e+00> : vector<16xf32>
    %97 = vector.multi_reduction <add>, %92, %cst_55 [1] : vector<16x128xf32> to vector<16xf32>
    %98 = vector.shape_cast %97 : vector<16xf32> to vector<16x1xf32>
    %cst_56 = arith.constant 1.280000e+02 : f32
    %99 = vector.broadcast %cst_56 : f32 to vector<16x1xf32>
    %100 = arith.divf %98, %99 : vector<16x1xf32>
    %101 = vector.broadcast %100 : vector<16x1xf32> to vector<16x128xf32>
    %102 = arith.subf %92, %101 : vector<16x128xf32>
    %103 = arith.mulf %102, %102 : vector<16x128xf32>
    %cst_57 = arith.constant dense<0.000000e+00> : vector<16xf32>
    %104 = vector.multi_reduction <add>, %103, %cst_57 [1] : vector<16x128xf32> to vector<16xf32>
    %105 = vector.shape_cast %104 : vector<16xf32> to vector<16x1xf32>
    %cst_58 = arith.constant 1.280000e+02 : f32
    %106 = vector.broadcast %cst_58 : f32 to vector<16x1xf32>
    %107 = arith.divf %105, %106 : vector<16x1xf32>
    %108 = vector.broadcast %100 : vector<16x1xf32> to vector<16x128xf32>
    %109 = arith.subf %92, %108 : vector<16x128xf32>
    %cst_59 = arith.constant 9.99999974E-6 : f32
    %110 = vector.broadcast %cst_59 : f32 to vector<16x1xf32>
    %111 = arith.addf %107, %110 : vector<16x1xf32>
    %112 = math.rsqrt %111 : vector<16x1xf32>
    %113 = vector.broadcast %112 : vector<16x1xf32> to vector<16x128xf32>
    %114 = arith.mulf %109, %113 : vector<16x128xf32>
    %115 = vector.broadcast %94 : vector<1x128xf32> to vector<16x128xf32>
    %116 = arith.mulf %114, %115 : vector<16x128xf32>
    %117 = vector.broadcast %96 : vector<1x128xf32> to vector<16x128xf32>
    %118 = arith.addf %116, %117 : vector<16x128xf32>
    %119 = arith.truncf %118 : vector<16x128xf32> to vector<16x128xbf16>
    %c1 = arith.constant 1 : index
    %c0_60 = arith.constant 0 : index
    %c0_61 = arith.constant 0 : index
    %120 = vector.load %arg4[%c1, %c0_60, %c0_61] : memref<4x128x384xbf16, #tpu.memory_space<vmem>>, vector<1x128x384xbf16>
    %121 = vector.shape_cast %120 : vector<1x128x384xbf16> to vector<128x384xbf16>
    %cst_62 = arith.constant dense<0.000000e+00> : vector<16x384xf32>
    %122 = tpu.matmul %119, %121, %cst_62 {dimension_numbers = #tpu.dot_dimension_numbers<[1], [0], [0], [1], [0, 0, 1, 1], [], []>} : vector<16x128xbf16>, vector<128x384xbf16>, vector<16x384xf32> -> vector<16x384xf32>
    %c1_63 = arith.constant 1 : index
    %c0_64 = arith.constant 0 : index
    %c0_65 = arith.constant 0 : index
    %123 = vector.load %arg5[%c1_63, %c0_64, %c0_65] : memref<4x1x384xf32, #tpu.memory_space<vmem>>, vector<1x1x384xf32>
    %124 = vector.shape_cast %123 : vector<1x1x384xf32> to vector<1x384xf32>
    %125 = vector.broadcast %124 : vector<1x384xf32> to vector<16x384xf32>
    %126 = arith.addf %122, %125 : vector<16x384xf32>
    %127 = vector.extract_strided_slice %126 {offsets = [0, 0], sizes = [16, 128], strides = [1, 1]} : vector<16x384xf32> to vector<16x128xf32>
    %128 = arith.truncf %127 : vector<16x128xf32> to vector<16x128xbf16>
    %129 = vector.extract_strided_slice %126 {offsets = [0, 128], sizes = [16, 128], strides = [1, 1]} : vector<16x384xf32> to vector<16x128xf32>
    %130 = arith.truncf %129 : vector<16x128xf32> to vector<16x128xbf16>
    %131 = vector.extract_strided_slice %126 {offsets = [0, 256], sizes = [16, 128], strides = [1, 1]} : vector<16x384xf32> to vector<16x128xf32>
    %132 = arith.truncf %131 : vector<16x128xf32> to vector<16x128xbf16>
    %133 = tpu.concatenate %130, %130, %130, %130, %130, %130, %130, %130 in 0 : vector<16x128xbf16>, vector<16x128xbf16>, vector<16x128xbf16>, vector<16x128xbf16>, vector<16x128xbf16>, vector<16x128xbf16>, vector<16x128xbf16>, vector<16x128xbf16> -> vector<128x128xbf16>
    %134 = arith.mulf %133, %2 : vector<128x128xbf16>
    %135 = tpu.concatenate %132, %132, %132, %132, %132, %132, %132, %132 in 0 : vector<16x128xbf16>, vector<16x128xbf16>, vector<16x128xbf16>, vector<16x128xbf16>, vector<16x128xbf16>, vector<16x128xbf16>, vector<16x128xbf16>, vector<16x128xbf16> -> vector<128x128xbf16>
    %136 = arith.mulf %135, %2 : vector<128x128xbf16>
    %cst_66 = arith.constant dense<0.000000e+00> : vector<16x128xf32>
    %137 = tpu.matmul %128, %134, %cst_66 {dimension_numbers = #tpu.dot_dimension_numbers<[1], [1], [0], [0], [0, 0, 1, 0], [], []>} : vector<16x128xbf16>, vector<128x128xbf16>, vector<16x128xf32> -> vector<16x128xf32>
    %138 = vector.broadcast %1 : f32 to vector<16x128xf32>
    %139 = arith.mulf %137, %138 : vector<16x128xf32>
    %cst_67 = arith.constant dense<0xFF800000> : vector<16xf32>
    %140 = vector.multi_reduction <maximumf>, %139, %cst_67 [1] : vector<16x128xf32> to vector<16xf32>
    %141 = vector.shape_cast %140 : vector<16xf32> to vector<16x1xf32>
    %142 = vector.broadcast %141 : vector<16x1xf32> to vector<16x128xf32>
    %143 = arith.subf %139, %142 : vector<16x128xf32>
    %144 = math.exp %143 : vector<16x128xf32>
    %145 = arith.mulf %144, %3 : vector<16x128xf32>
    %146 = tpu.concatenate %136, %2 in 1 : vector<128x128xbf16>, vector<128x128xbf16> -> vector<128x256xbf16>
    %147 = arith.truncf %145 : vector<16x128xf32> to vector<16x128xbf16>
    %cst_68 = arith.constant dense<0.000000e+00> : vector<16x256xf32>
    %148 = tpu.matmul %147, %146, %cst_68 {dimension_numbers = #tpu.dot_dimension_numbers<[1], [0], [0], [1], [0, 0, 1, 1], [], []>} : vector<16x128xbf16>, vector<128x256xbf16>, vector<16x256xf32> -> vector<16x256xf32>
    %149 = vector.extract_strided_slice %148 {offsets = [0, 0], sizes = [16, 128], strides = [1, 1]} : vector<16x256xf32> to vector<16x128xf32>
    %150 = vector.extract_strided_slice %148 {offsets = [0, 128], sizes = [16, 128], strides = [1, 1]} : vector<16x256xf32> to vector<16x128xf32>
    %151 = tpu.reciprocal %150 : vector<16x128xf32> -> vector<16x128xf32>
    %152 = arith.mulf %149, %151 : vector<16x128xf32>
    %153 = arith.truncf %152 : vector<16x128xf32> to vector<16x128xbf16>
    %c1_69 = arith.constant 1 : index
    %c0_70 = arith.constant 0 : index
    %c0_71 = arith.constant 0 : index
    %154 = vector.load %arg6[%c1_69, %c0_70, %c0_71] : memref<4x128x128xbf16, #tpu.memory_space<vmem>>, vector<1x128x128xbf16>
    %155 = vector.shape_cast %154 : vector<1x128x128xbf16> to vector<128x128xbf16>
    %cst_72 = arith.constant dense<0.000000e+00> : vector<16x128xf32>
    %156 = tpu.matmul %153, %155, %cst_72 {dimension_numbers = #tpu.dot_dimension_numbers<[1], [0], [0], [1], [0, 0, 1, 1], [], []>} : vector<16x128xbf16>, vector<128x128xbf16>, vector<16x128xf32> -> vector<16x128xf32>
    %c1_73 = arith.constant 1 : index
    %c0_74 = arith.constant 0 : index
    %c0_75 = arith.constant 0 : index
    %157 = vector.load %arg7[%c1_73, %c0_74, %c0_75] : memref<4x1x128xf32, #tpu.memory_space<vmem>>, vector<1x1x128xf32>
    %158 = vector.shape_cast %157 : vector<1x1x128xf32> to vector<1x128xf32>
    %159 = vector.broadcast %158 : vector<1x128xf32> to vector<16x128xf32>
    %160 = arith.addf %156, %159 : vector<16x128xf32>
    %161 = arith.addf %118, %160 : vector<16x128xf32>
    %c1_76 = arith.constant 1 : index
    %c0_77 = arith.constant 0 : index
    %c0_78 = arith.constant 0 : index
    %162 = vector.load %arg8[%c1_76, %c0_77, %c0_78] : memref<4x1x128xf32, #tpu.memory_space<vmem>>, vector<1x1x128xf32>
    %163 = vector.shape_cast %162 : vector<1x1x128xf32> to vector<1x128xf32>
    %c1_79 = arith.constant 1 : index
    %c0_80 = arith.constant 0 : index
    %c0_81 = arith.constant 0 : index
    %164 = vector.load %arg9[%c1_79, %c0_80, %c0_81] : memref<4x1x128xf32, #tpu.memory_space<vmem>>, vector<1x1x128xf32>
    %165 = vector.shape_cast %164 : vector<1x1x128xf32> to vector<1x128xf32>
    %cst_82 = arith.constant dense<0.000000e+00> : vector<16xf32>
    %166 = vector.multi_reduction <add>, %161, %cst_82 [1] : vector<16x128xf32> to vector<16xf32>
    %167 = vector.shape_cast %166 : vector<16xf32> to vector<16x1xf32>
    %cst_83 = arith.constant 1.280000e+02 : f32
    %168 = vector.broadcast %cst_83 : f32 to vector<16x1xf32>
    %169 = arith.divf %167, %168 : vector<16x1xf32>
    %170 = vector.broadcast %169 : vector<16x1xf32> to vector<16x128xf32>
    %171 = arith.subf %161, %170 : vector<16x128xf32>
    %172 = arith.mulf %171, %171 : vector<16x128xf32>
    %cst_84 = arith.constant dense<0.000000e+00> : vector<16xf32>
    %173 = vector.multi_reduction <add>, %172, %cst_84 [1] : vector<16x128xf32> to vector<16xf32>
    %174 = vector.shape_cast %173 : vector<16xf32> to vector<16x1xf32>
    %cst_85 = arith.constant 1.280000e+02 : f32
    %175 = vector.broadcast %cst_85 : f32 to vector<16x1xf32>
    %176 = arith.divf %174, %175 : vector<16x1xf32>
    %177 = vector.broadcast %169 : vector<16x1xf32> to vector<16x128xf32>
    %178 = arith.subf %161, %177 : vector<16x128xf32>
    %cst_86 = arith.constant 9.99999974E-6 : f32
    %179 = vector.broadcast %cst_86 : f32 to vector<16x1xf32>
    %180 = arith.addf %176, %179 : vector<16x1xf32>
    %181 = math.rsqrt %180 : vector<16x1xf32>
    %182 = vector.broadcast %181 : vector<16x1xf32> to vector<16x128xf32>
    %183 = arith.mulf %178, %182 : vector<16x128xf32>
    %184 = vector.broadcast %163 : vector<1x128xf32> to vector<16x128xf32>
    %185 = arith.mulf %183, %184 : vector<16x128xf32>
    %186 = vector.broadcast %165 : vector<1x128xf32> to vector<16x128xf32>
    %187 = arith.addf %185, %186 : vector<16x128xf32>
    %188 = arith.truncf %187 : vector<16x128xf32> to vector<16x128xbf16>
    %c1_87 = arith.constant 1 : index
    %c0_88 = arith.constant 0 : index
    %c0_89 = arith.constant 0 : index
    %189 = vector.load %arg10[%c1_87, %c0_88, %c0_89] : memref<4x128x256xbf16, #tpu.memory_space<vmem>>, vector<1x128x256xbf16>
    %190 = vector.shape_cast %189 : vector<1x128x256xbf16> to vector<128x256xbf16>
    %cst_90 = arith.constant dense<0.000000e+00> : vector<16x256xf32>
    %191 = tpu.matmul %188, %190, %cst_90 {dimension_numbers = #tpu.dot_dimension_numbers<[1], [0], [0], [1], [0, 0, 1, 1], [], []>} : vector<16x128xbf16>, vector<128x256xbf16>, vector<16x256xf32> -> vector<16x256xf32>
    %c1_91 = arith.constant 1 : index
    %c0_92 = arith.constant 0 : index
    %c0_93 = arith.constant 0 : index
    %192 = vector.load %arg11[%c1_91, %c0_92, %c0_93] : memref<4x1x256xf32, #tpu.memory_space<vmem>>, vector<1x1x256xf32>
    %193 = vector.shape_cast %192 : vector<1x1x256xf32> to vector<1x256xf32>
    %194 = vector.broadcast %193 : vector<1x256xf32> to vector<16x256xf32>
    %195 = arith.addf %191, %194 : vector<16x256xf32>
    %cst_94 = arith.constant 0.000000e+00 : f32
    %196 = vector.broadcast %cst_94 : f32 to vector<16x256xf32>
    %197 = arith.maximumf %195, %196 : vector<16x256xf32>
    %198 = arith.truncf %197 : vector<16x256xf32> to vector<16x256xbf16>
    %c1_95 = arith.constant 1 : index
    %c0_96 = arith.constant 0 : index
    %c0_97 = arith.constant 0 : index
    %199 = vector.load %arg12[%c1_95, %c0_96, %c0_97] : memref<4x256x128xbf16, #tpu.memory_space<vmem>>, vector<1x256x128xbf16>
    %200 = vector.shape_cast %199 : vector<1x256x128xbf16> to vector<256x128xbf16>
    %cst_98 = arith.constant dense<0.000000e+00> : vector<16x128xf32>
    %201 = tpu.matmul %198, %200, %cst_98 {dimension_numbers = #tpu.dot_dimension_numbers<[1], [0], [0], [1], [0, 0, 1, 1], [], []>} : vector<16x256xbf16>, vector<256x128xbf16>, vector<16x128xf32> -> vector<16x128xf32>
    %c1_99 = arith.constant 1 : index
    %c0_100 = arith.constant 0 : index
    %c0_101 = arith.constant 0 : index
    %202 = vector.load %arg13[%c1_99, %c0_100, %c0_101] : memref<4x1x128xf32, #tpu.memory_space<vmem>>, vector<1x1x128xf32>
    %203 = vector.shape_cast %202 : vector<1x1x128xf32> to vector<1x128xf32>
    %204 = vector.broadcast %203 : vector<1x128xf32> to vector<16x128xf32>
    %205 = arith.addf %201, %204 : vector<16x128xf32>
    %206 = arith.addf %187, %205 : vector<16x128xf32>
    %c1_102 = arith.constant 1 : index
    %c0_103 = arith.constant 0 : index
    %c0_104 = arith.constant 0 : index
    %207 = vector.load %arg14[%c1_102, %c0_103, %c0_104] : memref<4x1x128xf32, #tpu.memory_space<vmem>>, vector<1x1x128xf32>
    %208 = vector.shape_cast %207 : vector<1x1x128xf32> to vector<1x128xf32>
    %c1_105 = arith.constant 1 : index
    %c0_106 = arith.constant 0 : index
    %c0_107 = arith.constant 0 : index
    %209 = vector.load %arg15[%c1_105, %c0_106, %c0_107] : memref<4x1x128xf32, #tpu.memory_space<vmem>>, vector<1x1x128xf32>
    %210 = vector.shape_cast %209 : vector<1x1x128xf32> to vector<1x128xf32>
    %cst_108 = arith.constant dense<0.000000e+00> : vector<16xf32>
    %211 = vector.multi_reduction <add>, %206, %cst_108 [1] : vector<16x128xf32> to vector<16xf32>
    %212 = vector.shape_cast %211 : vector<16xf32> to vector<16x1xf32>
    %cst_109 = arith.constant 1.280000e+02 : f32
    %213 = vector.broadcast %cst_109 : f32 to vector<16x1xf32>
    %214 = arith.divf %212, %213 : vector<16x1xf32>
    %215 = vector.broadcast %214 : vector<16x1xf32> to vector<16x128xf32>
    %216 = arith.subf %206, %215 : vector<16x128xf32>
    %217 = arith.mulf %216, %216 : vector<16x128xf32>
    %cst_110 = arith.constant dense<0.000000e+00> : vector<16xf32>
    %218 = vector.multi_reduction <add>, %217, %cst_110 [1] : vector<16x128xf32> to vector<16xf32>
    %219 = vector.shape_cast %218 : vector<16xf32> to vector<16x1xf32>
    %cst_111 = arith.constant 1.280000e+02 : f32
    %220 = vector.broadcast %cst_111 : f32 to vector<16x1xf32>
    %221 = arith.divf %219, %220 : vector<16x1xf32>
    %222 = vector.broadcast %214 : vector<16x1xf32> to vector<16x128xf32>
    %223 = arith.subf %206, %222 : vector<16x128xf32>
    %cst_112 = arith.constant 9.99999974E-6 : f32
    %224 = vector.broadcast %cst_112 : f32 to vector<16x1xf32>
    %225 = arith.addf %221, %224 : vector<16x1xf32>
    %226 = math.rsqrt %225 : vector<16x1xf32>
    %227 = vector.broadcast %226 : vector<16x1xf32> to vector<16x128xf32>
    %228 = arith.mulf %223, %227 : vector<16x128xf32>
    %229 = vector.broadcast %208 : vector<1x128xf32> to vector<16x128xf32>
    %230 = arith.mulf %228, %229 : vector<16x128xf32>
    %231 = vector.broadcast %210 : vector<1x128xf32> to vector<16x128xf32>
    %232 = arith.addf %230, %231 : vector<16x128xf32>
    %233 = arith.truncf %232 : vector<16x128xf32> to vector<16x128xbf16>
    %c2 = arith.constant 2 : index
    %c0_113 = arith.constant 0 : index
    %c0_114 = arith.constant 0 : index
    %234 = vector.load %arg4[%c2, %c0_113, %c0_114] : memref<4x128x384xbf16, #tpu.memory_space<vmem>>, vector<1x128x384xbf16>
    %235 = vector.shape_cast %234 : vector<1x128x384xbf16> to vector<128x384xbf16>
    %cst_115 = arith.constant dense<0.000000e+00> : vector<16x384xf32>
    %236 = tpu.matmul %233, %235, %cst_115 {dimension_numbers = #tpu.dot_dimension_numbers<[1], [0], [0], [1], [0, 0, 1, 1], [], []>} : vector<16x128xbf16>, vector<128x384xbf16>, vector<16x384xf32> -> vector<16x384xf32>
    %c2_116 = arith.constant 2 : index
    %c0_117 = arith.constant 0 : index
    %c0_118 = arith.constant 0 : index
    %237 = vector.load %arg5[%c2_116, %c0_117, %c0_118] : memref<4x1x384xf32, #tpu.memory_space<vmem>>, vector<1x1x384xf32>
    %238 = vector.shape_cast %237 : vector<1x1x384xf32> to vector<1x384xf32>
    %239 = vector.broadcast %238 : vector<1x384xf32> to vector<16x384xf32>
    %240 = arith.addf %236, %239 : vector<16x384xf32>
    %241 = vector.extract_strided_slice %240 {offsets = [0, 0], sizes = [16, 128], strides = [1, 1]} : vector<16x384xf32> to vector<16x128xf32>
    %242 = arith.truncf %241 : vector<16x128xf32> to vector<16x128xbf16>
    %243 = vector.extract_strided_slice %240 {offsets = [0, 128], sizes = [16, 128], strides = [1, 1]} : vector<16x384xf32> to vector<16x128xf32>
    %244 = arith.truncf %243 : vector<16x128xf32> to vector<16x128xbf16>
    %245 = vector.extract_strided_slice %240 {offsets = [0, 256], sizes = [16, 128], strides = [1, 1]} : vector<16x384xf32> to vector<16x128xf32>
    %246 = arith.truncf %245 : vector<16x128xf32> to vector<16x128xbf16>
    %247 = tpu.concatenate %244, %244, %244, %244, %244, %244, %244, %244 in 0 : vector<16x128xbf16>, vector<16x128xbf16>, vector<16x128xbf16>, vector<16x128xbf16>, vector<16x128xbf16>, vector<16x128xbf16>, vector<16x128xbf16>, vector<16x128xbf16> -> vector<128x128xbf16>
    %248 = arith.mulf %247, %2 : vector<128x128xbf16>
    %249 = tpu.concatenate %246, %246, %246, %246, %246, %246, %246, %246 in 0 : vector<16x128xbf16>, vector<16x128xbf16>, vector<16x128xbf16>, vector<16x128xbf16>, vector<16x128xbf16>, vector<16x128xbf16>, vector<16x128xbf16>, vector<16x128xbf16> -> vector<128x128xbf16>
    %250 = arith.mulf %249, %2 : vector<128x128xbf16>
    %cst_119 = arith.constant dense<0.000000e+00> : vector<16x128xf32>
    %251 = tpu.matmul %242, %248, %cst_119 {dimension_numbers = #tpu.dot_dimension_numbers<[1], [1], [0], [0], [0, 0, 1, 0], [], []>} : vector<16x128xbf16>, vector<128x128xbf16>, vector<16x128xf32> -> vector<16x128xf32>
    %252 = vector.broadcast %1 : f32 to vector<16x128xf32>
    %253 = arith.mulf %251, %252 : vector<16x128xf32>
    %cst_120 = arith.constant dense<0xFF800000> : vector<16xf32>
    %254 = vector.multi_reduction <maximumf>, %253, %cst_120 [1] : vector<16x128xf32> to vector<16xf32>
    %255 = vector.shape_cast %254 : vector<16xf32> to vector<16x1xf32>
    %256 = vector.broadcast %255 : vector<16x1xf32> to vector<16x128xf32>
    %257 = arith.subf %253, %256 : vector<16x128xf32>
    %258 = math.exp %257 : vector<16x128xf32>
    %259 = arith.mulf %258, %3 : vector<16x128xf32>
    %260 = tpu.concatenate %250, %2 in 1 : vector<128x128xbf16>, vector<128x128xbf16> -> vector<128x256xbf16>
    %261 = arith.truncf %259 : vector<16x128xf32> to vector<16x128xbf16>
    %cst_121 = arith.constant dense<0.000000e+00> : vector<16x256xf32>
    %262 = tpu.matmul %261, %260, %cst_121 {dimension_numbers = #tpu.dot_dimension_numbers<[1], [0], [0], [1], [0, 0, 1, 1], [], []>} : vector<16x128xbf16>, vector<128x256xbf16>, vector<16x256xf32> -> vector<16x256xf32>
    %263 = vector.extract_strided_slice %262 {offsets = [0, 0], sizes = [16, 128], strides = [1, 1]} : vector<16x256xf32> to vector<16x128xf32>
    %264 = vector.extract_strided_slice %262 {offsets = [0, 128], sizes = [16, 128], strides = [1, 1]} : vector<16x256xf32> to vector<16x128xf32>
    %265 = tpu.reciprocal %264 : vector<16x128xf32> -> vector<16x128xf32>
    %266 = arith.mulf %263, %265 : vector<16x128xf32>
    %267 = arith.truncf %266 : vector<16x128xf32> to vector<16x128xbf16>
    %c2_122 = arith.constant 2 : index
    %c0_123 = arith.constant 0 : index
    %c0_124 = arith.constant 0 : index
    %268 = vector.load %arg6[%c2_122, %c0_123, %c0_124] : memref<4x128x128xbf16, #tpu.memory_space<vmem>>, vector<1x128x128xbf16>
    %269 = vector.shape_cast %268 : vector<1x128x128xbf16> to vector<128x128xbf16>
    %cst_125 = arith.constant dense<0.000000e+00> : vector<16x128xf32>
    %270 = tpu.matmul %267, %269, %cst_125 {dimension_numbers = #tpu.dot_dimension_numbers<[1], [0], [0], [1], [0, 0, 1, 1], [], []>} : vector<16x128xbf16>, vector<128x128xbf16>, vector<16x128xf32> -> vector<16x128xf32>
    %c2_126 = arith.constant 2 : index
    %c0_127 = arith.constant 0 : index
    %c0_128 = arith.constant 0 : index
    %271 = vector.load %arg7[%c2_126, %c0_127, %c0_128] : memref<4x1x128xf32, #tpu.memory_space<vmem>>, vector<1x1x128xf32>
    %272 = vector.shape_cast %271 : vector<1x1x128xf32> to vector<1x128xf32>
    %273 = vector.broadcast %272 : vector<1x128xf32> to vector<16x128xf32>
    %274 = arith.addf %270, %273 : vector<16x128xf32>
    %275 = arith.addf %232, %274 : vector<16x128xf32>
    %c2_129 = arith.constant 2 : index
    %c0_130 = arith.constant 0 : index
    %c0_131 = arith.constant 0 : index
    %276 = vector.load %arg8[%c2_129, %c0_130, %c0_131] : memref<4x1x128xf32, #tpu.memory_space<vmem>>, vector<1x1x128xf32>
    %277 = vector.shape_cast %276 : vector<1x1x128xf32> to vector<1x128xf32>
    %c2_132 = arith.constant 2 : index
    %c0_133 = arith.constant 0 : index
    %c0_134 = arith.constant 0 : index
    %278 = vector.load %arg9[%c2_132, %c0_133, %c0_134] : memref<4x1x128xf32, #tpu.memory_space<vmem>>, vector<1x1x128xf32>
    %279 = vector.shape_cast %278 : vector<1x1x128xf32> to vector<1x128xf32>
    %cst_135 = arith.constant dense<0.000000e+00> : vector<16xf32>
    %280 = vector.multi_reduction <add>, %275, %cst_135 [1] : vector<16x128xf32> to vector<16xf32>
    %281 = vector.shape_cast %280 : vector<16xf32> to vector<16x1xf32>
    %cst_136 = arith.constant 1.280000e+02 : f32
    %282 = vector.broadcast %cst_136 : f32 to vector<16x1xf32>
    %283 = arith.divf %281, %282 : vector<16x1xf32>
    %284 = vector.broadcast %283 : vector<16x1xf32> to vector<16x128xf32>
    %285 = arith.subf %275, %284 : vector<16x128xf32>
    %286 = arith.mulf %285, %285 : vector<16x128xf32>
    %cst_137 = arith.constant dense<0.000000e+00> : vector<16xf32>
    %287 = vector.multi_reduction <add>, %286, %cst_137 [1] : vector<16x128xf32> to vector<16xf32>
    %288 = vector.shape_cast %287 : vector<16xf32> to vector<16x1xf32>
    %cst_138 = arith.constant 1.280000e+02 : f32
    %289 = vector.broadcast %cst_138 : f32 to vector<16x1xf32>
    %290 = arith.divf %288, %289 : vector<16x1xf32>
    %291 = vector.broadcast %283 : vector<16x1xf32> to vector<16x128xf32>
    %292 = arith.subf %275, %291 : vector<16x128xf32>
    %cst_139 = arith.constant 9.99999974E-6 : f32
    %293 = vector.broadcast %cst_139 : f32 to vector<16x1xf32>
    %294 = arith.addf %290, %293 : vector<16x1xf32>
    %295 = math.rsqrt %294 : vector<16x1xf32>
    %296 = vector.broadcast %295 : vector<16x1xf32> to vector<16x128xf32>
    %297 = arith.mulf %292, %296 : vector<16x128xf32>
    %298 = vector.broadcast %277 : vector<1x128xf32> to vector<16x128xf32>
    %299 = arith.mulf %297, %298 : vector<16x128xf32>
    %300 = vector.broadcast %279 : vector<1x128xf32> to vector<16x128xf32>
    %301 = arith.addf %299, %300 : vector<16x128xf32>
    %302 = arith.truncf %301 : vector<16x128xf32> to vector<16x128xbf16>
    %c2_140 = arith.constant 2 : index
    %c0_141 = arith.constant 0 : index
    %c0_142 = arith.constant 0 : index
    %303 = vector.load %arg10[%c2_140, %c0_141, %c0_142] : memref<4x128x256xbf16, #tpu.memory_space<vmem>>, vector<1x128x256xbf16>
    %304 = vector.shape_cast %303 : vector<1x128x256xbf16> to vector<128x256xbf16>
    %cst_143 = arith.constant dense<0.000000e+00> : vector<16x256xf32>
    %305 = tpu.matmul %302, %304, %cst_143 {dimension_numbers = #tpu.dot_dimension_numbers<[1], [0], [0], [1], [0, 0, 1, 1], [], []>} : vector<16x128xbf16>, vector<128x256xbf16>, vector<16x256xf32> -> vector<16x256xf32>
    %c2_144 = arith.constant 2 : index
    %c0_145 = arith.constant 0 : index
    %c0_146 = arith.constant 0 : index
    %306 = vector.load %arg11[%c2_144, %c0_145, %c0_146] : memref<4x1x256xf32, #tpu.memory_space<vmem>>, vector<1x1x256xf32>
    %307 = vector.shape_cast %306 : vector<1x1x256xf32> to vector<1x256xf32>
    %308 = vector.broadcast %307 : vector<1x256xf32> to vector<16x256xf32>
    %309 = arith.addf %305, %308 : vector<16x256xf32>
    %cst_147 = arith.constant 0.000000e+00 : f32
    %310 = vector.broadcast %cst_147 : f32 to vector<16x256xf32>
    %311 = arith.maximumf %309, %310 : vector<16x256xf32>
    %312 = arith.truncf %311 : vector<16x256xf32> to vector<16x256xbf16>
    %c2_148 = arith.constant 2 : index
    %c0_149 = arith.constant 0 : index
    %c0_150 = arith.constant 0 : index
    %313 = vector.load %arg12[%c2_148, %c0_149, %c0_150] : memref<4x256x128xbf16, #tpu.memory_space<vmem>>, vector<1x256x128xbf16>
    %314 = vector.shape_cast %313 : vector<1x256x128xbf16> to vector<256x128xbf16>
    %cst_151 = arith.constant dense<0.000000e+00> : vector<16x128xf32>
    %315 = tpu.matmul %312, %314, %cst_151 {dimension_numbers = #tpu.dot_dimension_numbers<[1], [0], [0], [1], [0, 0, 1, 1], [], []>} : vector<16x256xbf16>, vector<256x128xbf16>, vector<16x128xf32> -> vector<16x128xf32>
    %c2_152 = arith.constant 2 : index
    %c0_153 = arith.constant 0 : index
    %c0_154 = arith.constant 0 : index
    %316 = vector.load %arg13[%c2_152, %c0_153, %c0_154] : memref<4x1x128xf32, #tpu.memory_space<vmem>>, vector<1x1x128xf32>
    %317 = vector.shape_cast %316 : vector<1x1x128xf32> to vector<1x128xf32>
    %318 = vector.broadcast %317 : vector<1x128xf32> to vector<16x128xf32>
    %319 = arith.addf %315, %318 : vector<16x128xf32>
    %320 = arith.addf %301, %319 : vector<16x128xf32>
    %c2_155 = arith.constant 2 : index
    %c0_156 = arith.constant 0 : index
    %c0_157 = arith.constant 0 : index
    %321 = vector.load %arg14[%c2_155, %c0_156, %c0_157] : memref<4x1x128xf32, #tpu.memory_space<vmem>>, vector<1x1x128xf32>
    %322 = vector.shape_cast %321 : vector<1x1x128xf32> to vector<1x128xf32>
    %c2_158 = arith.constant 2 : index
    %c0_159 = arith.constant 0 : index
    %c0_160 = arith.constant 0 : index
    %323 = vector.load %arg15[%c2_158, %c0_159, %c0_160] : memref<4x1x128xf32, #tpu.memory_space<vmem>>, vector<1x1x128xf32>
    %324 = vector.shape_cast %323 : vector<1x1x128xf32> to vector<1x128xf32>
    %cst_161 = arith.constant dense<0.000000e+00> : vector<16xf32>
    %325 = vector.multi_reduction <add>, %320, %cst_161 [1] : vector<16x128xf32> to vector<16xf32>
    %326 = vector.shape_cast %325 : vector<16xf32> to vector<16x1xf32>
    %cst_162 = arith.constant 1.280000e+02 : f32
    %327 = vector.broadcast %cst_162 : f32 to vector<16x1xf32>
    %328 = arith.divf %326, %327 : vector<16x1xf32>
    %329 = vector.broadcast %328 : vector<16x1xf32> to vector<16x128xf32>
    %330 = arith.subf %320, %329 : vector<16x128xf32>
    %331 = arith.mulf %330, %330 : vector<16x128xf32>
    %cst_163 = arith.constant dense<0.000000e+00> : vector<16xf32>
    %332 = vector.multi_reduction <add>, %331, %cst_163 [1] : vector<16x128xf32> to vector<16xf32>
    %333 = vector.shape_cast %332 : vector<16xf32> to vector<16x1xf32>
    %cst_164 = arith.constant 1.280000e+02 : f32
    %334 = vector.broadcast %cst_164 : f32 to vector<16x1xf32>
    %335 = arith.divf %333, %334 : vector<16x1xf32>
    %336 = vector.broadcast %328 : vector<16x1xf32> to vector<16x128xf32>
    %337 = arith.subf %320, %336 : vector<16x128xf32>
    %cst_165 = arith.constant 9.99999974E-6 : f32
    %338 = vector.broadcast %cst_165 : f32 to vector<16x1xf32>
    %339 = arith.addf %335, %338 : vector<16x1xf32>
    %340 = math.rsqrt %339 : vector<16x1xf32>
    %341 = vector.broadcast %340 : vector<16x1xf32> to vector<16x128xf32>
    %342 = arith.mulf %337, %341 : vector<16x128xf32>
    %343 = vector.broadcast %322 : vector<1x128xf32> to vector<16x128xf32>
    %344 = arith.mulf %342, %343 : vector<16x128xf32>
    %345 = vector.broadcast %324 : vector<1x128xf32> to vector<16x128xf32>
    %346 = arith.addf %344, %345 : vector<16x128xf32>
    %347 = arith.truncf %346 : vector<16x128xf32> to vector<16x128xbf16>
    %c3 = arith.constant 3 : index
    %c0_166 = arith.constant 0 : index
    %c0_167 = arith.constant 0 : index
    %348 = vector.load %arg4[%c3, %c0_166, %c0_167] : memref<4x128x384xbf16, #tpu.memory_space<vmem>>, vector<1x128x384xbf16>
    %349 = vector.shape_cast %348 : vector<1x128x384xbf16> to vector<128x384xbf16>
    %cst_168 = arith.constant dense<0.000000e+00> : vector<16x384xf32>
    %350 = tpu.matmul %347, %349, %cst_168 {dimension_numbers = #tpu.dot_dimension_numbers<[1], [0], [0], [1], [0, 0, 1, 1], [], []>} : vector<16x128xbf16>, vector<128x384xbf16>, vector<16x384xf32> -> vector<16x384xf32>
    %c3_169 = arith.constant 3 : index
    %c0_170 = arith.constant 0 : index
    %c0_171 = arith.constant 0 : index
    %351 = vector.load %arg5[%c3_169, %c0_170, %c0_171] : memref<4x1x384xf32, #tpu.memory_space<vmem>>, vector<1x1x384xf32>
    %352 = vector.shape_cast %351 : vector<1x1x384xf32> to vector<1x384xf32>
    %353 = vector.broadcast %352 : vector<1x384xf32> to vector<16x384xf32>
    %354 = arith.addf %350, %353 : vector<16x384xf32>
    %355 = vector.extract_strided_slice %354 {offsets = [0, 0], sizes = [16, 128], strides = [1, 1]} : vector<16x384xf32> to vector<16x128xf32>
    %356 = arith.truncf %355 : vector<16x128xf32> to vector<16x128xbf16>
    %357 = vector.extract_strided_slice %354 {offsets = [0, 128], sizes = [16, 128], strides = [1, 1]} : vector<16x384xf32> to vector<16x128xf32>
    %358 = arith.truncf %357 : vector<16x128xf32> to vector<16x128xbf16>
    %359 = vector.extract_strided_slice %354 {offsets = [0, 256], sizes = [16, 128], strides = [1, 1]} : vector<16x384xf32> to vector<16x128xf32>
    %360 = arith.truncf %359 : vector<16x128xf32> to vector<16x128xbf16>
    %361 = tpu.concatenate %358, %358, %358, %358, %358, %358, %358, %358 in 0 : vector<16x128xbf16>, vector<16x128xbf16>, vector<16x128xbf16>, vector<16x128xbf16>, vector<16x128xbf16>, vector<16x128xbf16>, vector<16x128xbf16>, vector<16x128xbf16> -> vector<128x128xbf16>
    %362 = arith.mulf %361, %2 : vector<128x128xbf16>
    %363 = tpu.concatenate %360, %360, %360, %360, %360, %360, %360, %360 in 0 : vector<16x128xbf16>, vector<16x128xbf16>, vector<16x128xbf16>, vector<16x128xbf16>, vector<16x128xbf16>, vector<16x128xbf16>, vector<16x128xbf16>, vector<16x128xbf16> -> vector<128x128xbf16>
    %364 = arith.mulf %363, %2 : vector<128x128xbf16>
    %cst_172 = arith.constant dense<0.000000e+00> : vector<16x128xf32>
    %365 = tpu.matmul %356, %362, %cst_172 {dimension_numbers = #tpu.dot_dimension_numbers<[1], [1], [0], [0], [0, 0, 1, 0], [], []>} : vector<16x128xbf16>, vector<128x128xbf16>, vector<16x128xf32> -> vector<16x128xf32>
    %366 = vector.broadcast %1 : f32 to vector<16x128xf32>
    %367 = arith.mulf %365, %366 : vector<16x128xf32>
    %cst_173 = arith.constant dense<0xFF800000> : vector<16xf32>
    %368 = vector.multi_reduction <maximumf>, %367, %cst_173 [1] : vector<16x128xf32> to vector<16xf32>
    %369 = vector.shape_cast %368 : vector<16xf32> to vector<16x1xf32>
    %370 = vector.broadcast %369 : vector<16x1xf32> to vector<16x128xf32>
    %371 = arith.subf %367, %370 : vector<16x128xf32>
    %372 = math.exp %371 : vector<16x128xf32>
    %373 = arith.mulf %372, %3 : vector<16x128xf32>
    %374 = tpu.concatenate %364, %2 in 1 : vector<128x128xbf16>, vector<128x128xbf16> -> vector<128x256xbf16>
    %375 = arith.truncf %373 : vector<16x128xf32> to vector<16x128xbf16>
    %cst_174 = arith.constant dense<0.000000e+00> : vector<16x256xf32>
    %376 = tpu.matmul %375, %374, %cst_174 {dimension_numbers = #tpu.dot_dimension_numbers<[1], [0], [0], [1], [0, 0, 1, 1], [], []>} : vector<16x128xbf16>, vector<128x256xbf16>, vector<16x256xf32> -> vector<16x256xf32>
    %377 = vector.extract_strided_slice %376 {offsets = [0, 0], sizes = [16, 128], strides = [1, 1]} : vector<16x256xf32> to vector<16x128xf32>
    %378 = vector.extract_strided_slice %376 {offsets = [0, 128], sizes = [16, 128], strides = [1, 1]} : vector<16x256xf32> to vector<16x128xf32>
    %379 = tpu.reciprocal %378 : vector<16x128xf32> -> vector<16x128xf32>
    %380 = arith.mulf %377, %379 : vector<16x128xf32>
    %381 = arith.truncf %380 : vector<16x128xf32> to vector<16x128xbf16>
    %c3_175 = arith.constant 3 : index
    %c0_176 = arith.constant 0 : index
    %c0_177 = arith.constant 0 : index
    %382 = vector.load %arg6[%c3_175, %c0_176, %c0_177] : memref<4x128x128xbf16, #tpu.memory_space<vmem>>, vector<1x128x128xbf16>
    %383 = vector.shape_cast %382 : vector<1x128x128xbf16> to vector<128x128xbf16>
    %cst_178 = arith.constant dense<0.000000e+00> : vector<16x128xf32>
    %384 = tpu.matmul %381, %383, %cst_178 {dimension_numbers = #tpu.dot_dimension_numbers<[1], [0], [0], [1], [0, 0, 1, 1], [], []>} : vector<16x128xbf16>, vector<128x128xbf16>, vector<16x128xf32> -> vector<16x128xf32>
    %c3_179 = arith.constant 3 : index
    %c0_180 = arith.constant 0 : index
    %c0_181 = arith.constant 0 : index
    %385 = vector.load %arg7[%c3_179, %c0_180, %c0_181] : memref<4x1x128xf32, #tpu.memory_space<vmem>>, vector<1x1x128xf32>
    %386 = vector.shape_cast %385 : vector<1x1x128xf32> to vector<1x128xf32>
    %387 = vector.broadcast %386 : vector<1x128xf32> to vector<16x128xf32>
    %388 = arith.addf %384, %387 : vector<16x128xf32>
    %389 = arith.addf %346, %388 : vector<16x128xf32>
    %c3_182 = arith.constant 3 : index
    %c0_183 = arith.constant 0 : index
    %c0_184 = arith.constant 0 : index
    %390 = vector.load %arg8[%c3_182, %c0_183, %c0_184] : memref<4x1x128xf32, #tpu.memory_space<vmem>>, vector<1x1x128xf32>
    %391 = vector.shape_cast %390 : vector<1x1x128xf32> to vector<1x128xf32>
    %c3_185 = arith.constant 3 : index
    %c0_186 = arith.constant 0 : index
    %c0_187 = arith.constant 0 : index
    %392 = vector.load %arg9[%c3_185, %c0_186, %c0_187] : memref<4x1x128xf32, #tpu.memory_space<vmem>>, vector<1x1x128xf32>
    %393 = vector.shape_cast %392 : vector<1x1x128xf32> to vector<1x128xf32>
    %cst_188 = arith.constant dense<0.000000e+00> : vector<16xf32>
    %394 = vector.multi_reduction <add>, %389, %cst_188 [1] : vector<16x128xf32> to vector<16xf32>
    %395 = vector.shape_cast %394 : vector<16xf32> to vector<16x1xf32>
    %cst_189 = arith.constant 1.280000e+02 : f32
    %396 = vector.broadcast %cst_189 : f32 to vector<16x1xf32>
    %397 = arith.divf %395, %396 : vector<16x1xf32>
    %398 = vector.broadcast %397 : vector<16x1xf32> to vector<16x128xf32>
    %399 = arith.subf %389, %398 : vector<16x128xf32>
    %400 = arith.mulf %399, %399 : vector<16x128xf32>
    %cst_190 = arith.constant dense<0.000000e+00> : vector<16xf32>
    %401 = vector.multi_reduction <add>, %400, %cst_190 [1] : vector<16x128xf32> to vector<16xf32>
    %402 = vector.shape_cast %401 : vector<16xf32> to vector<16x1xf32>
    %cst_191 = arith.constant 1.280000e+02 : f32
    %403 = vector.broadcast %cst_191 : f32 to vector<16x1xf32>
    %404 = arith.divf %402, %403 : vector<16x1xf32>
    %405 = vector.broadcast %397 : vector<16x1xf32> to vector<16x128xf32>
    %406 = arith.subf %389, %405 : vector<16x128xf32>
    %cst_192 = arith.constant 9.99999974E-6 : f32
    %407 = vector.broadcast %cst_192 : f32 to vector<16x1xf32>
    %408 = arith.addf %404, %407 : vector<16x1xf32>
    %409 = math.rsqrt %408 : vector<16x1xf32>
    %410 = vector.broadcast %409 : vector<16x1xf32> to vector<16x128xf32>
    %411 = arith.mulf %406, %410 : vector<16x128xf32>
    %412 = vector.broadcast %391 : vector<1x128xf32> to vector<16x128xf32>
    %413 = arith.mulf %411, %412 : vector<16x128xf32>
    %414 = vector.broadcast %393 : vector<1x128xf32> to vector<16x128xf32>
    %415 = arith.addf %413, %414 : vector<16x128xf32>
    %416 = arith.truncf %415 : vector<16x128xf32> to vector<16x128xbf16>
    %c3_193 = arith.constant 3 : index
    %c0_194 = arith.constant 0 : index
    %c0_195 = arith.constant 0 : index
    %417 = vector.load %arg10[%c3_193, %c0_194, %c0_195] : memref<4x128x256xbf16, #tpu.memory_space<vmem>>, vector<1x128x256xbf16>
    %418 = vector.shape_cast %417 : vector<1x128x256xbf16> to vector<128x256xbf16>
    %cst_196 = arith.constant dense<0.000000e+00> : vector<16x256xf32>
    %419 = tpu.matmul %416, %418, %cst_196 {dimension_numbers = #tpu.dot_dimension_numbers<[1], [0], [0], [1], [0, 0, 1, 1], [], []>} : vector<16x128xbf16>, vector<128x256xbf16>, vector<16x256xf32> -> vector<16x256xf32>
    %c3_197 = arith.constant 3 : index
    %c0_198 = arith.constant 0 : index
    %c0_199 = arith.constant 0 : index
    %420 = vector.load %arg11[%c3_197, %c0_198, %c0_199] : memref<4x1x256xf32, #tpu.memory_space<vmem>>, vector<1x1x256xf32>
    %421 = vector.shape_cast %420 : vector<1x1x256xf32> to vector<1x256xf32>
    %422 = vector.broadcast %421 : vector<1x256xf32> to vector<16x256xf32>
    %423 = arith.addf %419, %422 : vector<16x256xf32>
    %cst_200 = arith.constant 0.000000e+00 : f32
    %424 = vector.broadcast %cst_200 : f32 to vector<16x256xf32>
    %425 = arith.maximumf %423, %424 : vector<16x256xf32>
    %426 = arith.truncf %425 : vector<16x256xf32> to vector<16x256xbf16>
    %c3_201 = arith.constant 3 : index
    %c0_202 = arith.constant 0 : index
    %c0_203 = arith.constant 0 : index
    %427 = vector.load %arg12[%c3_201, %c0_202, %c0_203] : memref<4x256x128xbf16, #tpu.memory_space<vmem>>, vector<1x256x128xbf16>
    %428 = vector.shape_cast %427 : vector<1x256x128xbf16> to vector<256x128xbf16>
    %cst_204 = arith.constant dense<0.000000e+00> : vector<16x128xf32>
    %429 = tpu.matmul %426, %428, %cst_204 {dimension_numbers = #tpu.dot_dimension_numbers<[1], [0], [0], [1], [0, 0, 1, 1], [], []>} : vector<16x256xbf16>, vector<256x128xbf16>, vector<16x128xf32> -> vector<16x128xf32>
    %c3_205 = arith.constant 3 : index
    %c0_206 = arith.constant 0 : index
    %c0_207 = arith.constant 0 : index
    %430 = vector.load %arg13[%c3_205, %c0_206, %c0_207] : memref<4x1x128xf32, #tpu.memory_space<vmem>>, vector<1x1x128xf32>
    %431 = vector.shape_cast %430 : vector<1x1x128xf32> to vector<1x128xf32>
    %432 = vector.broadcast %431 : vector<1x128xf32> to vector<16x128xf32>
    %433 = arith.addf %429, %432 : vector<16x128xf32>
    %434 = arith.addf %415, %433 : vector<16x128xf32>
    %c3_208 = arith.constant 3 : index
    %c0_209 = arith.constant 0 : index
    %c0_210 = arith.constant 0 : index
    %435 = vector.load %arg14[%c3_208, %c0_209, %c0_210] : memref<4x1x128xf32, #tpu.memory_space<vmem>>, vector<1x1x128xf32>
    %436 = vector.shape_cast %435 : vector<1x1x128xf32> to vector<1x128xf32>
    %c3_211 = arith.constant 3 : index
    %c0_212 = arith.constant 0 : index
    %c0_213 = arith.constant 0 : index
    %437 = vector.load %arg15[%c3_211, %c0_212, %c0_213] : memref<4x1x128xf32, #tpu.memory_space<vmem>>, vector<1x1x128xf32>
    %438 = vector.shape_cast %437 : vector<1x1x128xf32> to vector<1x128xf32>
    %cst_214 = arith.constant dense<0.000000e+00> : vector<16xf32>
    %439 = vector.multi_reduction <add>, %434, %cst_214 [1] : vector<16x128xf32> to vector<16xf32>
    %440 = vector.shape_cast %439 : vector<16xf32> to vector<16x1xf32>
    %cst_215 = arith.constant 1.280000e+02 : f32
    %441 = vector.broadcast %cst_215 : f32 to vector<16x1xf32>
    %442 = arith.divf %440, %441 : vector<16x1xf32>
    %443 = vector.broadcast %442 : vector<16x1xf32> to vector<16x128xf32>
    %444 = arith.subf %434, %443 : vector<16x128xf32>
    %445 = arith.mulf %444, %444 : vector<16x128xf32>
    %cst_216 = arith.constant dense<0.000000e+00> : vector<16xf32>
    %446 = vector.multi_reduction <add>, %445, %cst_216 [1] : vector<16x128xf32> to vector<16xf32>
    %447 = vector.shape_cast %446 : vector<16xf32> to vector<16x1xf32>
    %cst_217 = arith.constant 1.280000e+02 : f32
    %448 = vector.broadcast %cst_217 : f32 to vector<16x1xf32>
    %449 = arith.divf %447, %448 : vector<16x1xf32>
    %450 = vector.broadcast %442 : vector<16x1xf32> to vector<16x128xf32>
    %451 = arith.subf %434, %450 : vector<16x128xf32>
    %cst_218 = arith.constant 9.99999974E-6 : f32
    %452 = vector.broadcast %cst_218 : f32 to vector<16x1xf32>
    %453 = arith.addf %449, %452 : vector<16x1xf32>
    %454 = math.rsqrt %453 : vector<16x1xf32>
    %455 = vector.broadcast %454 : vector<16x1xf32> to vector<16x128xf32>
    %456 = arith.mulf %451, %455 : vector<16x128xf32>
    %457 = vector.broadcast %436 : vector<1x128xf32> to vector<16x128xf32>
    %458 = arith.mulf %456, %457 : vector<16x128xf32>
    %459 = vector.broadcast %438 : vector<1x128xf32> to vector<16x128xf32>
    %460 = arith.addf %458, %459 : vector<16x128xf32>
    %c0_219 = arith.constant 0 : index
    %c0_220 = arith.constant 0 : index
    %461 = vector.load %arg3[%c0_219, %c0_220] : memref<2x16xbf16, #tpu.memory_space<vmem>>, vector<2x16xbf16>
    %462 = arith.truncf %460 : vector<16x128xf32> to vector<16x128xbf16>
    %cst_221 = arith.constant dense<0.000000e+00> : vector<2x128xf32>
    %463 = tpu.matmul %461, %462, %cst_221 {dimension_numbers = #tpu.dot_dimension_numbers<[1], [0], [0], [1], [0, 0, 1, 1], [], []>} : vector<2x16xbf16>, vector<16x128xbf16>, vector<2x128xf32> -> vector<2x128xf32>
    %464 = arith.truncf %463 : vector<2x128xf32> to vector<2x128xbf16>
    %c0_222 = arith.constant 0 : index
    %c0_223 = arith.constant 0 : index
    %465 = vector.load %arg16[%c0_222, %c0_223] : memref<128x512xbf16, #tpu.memory_space<vmem>>, vector<128x512xbf16>
    %cst_224 = arith.constant dense<0.000000e+00> : vector<2x512xf32>
    %466 = tpu.matmul %464, %465, %cst_224 {dimension_numbers = #tpu.dot_dimension_numbers<[1], [0], [0], [1], [0, 0, 1, 1], [], []>} : vector<2x128xbf16>, vector<128x512xbf16>, vector<2x512xf32> -> vector<2x512xf32>
    %c0_225 = arith.constant 0 : index
    %c0_226 = arith.constant 0 : index
    %467 = vector.load %arg17[%c0_225, %c0_226] : memref<1x512xf32, #tpu.memory_space<vmem>>, vector<1x512xf32>
    %468 = vector.broadcast %467 : vector<1x512xf32> to vector<2x512xf32>
    %469 = arith.addf %466, %468 : vector<2x512xf32>
    %cst_227 = arith.constant 0.000000e+00 : f32
    %470 = vector.broadcast %cst_227 : f32 to vector<2x512xf32>
    %471 = arith.maximumf %469, %470 : vector<2x512xf32>
    %472 = arith.truncf %471 : vector<2x512xf32> to vector<2x512xbf16>
    %c0_228 = arith.constant 0 : index
    %c0_229 = arith.constant 0 : index
    %473 = vector.load %arg18[%c0_228, %c0_229] : memref<512x128xbf16, #tpu.memory_space<vmem>>, vector<512x128xbf16>
    %cst_230 = arith.constant dense<0.000000e+00> : vector<2x128xf32>
    %474 = tpu.matmul %472, %473, %cst_230 {dimension_numbers = #tpu.dot_dimension_numbers<[1], [0], [0], [1], [0, 0, 1, 1], [], []>} : vector<2x512xbf16>, vector<512x128xbf16>, vector<2x128xf32> -> vector<2x128xf32>
    %c0_231 = arith.constant 0 : index
    %c0_232 = arith.constant 0 : index
    %475 = vector.load %arg19[%c0_231, %c0_232] : memref<1x128xf32, #tpu.memory_space<vmem>>, vector<1x128xf32>
    %476 = vector.broadcast %475 : vector<1x128xf32> to vector<2x128xf32>
    %477 = arith.addf %474, %476 : vector<2x128xf32>
    %478 = arith.truncf %477 : vector<2x128xf32> to vector<2x128xbf16>
    %c0_233 = arith.constant 0 : index
    %c0_234 = arith.constant 0 : index
    %479 = vector.load %arg20[%c0_233, %c0_234] : memref<128x128xbf16, #tpu.memory_space<vmem>>, vector<128x128xbf16>
    %cst_235 = arith.constant dense<0.000000e+00> : vector<2x128xf32>
    %480 = tpu.matmul %478, %479, %cst_235 {dimension_numbers = #tpu.dot_dimension_numbers<[1], [0], [0], [1], [0, 0, 1, 1], [], []>} : vector<2x128xbf16>, vector<128x128xbf16>, vector<2x128xf32> -> vector<2x128xf32>
    %c0_236 = arith.constant 0 : index
    %c0_237 = arith.constant 0 : index
    %481 = vector.load %arg21[%c0_236, %c0_237] : memref<1x128xf32, #tpu.memory_space<vmem>>, vector<1x128xf32>
    %482 = vector.broadcast %481 : vector<1x128xf32> to vector<2x128xf32>
    %483 = arith.addf %480, %482 : vector<2x128xf32>
    %c0_238 = arith.constant 0 : index
    %c0_239 = arith.constant 0 : index
    %484 = vector.load %arg22[%c0_238, %c0_239] : memref<2x128xf32, #tpu.memory_space<vmem>>, vector<2x128xf32>
    tpu.vector_store %arg22[%c0_238, %c0_239], %483 {strides = array<i32>} : memref<2x128xf32, #tpu.memory_space<vmem>>, vector<2x128xf32>,
    return
  }
}

</mosaic_0001>

<llo_original>
// kernel: shared_model_forward.1
$region0: #{shared_model_forward.1}
  #allocation0 [shape = 'u32[]', space=smem, size = 0x4, offset = 0x4, fixed_abs, tag = 'smem constant byte address 0x4 - core index']
  #allocation1 [shape = 'u32[144,128]{1,0:T(1,128)}', space=vmem, size = 0x12000, scoped, tag = 'internal scratch']
  %s0 = inlined_call_operand.hbm [shape: f32[16,128], index: 0, kind: input, shape index: {}]
  %s1 = inlined_call_operand.vmem [shape: bf16[128,128], index: 1, kind: input, shape index: {}]
  %s2 = inlined_call_operand.hbm [shape: f32[16,128], index: 2, kind: input, shape index: {}]
  %s3 = inlined_call_operand.vmem [shape: bf16[2,16], index: 3, kind: input, shape index: {}]
  %s4 = inlined_call_operand.hbm [shape: bf16[4,128,384], index: 4, kind: input, shape index: {}]
  %s5 = inlined_call_operand.hbm [shape: f32[4,1,384], index: 5, kind: input, shape index: {}]
  %s6 = inlined_call_operand.hbm [shape: bf16[4,128,128], index: 6, kind: input, shape index: {}]
  %s7 = inlined_call_operand.hbm [shape: f32[4,1,128], index: 7, kind: input, shape index: {}]
  %s8 = inlined_call_operand.hbm [shape: f32[4,1,128], index: 8, kind: input, shape index: {}]
  %s9 = inlined_call_operand.hbm [shape: f32[4,1,128], index: 9, kind: input, shape index: {}]
  %s10 = inlined_call_operand.hbm [shape: bf16[4,128,256], index: 10, kind: input, shape index: {}]
  %s11 = inlined_call_operand.vmem [shape: f32[4,1,256], index: 11, kind: input, shape index: {}]
  %s12 = inlined_call_operand.hbm [shape: bf16[4,256,128], index: 12, kind: input, shape index: {}]
  %s13 = inlined_call_operand.hbm [shape: f32[4,1,128], index: 13, kind: input, shape index: {}]
  %s14 = inlined_call_operand.hbm [shape: f32[4,1,128], index: 14, kind: input, shape index: {}]
  %s15 = inlined_call_operand.hbm [shape: f32[4,1,128], index: 15, kind: input, shape index: {}]
  %s16 = inlined_call_operand.hbm [shape: bf16[128,512], index: 16, kind: input, shape index: {}]
  %s17 = inlined_call_operand.hbm [shape: f32[1,512], index: 17, kind: input, shape index: {}]
  %s18 = inlined_call_operand.hbm [shape: bf16[512,128], index: 18, kind: input, shape index: {}]
  %s19 = inlined_call_operand.vmem [shape: f32[1,128], index: 19, kind: input, shape index: {}]
  %s20 = inlined_call_operand.hbm [shape: bf16[128,128], index: 20, kind: input, shape index: {}]
  %s21 = inlined_call_operand.vmem [shape: f32[1,128], index: 21, kind: input, shape index: {}]
  %s22 = inlined_call_operand.hbm [shape: f32[2,128], index: 22, kind: output, shape index: {}]
  %s23 = sld [smem:[#allocation0]]
  $region166: #{shared_model_forward.1} parent=0
    _
  %s25 = ssub.s32 1, %s23
  %s26 = scalar_select 0, %s25, %s23
  $region1: #{shared_model_forward.1} parent=0
    #allocation2 [shape = 'u8[8192]{0}', space=vmem, size = 0x2000, scoped, tag = 'input window, operand 0, single buffered']
    #allocation3 [shape = 's32[1]{0}', space=sflag, size = 0x4, scoped, tag = 'scoped memory for shared_model_forward.1']
    #allocation4 [shape = 's32[1]{0}', space=sflag, size = 0x4, scoped, tag = 'scoped memory for shared_model_forward.1']
    #allocation5 [shape = 'u8[8192]{0}', space=vmem, size = 0x2000, scoped, tag = 'input window, operand 2, single buffered']
    #allocation6 [shape = 's32[1]{0}', space=sflag, size = 0x4, scoped, tag = 'scoped memory for shared_model_forward.1']
    #allocation7 [shape = 'u8[393216]{0}', space=vmem, size = 0x60000, scoped, tag = 'input window, operand 4, single buffered']
    #allocation8 [shape = 'u8[6144]{0}', space=vmem, size = 0x1800, scoped, tag = 'input window, operand 5, single buffered']
    #allocation9 [shape = 's32[1]{0}', space=sflag, size = 0x4, scoped, tag = 'scoped memory for shared_model_forward.1']
    #allocation10 [shape = 'u8[131072]{0}', space=vmem, size = 0x20000, scoped, tag = 'input window, operand 6, single buffered']
    #allocation11 [shape = 'u8[2048]{0}', space=vmem, size = 0x800, scoped, tag = 'input window, operand 7, single buffered']
    #allocation12 [shape = 's32[1]{0}', space=sflag, size = 0x4, scoped, tag = 'scoped memory for shared_model_forward.1']
    #allocation13 [shape = 'u8[2048]{0}', space=vmem, size = 0x800, scoped, tag = 'input window, operand 8, single buffered']
    #allocation14 [shape = 'u8[2048]{0}', space=vmem, size = 0x800, scoped, tag = 'input window, operand 9, single buffered']
    #allocation15 [shape = 's32[1]{0}', space=sflag, size = 0x4, scoped, tag = 'scoped memory for shared_model_forward.1']
    #allocation16 [shape = 'u8[262144]{0}', space=vmem, size = 0x40000, scoped, tag = 'input window, operand 10, single buffered']
    #allocation17 [shape = 'u8[262144]{0}', space=vmem, size = 0x40000, scoped, tag = 'input window, operand 12, single buffered']
    #allocation18 [shape = 's32[1]{0}', space=sflag, size = 0x4, scoped, tag = 'scoped memory for shared_model_forward.1']
    #allocation19 [shape = 'u8[2048]{0}', space=vmem, size = 0x800, scoped, tag = 'input window, operand 13, single buffered']
    #allocation20 [shape = 'u8[2048]{0}', space=vmem, size = 0x800, scoped, tag = 'input window, operand 14, single buffered']
    #allocation21 [shape = 's32[1]{0}', space=sflag, size = 0x4, scoped, tag = 'scoped memory for shared_model_forward.1']
    #allocation22 [shape = 'u8[2048]{0}', space=vmem, size = 0x800, scoped, tag = 'input window, operand 15, single buffered']
    #allocation23 [shape = 'u8[131072]{0}', space=vmem, size = 0x20000, scoped, tag = 'input window, operand 16, single buffered']
    #allocation24 [shape = 's32[1]{0}', space=sflag, size = 0x4, scoped, tag = 'scoped memory for shared_model_forward.1']
    #allocation25 [shape = 'u8[2048]{0}', space=vmem, size = 0x800, scoped, tag = 'input window, operand 17, single buffered']
    #allocation26 [shape = 'u8[131072]{0}', space=vmem, size = 0x20000, scoped, tag = 'input window, operand 18, single buffered']
    #allocation27 [shape = 's32[1]{0}', space=sflag, size = 0x4, scoped, tag = 'scoped memory for shared_model_forward.1']
    #allocation28 [shape = 'u8[32768]{0}', space=vmem, size = 0x8000, scoped, tag = 'input window, operand 20, single buffered']
    #allocation29 [shape = 'u8[1024]{0}', space=vmem, size = 0x400, scoped, tag = 'output window, operand 0, single buffered']
    %27 = vsyncpa [#allocation3], 0
    %28 = vsyncpa [#allocation6], 0
    %29 = vsyncpa [#allocation9], 0
    %30 = vsyncpa [#allocation12], 0
    %31 = vsyncpa [#allocation15], 0
    %32 = vsyncpa [#allocation18], 0
    %33 = vsyncpa [#allocation21], 0
    %34 = vsyncpa [#allocation24], 0
    %35 = vsyncpa [#allocation27], 0
    %36 = vsyncpa [#allocation4], 0
    // Predicated region
    $region2: #{shared_model_forward.1} parent=1 // pred_check
      _
    $region3: #{shared_model_forward.1} parent=1 // pred_check_branch
      %38 = sbr.rel (0) target = $region5
    $region4: #{shared_model_forward.1} parent=1 // pred_region
      %s40 = ssub.s32 256, 256
      %41 = vsyncadd [#allocation3], %s40
      %s42 = sshll.u32 [#allocation2], 4
      %s43 = int_to_ptr.vmem [resolvable:$true] %s42
      %48 = dma.hbm_to_vmem [thread:$0]  %s0, 256, %s43, [#allocation3], 128, 128, 8
    $region5: #{shared_model_forward.1} parent=1 // pred_fallthru
      _
    // Predicated region
    $region6: #{shared_model_forward.1} parent=1 // pred_check
      _
    $region7: #{shared_model_forward.1} parent=1 // pred_check_branch
      %50 = sbr.rel (0) target = $region9
    $region8: #{shared_model_forward.1} parent=1 // pred_region
      _
    $region9: #{shared_model_forward.1} parent=1 // pred_fallthru
      _
    // Predicated region
    $region10: #{shared_model_forward.1} parent=1 // pred_check
      _
    $region11: #{shared_model_forward.1} parent=1 // pred_check_branch
      %52 = sbr.rel (0) target = $region13
    $region12: #{shared_model_forward.1} parent=1 // pred_region
      %s54 = ssub.s32 256, 256
      %55 = vsyncadd [#allocation6], %s54
      %s56 = sshll.u32 [#allocation5], 4
      %s57 = int_to_ptr.vmem [resolvable:$true] %s56
      %62 = dma.hbm_to_vmem [thread:$0]  %s2, 256, %s57, [#allocation6], 128, 128, 8
    $region13: #{shared_model_forward.1} parent=1 // pred_fallthru
      _
    // Predicated region
    $region14: #{shared_model_forward.1} parent=1 // pred_check
      _
    $region15: #{shared_model_forward.1} parent=1 // pred_check_branch
      %64 = sbr.rel (0) target = $region17
    $region16: #{shared_model_forward.1} parent=1 // pred_region
      _
    $region17: #{shared_model_forward.1} parent=1 // pred_fallthru
      _
    // Predicated region
    $region18: #{shared_model_forward.1} parent=1 // pred_check
      _
    $region19: #{shared_model_forward.1} parent=1 // pred_check_branch
      %66 = sbr.rel (0) target = $region21
    $region20: #{shared_model_forward.1} parent=1 // pred_region
      %s68 = ssub.s32 12288, 12288
      %69 = vsyncadd [#allocation6], %s68
      %s70 = sshll.u32 [#allocation7], 4
      %s71 = int_to_ptr.vmem [resolvable:$true] %s70
      %76 = dma.hbm_to_vmem [thread:$0]  %s4, 12288, %s71, [#allocation6], 192, 192, 12
    $region21: #{shared_model_forward.1} parent=1 // pred_fallthru
      _
    // Predicated region
    $region22: #{shared_model_forward.1} parent=1 // pred_check
      _
    $region23: #{shared_model_forward.1} parent=1 // pred_check_branch
      %78 = sbr.rel (0) target = $region25
    $region24: #{shared_model_forward.1} parent=1 // pred_region
      %s80 = ssub.s32 192, 192
      %81 = vsyncadd [#allocation9], %s80
      %s82 = sshll.u32 [#allocation8], 4
      %s83 = int_to_ptr.vmem [resolvable:$true] %s82
      %88 = dma.hbm_to_vmem [thread:$0]  %s5, 192, %s83, [#allocation9], 48, 48, 3
    $region25: #{shared_model_forward.1} parent=1 // pred_fallthru
      _
    // Predicated region
    $region26: #{shared_model_forward.1} parent=1 // pred_check
      _
    $region27: #{shared_model_forward.1} parent=1 // pred_check_branch
      %90 = sbr.rel (0) target = $region29
    $region28: #{shared_model_forward.1} parent=1 // pred_region
      %s92 = ssub.s32 4096, 4096
      %93 = vsyncadd [#allocation9], %s92
      %s94 = sshll.u32 [#allocation10], 4
      %s95 = int_to_ptr.vmem [resolvable:$true] %s94
      %100 = dma.hbm_to_vmem [thread:$0]  %s6, 4096, %s95, [#allocation9], 64, 64, 4
    $region29: #{shared_model_forward.1} parent=1 // pred_fallthru
      _
    // Predicated region
    $region30: #{shared_model_forward.1} parent=1 // pred_check
      _
    $region31: #{shared_model_forward.1} parent=1 // pred_check_branch
      %102 = sbr.rel (0) target = $region33
    $region32: #{shared_model_forward.1} parent=1 // pred_region
      %s104 = ssub.s32 64, 64
      %105 = vsyncadd [#allocation12], %s104
      %s106 = sshll.u32 [#allocation11], 4
      %s107 = int_to_ptr.vmem [resolvable:$true] %s106
      %112 = dma.hbm_to_vmem [thread:$0]  %s7, 64, %s107, [#allocation12], 16, 16, 1
    $region33: #{shared_model_forward.1} parent=1 // pred_fallthru
      _
    // Predicated region
    $region34: #{shared_model_forward.1} parent=1 // pred_check
      _
    $region35: #{shared_model_forward.1} parent=1 // pred_check_branch
      %114 = sbr.rel (0) target = $region37
    $region36: #{shared_model_forward.1} parent=1 // pred_region
      %s116 = ssub.s32 64, 64
      %117 = vsyncadd [#allocation12], %s116
      %s118 = sshll.u32 [#allocation13], 4
      %s119 = int_to_ptr.vmem [resolvable:$true] %s118
      %124 = dma.hbm_to_vmem [thread:$0]  %s8, 64, %s119, [#allocation12], 16, 16, 1
    $region37: #{shared_model_forward.1} parent=1 // pred_fallthru
      _
    // Predicated region
    $region38: #{shared_model_forward.1} parent=1 // pred_check
      _
    $region39: #{shared_model_forward.1} parent=1 // pred_check_branch
      %126 = sbr.rel (0) target = $region41
    $region40: #{shared_model_forward.1} parent=1 // pred_region
      %s128 = ssub.s32 64, 64
      %129 = vsyncadd [#allocation15], %s128
      %s130 = sshll.u32 [#allocation14], 4
      %s131 = int_to_ptr.vmem [resolvable:$true] %s130
      %136 = dma.hbm_to_vmem [thread:$0]  %s9, 64, %s131, [#allocation15], 16, 16, 1
    $region41: #{shared_model_forward.1} parent=1 // pred_fallthru
      _
    // Predicated region
    $region42: #{shared_model_forward.1} parent=1 // pred_check
      _
    $region43: #{shared_model_forward.1} parent=1 // pred_check_branch
      %138 = sbr.rel (0) target = $region45
    $region44: #{shared_model_forward.1} parent=1 // pred_region
      %s140 = ssub.s32 8192, 8192
      %141 = vsyncadd [#allocation15], %s140
      %s142 = sshll.u32 [#allocation16], 4
      %s143 = int_to_ptr.vmem [resolvable:$true] %s142
      %148 = dma.hbm_to_vmem [thread:$0]  %s10, 8192, %s143, [#allocation15], 128, 128, 8
    $region45: #{shared_model_forward.1} parent=1 // pred_fallthru
      _
    // Predicated region
    $region46: #{shared_model_forward.1} parent=1 // pred_check
      _
    $region47: #{shared_model_forward.1} parent=1 // pred_check_branch
      %150 = sbr.rel (0) target = $region49
    $region48: #{shared_model_forward.1} parent=1 // pred_region
      _
    $region49: #{shared_model_forward.1} parent=1 // pred_fallthru
      _
    // Predicated region
    $region50: #{shared_model_forward.1} parent=1 // pred_check
      _
    $region51: #{shared_model_forward.1} parent=1 // pred_check_branch
      %152 = sbr.rel (0) target = $region53
    $region52: #{shared_model_forward.1} parent=1 // pred_region
      %s154 = ssub.s32 8192, 8192
      %155 = vsyncadd [#allocation18], %s154
      %s156 = sshll.u32 [#allocation17], 4
      %s157 = int_to_ptr.vmem [resolvable:$true] %s156
      %162 = dma.hbm_to_vmem [thread:$0]  %s12, 8192, %s157, [#allocation18], 64, 64, 4
    $region53: #{shared_model_forward.1} parent=1 // pred_fallthru
      _
    // Predicated region
    $region54: #{shared_model_forward.1} parent=1 // pred_check
      _
    $region55: #{shared_model_forward.1} parent=1 // pred_check_branch
      %164 = sbr.rel (0) target = $region57
    $region56: #{shared_model_forward.1} parent=1 // pred_region
      %s166 = ssub.s32 64, 64
      %167 = vsyncadd [#allocation18], %s166
      %s168 = sshll.u32 [#allocation19], 4
      %s169 = int_to_ptr.vmem [resolvable:$true] %s168
      %174 = dma.hbm_to_vmem [thread:$0]  %s13, 64, %s169, [#allocation18], 16, 16, 1
    $region57: #{shared_model_forward.1} parent=1 // pred_fallthru
      _
    // Predicated region
    $region58: #{shared_model_forward.1} parent=1 // pred_check
      _
    $region59: #{shared_model_forward.1} parent=1 // pred_check_branch
      %176 = sbr.rel (0) target = $region61
    $region60: #{shared_model_forward.1} parent=1 // pred_region
      %s178 = ssub.s32 64, 64
      %179 = vsyncadd [#allocation21], %s178
      %s180 = sshll.u32 [#allocation20], 4
      %s181 = int_to_ptr.vmem [resolvable:$true] %s180
      %186 = dma.hbm_to_vmem [thread:$0]  %s14, 64, %s181, [#allocation21], 16, 16, 1
    $region61: #{shared_model_forward.1} parent=1 // pred_fallthru
      _
    // Predicated region
    $region62: #{shared_model_forward.1} parent=1 // pred_check
      _
    $region63: #{shared_model_forward.1} parent=1 // pred_check_branch
      %188 = sbr.rel (0) target = $region65
    $region64: #{shared_model_forward.1} parent=1 // pred_region
      %s190 = ssub.s32 64, 64
      %191 = vsyncadd [#allocation21], %s190
      %s192 = sshll.u32 [#allocation22], 4
      %s193 = int_to_ptr.vmem [resolvable:$true] %s192
      %198 = dma.hbm_to_vmem [thread:$0]  %s15, 64, %s193, [#allocation21], 16, 16, 1
    $region65: #{shared_model_forward.1} parent=1 // pred_fallthru
      _
    // Predicated region
    $region66: #{shared_model_forward.1} parent=1 // pred_check
      _
    $region67: #{shared_model_forward.1} parent=1 // pred_check_branch
      %200 = sbr.rel (0) target = $region69
    $region68: #{shared_model_forward.1} parent=1 // pred_region
      %s202 = ssub.s32 4096, 4096
      %203 = vsyncadd [#allocation24], %s202
      %s204 = sshll.u32 [#allocation23], 4
      %s205 = int_to_ptr.vmem [resolvable:$true] %s204
      %210 = dma.hbm_to_vmem [thread:$0]  %s16, 4096, %s205, [#allocation24], 256, 256, 16
    $region69: #{shared_model_forward.1} parent=1 // pred_fallthru
      _
    // Predicated region
    $region70: #{shared_model_forward.1} parent=1 // pred_check
      _
    $region71: #{shared_model_forward.1} parent=1 // pred_check_branch
      %212 = sbr.rel (0) target = $region73
    $region72: #{shared_model_forward.1} parent=1 // pred_region
      %s214 = ssub.s32 64, 64
      %215 = vsyncadd [#allocation24], %s214
      %s217 = sshll.u32 [#allocation25], 4
      %s218 = int_to_ptr.vmem [resolvable:$true] %s217
      %220 = dma.hbm_to_vmem [thread:$0]  %s17, 64, %s218, [#allocation24]
    $region73: #{shared_model_forward.1} parent=1 // pred_fallthru
      _
    // Predicated region
    $region74: #{shared_model_forward.1} parent=1 // pred_check
      _
    $region75: #{shared_model_forward.1} parent=1 // pred_check_branch
      %222 = sbr.rel (0) target = $region77
    $region76: #{shared_model_forward.1} parent=1 // pred_region
      %s224 = ssub.s32 4096, 4096
      %225 = vsyncadd [#allocation27], %s224
      %s226 = sshll.u32 [#allocation26], 4
      %s227 = int_to_ptr.vmem [resolvable:$true] %s226
      %232 = dma.hbm_to_vmem [thread:$0]  %s18, 4096, %s227, [#allocation27], 64, 64, 4
    $region77: #{shared_model_forward.1} parent=1 // pred_fallthru
      _
    // Predicated region
    $region78: #{shared_model_forward.1} parent=1 // pred_check
      _
    $region79: #{shared_model_forward.1} parent=1 // pred_check_branch
      %234 = sbr.rel (0) target = $region81
    $region80: #{shared_model_forward.1} parent=1 // pred_region
      _
    $region81: #{shared_model_forward.1} parent=1 // pred_fallthru
      _
    // Predicated region
    $region82: #{shared_model_forward.1} parent=1 // pred_check
      _
    $region83: #{shared_model_forward.1} parent=1 // pred_check_branch
      %236 = sbr.rel (0) target = $region85
    $region84: #{shared_model_forward.1} parent=1 // pred_region
      %s238 = ssub.s32 1024, 1024
      %239 = vsyncadd [#allocation27], %s238
      %s240 = sshll.u32 [#allocation28], 4
      %s241 = int_to_ptr.vmem [resolvable:$true] %s240
      %246 = dma.hbm_to_vmem [thread:$0]  %s20, 1024, %s241, [#allocation27], 64, 64, 4
    $region85: #{shared_model_forward.1} parent=1 // pred_fallthru
      _
    // Predicated region
    $region86: #{shared_model_forward.1} parent=1 // pred_check
      _
    $region87: #{shared_model_forward.1} parent=1 // pred_check_branch
      %248 = sbr.rel (0) target = $region89
    $region88: #{shared_model_forward.1} parent=1 // pred_region
      _
    $region89: #{shared_model_forward.1} parent=1 // pred_fallthru
      _
    // Predicated region
    $region90: #{shared_model_forward.1} parent=1 // pred_check
      _
    $region91: #{shared_model_forward.1} parent=1 // pred_check_branch
      %250 = sbr.rel (0) target = $region93
    $region92: #{shared_model_forward.1} parent=1 // pred_region
      %251 = dma.done [#allocation3], 256
    $region93: #{shared_model_forward.1} parent=1 // pred_fallthru
      _
    // Predicated region
    $region94: #{shared_model_forward.1} parent=1 // pred_check
      _
    $region95: #{shared_model_forward.1} parent=1 // pred_check_branch
      %253 = sbr.rel (0) target = $region97
    $region96: #{shared_model_forward.1} parent=1 // pred_region
      %254 = dma.done [#allocation6], 256
    $region97: #{shared_model_forward.1} parent=1 // pred_fallthru
      _
    // Predicated region
    $region98: #{shared_model_forward.1} parent=1 // pred_check
      _
    $region99: #{shared_model_forward.1} parent=1 // pred_check_branch
      %256 = sbr.rel (0) target = $region101
    $region100: #{shared_model_forward.1} parent=1 // pred_region
      %257 = dma.done [#allocation6], 12288
    $region101: #{shared_model_forward.1} parent=1 // pred_fallthru
      _
    // Predicated region
    $region102: #{shared_model_forward.1} parent=1 // pred_check
      _
    $region103: #{shared_model_forward.1} parent=1 // pred_check_branch
      %259 = sbr.rel (0) target = $region105
    $region104: #{shared_model_forward.1} parent=1 // pred_region
      %260 = dma.done [#allocation9], 192
    $region105: #{shared_model_forward.1} parent=1 // pred_fallthru
      _
    // Predicated region
    $region106: #{shared_model_forward.1} parent=1 // pred_check
      _
    $region107: #{shared_model_forward.1} parent=1 // pred_check_branch
      %262 = sbr.rel (0) target = $region109
    $region108: #{shared_model_forward.1} parent=1 // pred_region
      %263 = dma.done [#allocation9], 4096
    $region109: #{shared_model_forward.1} parent=1 // pred_fallthru
      _
    // Predicated region
    $region110: #{shared_model_forward.1} parent=1 // pred_check
      _
    $region111: #{shared_model_forward.1} parent=1 // pred_check_branch
      %265 = sbr.rel (0) target = $region113
    $region112: #{shared_model_forward.1} parent=1 // pred_region
      %266 = dma.done [#allocation12], 64
    $region113: #{shared_model_forward.1} parent=1 // pred_fallthru
      _
    // Predicated region
    $region114: #{shared_model_forward.1} parent=1 // pred_check
      _
    $region115: #{shared_model_forward.1} parent=1 // pred_check_branch
      %268 = sbr.rel (0) target = $region117
    $region116: #{shared_model_forward.1} parent=1 // pred_region
      %269 = dma.done [#allocation12], 64
    $region117: #{shared_model_forward.1} parent=1 // pred_fallthru
      _
    // Predicated region
    $region118: #{shared_model_forward.1} parent=1 // pred_check
      _
    $region119: #{shared_model_forward.1} parent=1 // pred_check_branch
      %271 = sbr.rel (0) target = $region121
    $region120: #{shared_model_forward.1} parent=1 // pred_region
      %272 = dma.done [#allocation15], 64
    $region121: #{shared_model_forward.1} parent=1 // pred_fallthru
      _
    // Predicated region
    $region122: #{shared_model_forward.1} parent=1 // pred_check
      _
    $region123: #{shared_model_forward.1} parent=1 // pred_check_branch
      %274 = sbr.rel (0) target = $region125
    $region124: #{shared_model_forward.1} parent=1 // pred_region
      %275 = dma.done [#allocation15], 8192
    $region125: #{shared_model_forward.1} parent=1 // pred_fallthru
      _
    // Predicated region
    $region126: #{shared_model_forward.1} parent=1 // pred_check
      _
    $region127: #{shared_model_forward.1} parent=1 // pred_check_branch
      %277 = sbr.rel (0) target = $region129
    $region128: #{shared_model_forward.1} parent=1 // pred_region
      %278 = dma.done [#allocation18], 8192
    $region129: #{shared_model_forward.1} parent=1 // pred_fallthru
      _
    // Predicated region
    $region130: #{shared_model_forward.1} parent=1 // pred_check
      _
    $region131: #{shared_model_forward.1} parent=1 // pred_check_branch
      %280 = sbr.rel (0) target = $region133
    $region132: #{shared_model_forward.1} parent=1 // pred_region
      %281 = dma.done [#allocation18], 64
    $region133: #{shared_model_forward.1} parent=1 // pred_fallthru
      _
    // Predicated region
    $region134: #{shared_model_forward.1} parent=1 // pred_check
      _
    $region135: #{shared_model_forward.1} parent=1 // pred_check_branch
      %283 = sbr.rel (0) target = $region137
    $region136: #{shared_model_forward.1} parent=1 // pred_region
      %284 = dma.done [#allocation21], 64
    $region137: #{shared_model_forward.1} parent=1 // pred_fallthru
      _
    // Predicated region
    $region138: #{shared_model_forward.1} parent=1 // pred_check
      _
    $region139: #{shared_model_forward.1} parent=1 // pred_check_branch
      %286 = sbr.rel (0) target = $region141
    $region140: #{shared_model_forward.1} parent=1 // pred_region
      %287 = dma.done [#allocation21], 64
    $region141: #{shared_model_forward.1} parent=1 // pred_fallthru
      _
    // Predicated region
    $region142: #{shared_model_forward.1} parent=1 // pred_check
      _
    $region143: #{shared_model_forward.1} parent=1 // pred_check_branch
      %289 = sbr.rel (0) target = $region145
    $region144: #{shared_model_forward.1} parent=1 // pred_region
      %290 = dma.done [#allocation24], 4096
    $region145: #{shared_model_forward.1} parent=1 // pred_fallthru
      _
    // Predicated region
    $region146: #{shared_model_forward.1} parent=1 // pred_check
      _
    $region147: #{shared_model_forward.1} parent=1 // pred_check_branch
      %292 = sbr.rel (0) target = $region149
    $region148: #{shared_model_forward.1} parent=1 // pred_region
      %293 = dma.done [#allocation24], 64
    $region149: #{shared_model_forward.1} parent=1 // pred_fallthru
      _
    // Predicated region
    $region150: #{shared_model_forward.1} parent=1 // pred_check
      _
    $region151: #{shared_model_forward.1} parent=1 // pred_check_branch
      %295 = sbr.rel (0) target = $region153
    $region152: #{shared_model_forward.1} parent=1 // pred_region
      %296 = dma.done [#allocation27], 4096
    $region153: #{shared_model_forward.1} parent=1 // pred_fallthru
      _
    // Predicated region
    $region154: #{shared_model_forward.1} parent=1 // pred_check
      _
    $region155: #{shared_model_forward.1} parent=1 // pred_check_branch
      %298 = sbr.rel (0) target = $region157
    $region156: #{shared_model_forward.1} parent=1 // pred_region
      %299 = dma.done [#allocation27], 1024
    $region157: #{shared_model_forward.1} parent=1 // pred_fallthru
      _
    %v301 = vld [vmem:[%s1] sm:$0xf]
    %v302 = vld [vmem:[%s1 + $0x4] sm:$0xf]
    %v303 = vld [vmem:[%s1 + $0x8] sm:$0xf]
    %v304 = vld [vmem:[%s1 + $0xc] sm:$0xf]
    %v305 = vld [vmem:[%s1 + $0x10] sm:$0xf]
    %v306 = vld [vmem:[%s1 + $0x14] sm:$0xf]
    %v307 = vld [vmem:[%s1 + $0x18] sm:$0xf]
    %v308 = vld [vmem:[%s1 + $0x1c] sm:$0xf]
    %v309 = vld [vmem:[%s1 + $0x20] sm:$0xf]
    %v310 = vld [vmem:[%s1 + $0x24] sm:$0xf]
    %v311 = vld [vmem:[%s1 + $0x28] sm:$0xf]
    %v312 = vld [vmem:[%s1 + $0x2c] sm:$0xf]
    %v313 = vld [vmem:[%s1 + $0x30] sm:$0xf]
    %v314 = vld [vmem:[%s1 + $0x34] sm:$0xf]
    %v315 = vld [vmem:[%s1 + $0x38] sm:$0xf]
    %v316 = vld [vmem:[%s1 + $0x3c] sm:$0xf]
    %v317 = vld [vmem:[#allocation5] sm:$0xff]
    %v318 = vld [vmem:[#allocation5 + $0x8] sm:$0xff]
    %v319 = vld [vmem:[#allocation2] sm:$0xff]
    %v320 = vld [vmem:[#allocation2 + $0x8] sm:$0xff]
    %v321 = vpack.c.bf16 %v320, %v319
    %v322 = vld [vmem:[#allocation7] sm:$0xff]
    %v323 = vld [vmem:[#allocation7 + $0x8] sm:$0xf]
    %v324 = vld [vmem:[#allocation7 + $0xc] sm:$0xff]
    %v325 = vld [vmem:[#allocation7 + $0x14] sm:$0xf]
    %v326 = vld [vmem:[#allocation7 + $0x18] sm:$0xff]
    %v327 = vld [vmem:[#allocation7 + $0x20] sm:$0xf]
    %v328 = vld [vmem:[#allocation7 + $0x24] sm:$0xff]
    %v329 = vld [vmem:[#allocation7 + $0x2c] sm:$0xf]
    %v330 = vld [vmem:[#allocation7 + $0x30] sm:$0xff]
    %v331 = vld [vmem:[#allocation7 + $0x38] sm:$0xf]
    %v332 = vld [vmem:[#allocation7 + $0x3c] sm:$0xff]
    %v333 = vld [vmem:[#allocation7 + $0x44] sm:$0xf]
    %v334 = vld [vmem:[#allocation7 + $0x48] sm:$0xff]
    %v335 = vld [vmem:[#allocation7 + $0x50] sm:$0xf]
    %v336 = vld [vmem:[#allocation7 + $0x54] sm:$0xff]
    %v337 = vld [vmem:[#allocation7 + $0x5c] sm:$0xf]
    %v338 = vld [vmem:[#allocation7 + $0x60] sm:$0xff]
    %v339 = vld [vmem:[#allocation7 + $0x68] sm:$0xf]
    %v340 = vld [vmem:[#allocation7 + $0x6c] sm:$0xff]
    %v341 = vld [vmem:[#allocation7 + $0x74] sm:$0xf]
    %v342 = vld [vmem:[#allocation7 + $0x78] sm:$0xff]
    %v343 = vld [vmem:[#allocation7 + $0x80] sm:$0xf]
    %v344 = vld [vmem:[#allocation7 + $0x84] sm:$0xff]
    %v345 = vld [vmem:[#allocation7 + $0x8c] sm:$0xf]
    %v346 = vld [vmem:[#allocation7 + $0x90] sm:$0xff]
    %v347 = vld [vmem:[#allocation7 + $0x98] sm:$0xf]
    %v348 = vld [vmem:[#allocation7 + $0x9c] sm:$0xff]
    %v349 = vld [vmem:[#allocation7 + $0xa4] sm:$0xf]
    %v350 = vld [vmem:[#allocation7 + $0xa8] sm:$0xff]
    %v351 = vld [vmem:[#allocation7 + $0xb0] sm:$0xf]
    %v352 = vld [vmem:[#allocation7 + $0xb4] sm:$0xff]
    %v353 = vld [vmem:[#allocation7 + $0xbc] sm:$0xf]
    %v354 = vld [vmem:[#allocation8] sm:$0x7]
    %v356 = vlaneseq
    %v357 = vshrl.u32 %v356, 7
    %v358 = vsub.s32 0, %v357
    %v359 = vrot.slane %v354, %v358
    %v360 = vlaneseq
    %v361 = vshrl.u32 %v360, 7
    %v362 = vsub.s32 1, %v361
    %v363 = vrot.slane %v354, %v362
    %v364 = vlaneseq
    %v365 = vshrl.u32 %v364, 7
    %v366 = vsub.s32 2, %v365
    %v367 = vrot.slane %v354, %v366
    %v403 = vunpack.c.l.b16 %v322
    %v404 = vunpack.c.h.b16 %v322
    %v405 = vunpack.c.l.b16 %v323
    %v406 = vunpack.c.l.b16 %v324
    %v407 = vunpack.c.h.b16 %v324
    %v408 = vunpack.c.l.b16 %v325
    %v409 = vunpack.c.l.b16 %v326
    %v410 = vunpack.c.h.b16 %v326
    %v411 = vunpack.c.l.b16 %v327
    %v412 = vunpack.c.l.b16 %v328
    %v413 = vunpack.c.h.b16 %v328
    %v414 = vunpack.c.l.b16 %v329
    %v415 = vunpack.c.l.b16 %v330
    %v416 = vunpack.c.h.b16 %v330
    %v417 = vunpack.c.l.b16 %v331
    %v418 = vunpack.c.l.b16 %v332
    %v419 = vunpack.c.h.b16 %v332
    %v420 = vunpack.c.l.b16 %v333
    %v421 = vunpack.c.l.b16 %v334
    %v422 = vunpack.c.h.b16 %v334
    %v423 = vunpack.c.l.b16 %v335
    %v424 = vunpack.c.l.b16 %v336
    %v425 = vunpack.c.h.b16 %v336
    %v426 = vunpack.c.l.b16 %v337
    %v427 = vunpack.c.l.b16 %v338
    %v428 = vunpack.c.h.b16 %v338
    %v429 = vunpack.c.l.b16 %v339
    %v430 = vunpack.c.l.b16 %v340
    %v431 = vunpack.c.h.b16 %v340
    %v432 = vunpack.c.l.b16 %v341
    %v433 = vunpack.c.l.b16 %v342
    %v434 = vunpack.c.h.b16 %v342
    %v435 = vunpack.c.l.b16 %v343
    %v436 = vunpack.c.l.b16 %v344
    %v437 = vunpack.c.h.b16 %v344
    %v438 = vunpack.c.l.b16 %v345
    %v439 = vunpack.c.l.b16 %v346
    %v440 = vunpack.c.h.b16 %v346
    %v441 = vunpack.c.l.b16 %v347
    %v442 = vunpack.c.l.b16 %v348
    %v443 = vunpack.c.h.b16 %v348
    %v444 = vunpack.c.l.b16 %v349
    %v445 = vunpack.c.l.b16 %v350
    %v446 = vunpack.c.h.b16 %v350
    %v447 = vunpack.c.l.b16 %v351
    %v448 = vunpack.c.l.b16 %v352
    %v449 = vunpack.c.h.b16 %v352
    %v450 = vunpack.c.l.b16 %v353
    %v451 = vpack.c.b16 %v406, %v403
    %v452 = vpack.c.b16 %v407, %v404
    %v453 = vpack.c.b16 %v408, %v405
    %v454 = vpack.c.b16 %v412, %v409
    %v455 = vpack.c.b16 %v413, %v410
    %v456 = vpack.c.b16 %v414, %v411
    %v457 = vpack.c.b16 %v418, %v415
    %v458 = vpack.c.b16 %v419, %v416
    %v459 = vpack.c.b16 %v420, %v417
    %v460 = vpack.c.b16 %v424, %v421
    %v461 = vpack.c.b16 %v425, %v422
    %v462 = vpack.c.b16 %v426, %v423
    %v463 = vpack.c.b16 %v430, %v427
    %v464 = vpack.c.b16 %v431, %v428
    %v465 = vpack.c.b16 %v432, %v429
    %v466 = vpack.c.b16 %v436, %v433
    %v467 = vpack.c.b16 %v437, %v434
    %v468 = vpack.c.b16 %v438, %v435
    %v469 = vpack.c.b16 %v442, %v439
    %v470 = vpack.c.b16 %v443, %v440
    %v471 = vpack.c.b16 %v444, %v441
    %v472 = vpack.c.b16 %v448, %v445
    %v473 = vpack.c.b16 %v449, %v446
    %v474 = vpack.c.b16 %v450, %v447
    %499 = vmatprep.subr.bf16.mxu0 %v452
    %500 = vmatpush1.bf16.msra.mxu0 %v451
    %501 = vmatprep.subr.bf16.mxu0 %v455
    %502 = vmatpush1.bf16.msra.mxu0 %v454
    %503 = vmatprep.subr.bf16.mxu0 %v458
    %504 = vmatpush1.bf16.msra.mxu0 %v457
    %505 = vmatprep.subr.bf16.mxu0 %v461
    %506 = vmatpush1.bf16.msra.mxu0 %v460
    %507 = vmatprep.subr.bf16.mxu0 %v464
    %508 = vmatpush1.bf16.msra.mxu0 %v463
    %509 = vmatprep.subr.bf16.mxu0 %v467
    %510 = vmatpush1.bf16.msra.mxu0 %v466
    %511 = vmatprep.subr.bf16.mxu0 %v470
    %512 = vmatpush1.bf16.msra.mxu0 %v469
    %513 = vmatprep.subr.bf16.mxu0 %v473
    %514 = vmatpush1.bf16.msra.mxu0 %v472
    %515 = vmatprep.subr.bf16.mxu0 0
    %516 = vmatpush1.bf16.msra.mxu0 0
    %517 = vmatprep.subr.bf16.mxu0 0
    %518 = vmatpush1.bf16.msra.mxu0 0
    %519 = vmatprep.subr.bf16.mxu0 0
    %520 = vmatpush1.bf16.msra.mxu0 0
    %521 = vmatprep.subr.bf16.mxu0 0
    %522 = vmatpush1.bf16.msra.mxu0 0
    %523 = vmatprep.subr.bf16.mxu0 0
    %524 = vmatpush1.bf16.msra.mxu0 0
    %525 = vmatprep.subr.bf16.mxu0 0
    %526 = vmatpush1.bf16.msra.mxu0 0
    %527 = vmatprep.subr.bf16.mxu0 0
    %528 = vmatpush1.bf16.msra.mxu0 0
    %529 = vmatprep.subr.bf16.mxu0 0
    %530 = vmatpush1.bf16.msra.mxu0 0
    %531 = vmatprep.mubr.bf16.mxu0 0
    %532 = vmatmul.mubr.bf16.gmra.mrb[0].mxu0 %v321
    %v533 = vpop.f32.mrb[0].mxu0
    %v534 = vadd.f32 %v359, %v533
    %v535 = vpop.f32.mrb[0].mxu0
    %v536 = vadd.f32 %v363, %v535
    %v537 = vpop.f32.mrb[0].mxu0
    %v538 = vadd.f32 %v359, %v537
    %v539 = vpop.f32.mrb[0].mxu0
    %v540 = vadd.f32 %v363, %v539
    %541 = vdwg.mxu0
    %542 = vmatprep.subr.bf16.mxu0 0
    %543 = vmatpush1.bf16.msra.mxu0 %v453
    %544 = vmatprep.subr.bf16.mxu0 0
    %545 = vmatpush1.bf16.msra.mxu0 %v456
    %546 = vmatprep.subr.bf16.mxu0 0
    %547 = vmatpush1.bf16.msra.mxu0 %v459
    %548 = vmatprep.subr.bf16.mxu0 0
    %549 = vmatpush1.bf16.msra.mxu0 %v462
    %550 = vmatprep.subr.bf16.mxu0 0
    %551 = vmatpush1.bf16.msra.mxu0 %v465
    %552 = vmatprep.subr.bf16.mxu0 0
    %553 = vmatpush1.bf16.msra.mxu0 %v468
    %554 = vmatprep.subr.bf16.mxu0 0
    %555 = vmatpush1.bf16.msra.mxu0 %v471
    %556 = vmatprep.subr.bf16.mxu0 0
    %557 = vmatpush1.bf16.msra.mxu0 %v474
    %558 = vmatprep.subr.bf16.mxu0 0
    %559 = vmatpush1.bf16.msra.mxu0 0
    %560 = vmatprep.subr.bf16.mxu0 0
    %561 = vmatpush1.bf16.msra.mxu0 0
    %562 = vmatprep.subr.bf16.mxu0 0
    %563 = vmatpush1.bf16.msra.mxu0 0
    %564 = vmatprep.subr.bf16.mxu0 0
    %565 = vmatpush1.bf16.msra.mxu0 0
    %566 = vmatprep.subr.bf16.mxu0 0
    %567 = vmatpush1.bf16.msra.mxu0 0
    %568 = vmatprep.subr.bf16.mxu0 0
    %569 = vmatpush1.bf16.msra.mxu0 0
    %570 = vmatprep.subr.bf16.mxu0 0
    %571 = vmatpush1.bf16.msra.mxu0 0
    %572 = vmatprep.subr.bf16.mxu0 0
    %573 = vmatpush1.bf16.msra.mxu0 0
    %574 = vmatprep.mubr.bf16.mxu0 0
    %575 = vmatmul.mubr.bf16.gmra.mrb[0].mxu0 %v321
    %v576 = vpop.f32.mrb[0].mxu0
    %v577 = vadd.f32 %v367, %v576
    %v578 = vpop.f32.mrb[0].mxu0
    %v579 = vpop.f32.mrb[0].mxu0
    %v580 = vadd.f32 %v367, %v579
    %v581 = vpop.f32.mrb[0].mxu0
    %582 = vdwg.mxu0
    %v583 = vpack.c.bf16 %v538, %v534
    %v584 = vpack.c.bf16 %v540, %v536
    %v585 = vpack.c.bf16 %v580, %v577
    %v602 = vunpack.c.l.b16 %v301
    %v603 = vunpack.c.l.b16 %v302
    %v604 = vunpack.c.l.b16 %v303
    %v605 = vunpack.c.l.b16 %v304
    %v606 = vunpack.c.l.b16 %v305
    %v607 = vunpack.c.l.b16 %v306
    %v608 = vunpack.c.l.b16 %v307
    %v609 = vunpack.c.l.b16 %v308
    %v610 = vunpack.c.l.b16 %v309
    %v611 = vunpack.c.l.b16 %v310
    %v612 = vunpack.c.l.b16 %v311
    %v613 = vunpack.c.l.b16 %v312
    %v614 = vunpack.c.l.b16 %v313
    %v615 = vunpack.c.l.b16 %v314
    %v616 = vunpack.c.l.b16 %v315
    %v617 = vunpack.c.l.b16 %v316
    %v618 = vpack.c.b16 %v603, %v602
    %v619 = vpack.c.b16 %v605, %v604
    %v620 = vpack.c.b16 %v607, %v606
    %v621 = vpack.c.b16 %v609, %v608
    %v622 = vpack.c.b16 %v611, %v610
    %v623 = vpack.c.b16 %v613, %v612
    %v624 = vpack.c.b16 %v615, %v614
    %v625 = vpack.c.b16 %v617, %v616
    %v634 = vmul.bf16 %v584, %v618
    %v635 = vmul.bf16 %v584, %v619
    %v636 = vmul.bf16 %v584, %v620
    %v637 = vmul.bf16 %v584, %v621
    %v638 = vmul.bf16 %v584, %v622
    %v639 = vmul.bf16 %v584, %v623
    %v640 = vmul.bf16 %v584, %v624
    %v641 = vmul.bf16 %v584, %v625
    %v642 = vmul.bf16 %v585, %v618
    %v643 = vmul.bf16 %v585, %v619
    %v644 = vmul.bf16 %v585, %v620
    %v645 = vmul.bf16 %v585, %v621
    %v646 = vmul.bf16 %v585, %v622
    %v647 = vmul.bf16 %v585, %v623
    %v648 = vmul.bf16 %v585, %v624
    %v649 = vmul.bf16 %v585, %v625
    %650 = vmatprep.subr.bf16.mxu0 0
    %651 = vmatpush1.bf16.xpose.msra.mxu0 %v634
    %652 = vmatprep.subr.bf16.mxu0 0
    %653 = vmatpush1.bf16.xpose.msra.mxu0 %v635
    %654 = vmatprep.subr.bf16.mxu0 0
    %655 = vmatpush1.bf16.xpose.msra.mxu0 %v636
    %656 = vmatprep.subr.bf16.mxu0 0
    %657 = vmatpush1.bf16.xpose.msra.mxu0 %v637
    %658 = vmatprep.subr.bf16.mxu0 0
    %659 = vmatpush1.bf16.xpose.msra.mxu0 %v638
    %660 = vmatprep.subr.bf16.mxu0 0
    %661 = vmatpush1.bf16.xpose.msra.mxu0 %v639
    %662 = vmatprep.subr.bf16.mxu0 0
    %663 = vmatpush1.bf16.xpose.msra.mxu0 %v640
    %664 = vmatprep.subr.bf16.mxu0 0
    %665 = vmatpush1.bf16.xpose.msra.mxu0 %v641
    %666 = vmatprep.subr.bf16.mxu0 0
    %667 = vmatpush1.bf16.xpose.msra.mxu0 0
    %668 = vmatprep.subr.bf16.mxu0 0
    %669 = vmatpush1.bf16.xpose.msra.mxu0 0
    %670 = vmatprep.subr.bf16.mxu0 0
    %671 = vmatpush1.bf16.xpose.msra.mxu0 0
    %672 = vmatprep.subr.bf16.mxu0 0
    %673 = vmatpush1.bf16.xpose.msra.mxu0 0
    %674 = vmatprep.subr.bf16.mxu0 0
    %675 = vmatpush1.bf16.xpose.msra.mxu0 0
    %676 = vmatprep.subr.bf16.mxu0 0
    %677 = vmatpush1.bf16.xpose.msra.mxu0 0
    %678 = vmatprep.subr.bf16.mxu0 0
    %679 = vmatpush1.bf16.xpose.msra.mxu0 0
    %680 = vmatprep.subr.bf16.mxu0 0
    %681 = vmatpush1.bf16.xpose.msra.mxu0 0
    %682 = vmatprep.mubr.bf16.mxu0 0
    %683 = vmatmul.mubr.bf16.gmra.mrb[0].mxu0 %v583
    %v684 = vpop.f32.mrb[0].mxu0
    %v685 = vadd.f32 0.0, %v684
    %v686 = vpop.f32.mrb[0].mxu0
    %v687 = vpop.f32.mrb[0].mxu0
    %v688 = vadd.f32 0.0, %v687
    %v689 = vpop.f32.mrb[0].mxu0
    %690 = vdwg.mxu0
    %v691 = vmul.f32 %v685, 0.25
    %v692 = vmul.f32 %v688, 0.25
    %693 = vmax.xlane.f32.xlu0 %v691
    %v694 = vpop.xlane.xlu0 %693
    %695 = vmax.xlane.f32.xlu0 %v692
    %v696 = vpop.xlane.xlu0 %695
    %v697 = vsub.f32 %v691, %v694
    %v698 = vsub.f32 %v692, %v696
    %v699 = vmul.f32 %v697, 1.442695
    %v700 = vpow.pop %v699
    %v701 = vmul.f32 %v698, 1.442695
    %v702 = vpow.pop %v701
    %v703 = vmul.f32 %v700, %v317
    %v704 = vmul.f32 %v702, %v318
    %v705 = vpack.c.bf16 %v704, %v703
    %706 = vmatprep.subr.bf16.mxu0 %v618
    %707 = vmatpush1.bf16.msra.mxu0 %v642
    %708 = vmatprep.subr.bf16.mxu0 %v619
    %709 = vmatpush1.bf16.msra.mxu0 %v643
    %710 = vmatprep.subr.bf16.mxu0 %v620
    %711 = vmatpush1.bf16.msra.mxu0 %v644
    %712 = vmatprep.subr.bf16.mxu0 %v621
    %713 = vmatpush1.bf16.msra.mxu0 %v645
    %714 = vmatprep.subr.bf16.mxu0 %v622
    %715 = vmatpush1.bf16.msra.mxu0 %v646
    %716 = vmatprep.subr.bf16.mxu0 %v623
    %717 = vmatpush1.bf16.msra.mxu0 %v647
    %718 = vmatprep.subr.bf16.mxu0 %v624
    %719 = vmatpush1.bf16.msra.mxu0 %v648
    %720 = vmatprep.subr.bf16.mxu0 %v625
    %721 = vmatpush1.bf16.msra.mxu0 %v649
    %722 = vmatprep.subr.bf16.mxu0 0
    %723 = vmatpush1.bf16.msra.mxu0 0
    %724 = vmatprep.subr.bf16.mxu0 0
    %725 = vmatpush1.bf16.msra.mxu0 0
    %726 = vmatprep.subr.bf16.mxu0 0
    %727 = vmatpush1.bf16.msra.mxu0 0
    %728 = vmatprep.subr.bf16.mxu0 0
    %729 = vmatpush1.bf16.msra.mxu0 0
    %730 = vmatprep.subr.bf16.mxu0 0
    %731 = vmatpush1.bf16.msra.mxu0 0
    %732 = vmatprep.subr.bf16.mxu0 0
    %733 = vmatpush1.bf16.msra.mxu0 0
    %734 = vmatprep.subr.bf16.mxu0 0
    %735 = vmatpush1.bf16.msra.mxu0 0
    %736 = vmatprep.subr.bf16.mxu0 0
    %737 = vmatpush1.bf16.msra.mxu0 0
    %738 = vmatprep.mubr.bf16.mxu0 0
    %739 = vmatmul.mubr.bf16.gmra.mrb[0].mxu0 %v705
    %v740 = vpop.f32.mrb[0].mxu0
    %v741 = vadd.f32 0.0, %v740
    %v742 = vpop.f32.mrb[0].mxu0
    %v743 = vadd.f32 0.0, %v742
    %v744 = vpop.f32.mrb[0].mxu0
    %v745 = vadd.f32 0.0, %v744
    %v746 = vpop.f32.mrb[0].mxu0
    %v747 = vadd.f32 0.0, %v746
    %748 = vdwg.mxu0
    %v749 = vrcp.pop %v743
    %v750 = vrcp.pop %v747
    %v751 = vmul.f32 %v741, %v749
    %v752 = vmul.f32 %v745, %v750
    %v753 = vpack.c.bf16 %v752, %v751
    %v754 = vld [vmem:[#allocation10] sm:$0xf]
    %v755 = vld [vmem:[#allocation10 + $0x4] sm:$0xf]
    %v756 = vld [vmem:[#allocation10 + $0x8] sm:$0xf]
    %v757 = vld [vmem:[#allocation10 + $0xc] sm:$0xf]
    %v758 = vld [vmem:[#allocation10 + $0x10] sm:$0xf]
    %v759 = vld [vmem:[#allocation10 + $0x14] sm:$0xf]
    %v760 = vld [vmem:[#allocation10 + $0x18] sm:$0xf]
    %v761 = vld [vmem:[#allocation10 + $0x1c] sm:$0xf]
    %v762 = vld [vmem:[#allocation10 + $0x20] sm:$0xf]
    %v763 = vld [vmem:[#allocation10 + $0x24] sm:$0xf]
    %v764 = vld [vmem:[#allocation10 + $0x28] sm:$0xf]
    %v765 = vld [vmem:[#allocation10 + $0x2c] sm:$0xf]
    %v766 = vld [vmem:[#allocation10 + $0x30] sm:$0xf]
    %v767 = vld [vmem:[#allocation10 + $0x34] sm:$0xf]
    %v768 = vld [vmem:[#allocation10 + $0x38] sm:$0xf]
    %v769 = vld [vmem:[#allocation10 + $0x3c] sm:$0xf]
    %v770 = vld [vmem:[#allocation11] sm:$0x1]
    %v772 = vlaneseq
    %v773 = vshrl.u32 %v772, 7
    %v774 = vsub.s32 0, %v773
    %v775 = vrot.slane %v770, %v774
    %v793 = vunpack.c.l.b16 %v754
    %v794 = vunpack.c.l.b16 %v755
    %v795 = vunpack.c.l.b16 %v756
    %v796 = vunpack.c.l.b16 %v757
    %v797 = vunpack.c.l.b16 %v758
    %v798 = vunpack.c.l.b16 %v759
    %v799 = vunpack.c.l.b16 %v760
    %v800 = vunpack.c.l.b16 %v761
    %v801 = vunpack.c.l.b16 %v762
    %v802 = vunpack.c.l.b16 %v763
    %v803 = vunpack.c.l.b16 %v764
    %v804 = vunpack.c.l.b16 %v765
    %v805 = vunpack.c.l.b16 %v766
    %v806 = vunpack.c.l.b16 %v767
    %v807 = vunpack.c.l.b16 %v768
    %v808 = vunpack.c.l.b16 %v769
    %v809 = vpack.c.b16 %v794, %v793
    %v810 = vpack.c.b16 %v796, %v795
    %v811 = vpack.c.b16 %v798, %v797
    %v812 = vpack.c.b16 %v800, %v799
    %v813 = vpack.c.b16 %v802, %v801
    %v814 = vpack.c.b16 %v804, %v803
    %v815 = vpack.c.b16 %v806, %v805
    %v816 = vpack.c.b16 %v808, %v807
    %825 = vmatprep.subr.bf16.mxu0 0
    %826 = vmatpush1.bf16.msra.mxu0 %v809
    %827 = vmatprep.subr.bf16.mxu0 0
    %828 = vmatpush1.bf16.msra.mxu0 %v810
    %829 = vmatprep.subr.bf16.mxu0 0
    %830 = vmatpush1.bf16.msra.mxu0 %v811
    %831 = vmatprep.subr.bf16.mxu0 0
    %832 = vmatpush1.bf16.msra.mxu0 %v812
    %833 = vmatprep.subr.bf16.mxu0 0
    %834 = vmatpush1.bf16.msra.mxu0 %v813
    %835 = vmatprep.subr.bf16.mxu0 0
    %836 = vmatpush1.bf16.msra.mxu0 %v814
    %837 = vmatprep.subr.bf16.mxu0 0
    %838 = vmatpush1.bf16.msra.mxu0 %v815
    %839 = vmatprep.subr.bf16.mxu0 0
    %840 = vmatpush1.bf16.msra.mxu0 %v816
    %841 = vmatprep.subr.bf16.mxu0 0
    %842 = vmatpush1.bf16.msra.mxu0 0
    %843 = vmatprep.subr.bf16.mxu0 0
    %844 = vmatpush1.bf16.msra.mxu0 0
    %845 = vmatprep.subr.bf16.mxu0 0
    %846 = vmatpush1.bf16.msra.mxu0 0
    %847 = vmatprep.subr.bf16.mxu0 0
    %848 = vmatpush1.bf16.msra.mxu0 0
    %849 = vmatprep.subr.bf16.mxu0 0
    %850 = vmatpush1.bf16.msra.mxu0 0
    %851 = vmatprep.subr.bf16.mxu0 0
    %852 = vmatpush1.bf16.msra.mxu0 0
    %853 = vmatprep.subr.bf16.mxu0 0
    %854 = vmatpush1.bf16.msra.mxu0 0
    %855 = vmatprep.subr.bf16.mxu0 0
    %856 = vmatpush1.bf16.msra.mxu0 0
    %857 = vmatprep.mubr.bf16.mxu0 0
    %858 = vmatmul.mubr.bf16.gmra.mrb[0].mxu0 %v753
    %v859 = vpop.f32.mrb[0].mxu0
    %v860 = vadd.f32 %v775, %v859
    %v861 = vpop.f32.mrb[0].mxu0
    %v862 = vpop.f32.mrb[0].mxu0
    %v863 = vadd.f32 %v775, %v862
    %v864 = vpop.f32.mrb[0].mxu0
    %865 = vdwg.mxu0
    %v866 = vadd.f32 %v319, %v860
    %v867 = vadd.f32 %v320, %v863
    %v868 = vld [vmem:[#allocation13] sm:$0x1]
    %v869 = vld [vmem:[#allocation14] sm:$0x1]
    %870 = vadd.xlane.f32.xlu0 %v866
    %v871 = vpop.xlane.xlu0 %870
    %872 = vadd.xlane.f32.xlu0 %v867
    %v873 = vpop.xlane.xlu0 %872
    %v874 = vrcp.pop 128.0
    %v875 = vmul.f32 %v871, %v874
    %v876 = vmul.f32 %v873, %v874
    %v877 = vsub.f32 %v866, %v875
    %v878 = vsub.f32 %v867, %v876
    %v879 = vmul.f32 %v877, %v877
    %v880 = vmul.f32 %v878, %v878
    %881 = vadd.xlane.f32.xlu0 %v879
    %v882 = vpop.xlane.xlu0 %881
    %883 = vadd.xlane.f32.xlu0 %v880
    %v884 = vpop.xlane.xlu0 %883
    %v885 = vmul.f32 %v882, %v874
    %v886 = vmul.f32 %v884, %v874
    %v887 = vadd.f32 %v885, 1e-05
    %v888 = vadd.f32 %v886, 1e-05
    %v889 = vrsqrt.pop %v887
    %v890 = vrsqrt.pop %v888
    %v891 = vmul.f32 %v877, %v889
    %v892 = vmul.f32 %v878, %v890
    %v894 = vlaneseq
    %v895 = vshrl.u32 %v894, 7
    %v896 = vsub.s32 0, %v895
    %v897 = vrot.slane %v868, %v896
    %v899 = vmul.f32 %v891, %v897
    %v900 = vmul.f32 %v892, %v897
    %v902 = vlaneseq
    %v903 = vshrl.u32 %v902, 7
    %v904 = vsub.s32 0, %v903
    %v905 = vrot.slane %v869, %v904
    %v907 = vadd.f32 %v899, %v905
    %v908 = vadd.f32 %v900, %v905
    %v909 = vpack.c.bf16 %v908, %v907
    %v910 = vld [vmem:[#allocation16] sm:$0xff]
    %v911 = vld [vmem:[#allocation16 + $0x8] sm:$0xff]
    %v912 = vld [vmem:[#allocation16 + $0x10] sm:$0xff]
    %v913 = vld [vmem:[#allocation16 + $0x18] sm:$0xff]
    %v914 = vld [vmem:[#allocation16 + $0x20] sm:$0xff]
    %v915 = vld [vmem:[#allocation16 + $0x28] sm:$0xff]
    %v916 = vld [vmem:[#allocation16 + $0x30] sm:$0xff]
    %v917 = vld [vmem:[#allocation16 + $0x38] sm:$0xff]
    %v918 = vld [vmem:[#allocation16 + $0x40] sm:$0xff]
    %v919 = vld [vmem:[#allocation16 + $0x48] sm:$0xff]
    %v920 = vld [vmem:[#allocation16 + $0x50] sm:$0xff]
    %v921 = vld [vmem:[#allocation16 + $0x58] sm:$0xff]
    %v922 = vld [vmem:[#allocation16 + $0x60] sm:$0xff]
    %v923 = vld [vmem:[#allocation16 + $0x68] sm:$0xff]
    %v924 = vld [vmem:[#allocation16 + $0x70] sm:$0xff]
    %v925 = vld [vmem:[#allocation16 + $0x78] sm:$0xff]
    %v926 = vld [vmem:[%s11] sm:$0x3]
    %v928 = vlaneseq
    %v929 = vshrl.u32 %v928, 7
    %v930 = vsub.s32 0, %v929
    %v931 = vrot.slane %v926, %v930
    %v932 = vlaneseq
    %v933 = vshrl.u32 %v932, 7
    %v934 = vsub.s32 1, %v933
    %v935 = vrot.slane %v926, %v934
    %v954 = vunpack.c.l.b16 %v910
    %v955 = vunpack.c.h.b16 %v910
    %v956 = vunpack.c.l.b16 %v911
    %v957 = vunpack.c.h.b16 %v911
    %v958 = vunpack.c.l.b16 %v912
    %v959 = vunpack.c.h.b16 %v912
    %v960 = vunpack.c.l.b16 %v913
    %v961 = vunpack.c.h.b16 %v913
    %v962 = vunpack.c.l.b16 %v914
    %v963 = vunpack.c.h.b16 %v914
    %v964 = vunpack.c.l.b16 %v915
    %v965 = vunpack.c.h.b16 %v915
    %v966 = vunpack.c.l.b16 %v916
    %v967 = vunpack.c.h.b16 %v916
    %v968 = vunpack.c.l.b16 %v917
    %v969 = vunpack.c.h.b16 %v917
    %v970 = vunpack.c.l.b16 %v918
    %v971 = vunpack.c.h.b16 %v918
    %v972 = vunpack.c.l.b16 %v919
    %v973 = vunpack.c.h.b16 %v919
    %v974 = vunpack.c.l.b16 %v920
    %v975 = vunpack.c.h.b16 %v920
    %v976 = vunpack.c.l.b16 %v921
    %v977 = vunpack.c.h.b16 %v921
    %v978 = vunpack.c.l.b16 %v922
    %v979 = vunpack.c.h.b16 %v922
    %v980 = vunpack.c.l.b16 %v923
    %v981 = vunpack.c.h.b16 %v923
    %v982 = vunpack.c.l.b16 %v924
    %v983 = vunpack.c.h.b16 %v924
    %v984 = vunpack.c.l.b16 %v925
    %v985 = vunpack.c.h.b16 %v925
    %v986 = vpack.c.b16 %v956, %v954
    %v987 = vpack.c.b16 %v957, %v955
    %v988 = vpack.c.b16 %v960, %v958
    %v989 = vpack.c.b16 %v961, %v959
    %v990 = vpack.c.b16 %v964, %v962
    %v991 = vpack.c.b16 %v965, %v963
    %v992 = vpack.c.b16 %v968, %v966
    %v993 = vpack.c.b16 %v969, %v967
    %v994 = vpack.c.b16 %v972, %v970
    %v995 = vpack.c.b16 %v973, %v971
    %v996 = vpack.c.b16 %v976, %v974
    %v997 = vpack.c.b16 %v977, %v975
    %v998 = vpack.c.b16 %v980, %v978
    %v999 = vpack.c.b16 %v981, %v979
    %v1000 = vpack.c.b16 %v984, %v982
    %v1001 = vpack.c.b16 %v985, %v983
    %1018 = vmatprep.subr.bf16.mxu0 %v987
    %1019 = vmatpush1.bf16.msra.mxu0 %v986
    %1020 = vmatprep.subr.bf16.mxu0 %v989
    %1021 = vmatpush1.bf16.msra.mxu0 %v988
    %1022 = vmatprep.subr.bf16.mxu0 %v991
    %1023 = vmatpush1.bf16.msra.mxu0 %v990
    %1024 = vmatprep.subr.bf16.mxu0 %v993
    %1025 = vmatpush1.bf16.msra.mxu0 %v992
    %1026 = vmatprep.subr.bf16.mxu0 %v995
    %1027 = vmatpush1.bf16.msra.mxu0 %v994
    %1028 = vmatprep.subr.bf16.mxu0 %v997
    %1029 = vmatpush1.bf16.msra.mxu0 %v996
    %1030 = vmatprep.subr.bf16.mxu0 %v999
    %1031 = vmatpush1.bf16.msra.mxu0 %v998
    %1032 = vmatprep.subr.bf16.mxu0 %v1001
    %1033 = vmatpush1.bf16.msra.mxu0 %v1000
    %1034 = vmatprep.subr.bf16.mxu0 0
    %1035 = vmatpush1.bf16.msra.mxu0 0
    %1036 = vmatprep.subr.bf16.mxu0 0
    %1037 = vmatpush1.bf16.msra.mxu0 0
    %1038 = vmatprep.subr.bf16.mxu0 0
    %1039 = vmatpush1.bf16.msra.mxu0 0
    %1040 = vmatprep.subr.bf16.mxu0 0
    %1041 = vmatpush1.bf16.msra.mxu0 0
    %1042 = vmatprep.subr.bf16.mxu0 0
    %1043 = vmatpush1.bf16.msra.mxu0 0
    %1044 = vmatprep.subr.bf16.mxu0 0
    %1045 = vmatpush1.bf16.msra.mxu0 0
    %1046 = vmatprep.subr.bf16.mxu0 0
    %1047 = vmatpush1.bf16.msra.mxu0 0
    %1048 = vmatprep.subr.bf16.mxu0 0
    %1049 = vmatpush1.bf16.msra.mxu0 0
    %1050 = vmatprep.mubr.bf16.mxu0 0
    %1051 = vmatmul.mubr.bf16.gmra.mrb[0].mxu0 %v909
    %v1052 = vpop.f32.mrb[0].mxu0
    %v1053 = vadd.f32 %v931, %v1052
    %v1054 = vpop.f32.mrb[0].mxu0
    %v1055 = vadd.f32 %v935, %v1054
    %v1056 = vpop.f32.mrb[0].mxu0
    %v1057 = vadd.f32 %v931, %v1056
    %v1058 = vpop.f32.mrb[0].mxu0
    %v1059 = vadd.f32 %v935, %v1058
    %1060 = vdwg.mxu0
    %v1061 = vmax.f32 %v1053, 0.0
    %v1062 = vmax.f32 %v1055, 0.0
    %v1063 = vmax.f32 %v1057, 0.0
    %v1064 = vmax.f32 %v1059, 0.0
    %v1065 = vpack.c.bf16 %v1063, %v1061
    %v1066 = vpack.c.bf16 %v1064, %v1062
    %v1067 = vld [vmem:[#allocation17] sm:$0xf]
    %v1068 = vld [vmem:[#allocation17 + $0x4] sm:$0xf]
    %v1069 = vld [vmem:[#allocation17 + $0x8] sm:$0xf]
    %v1070 = vld [vmem:[#allocation17 + $0xc] sm:$0xf]
    %v1071 = vld [vmem:[#allocation17 + $0x10] sm:$0xf]
    %v1072 = vld [vmem:[#allocation17 + $0x14] sm:$0xf]
    %v1073 = vld [vmem:[#allocation17 + $0x18] sm:$0xf]
    %v1074 = vld [vmem:[#allocation17 + $0x1c] sm:$0xf]
    %v1075 = vld [vmem:[#allocation17 + $0x20] sm:$0xf]
    %v1076 = vld [vmem:[#allocation17 + $0x24] sm:$0xf]
    %v1077 = vld [vmem:[#allocation17 + $0x28] sm:$0xf]
    %v1078 = vld [vmem:[#allocation17 + $0x2c] sm:$0xf]
    %v1079 = vld [vmem:[#allocation17 + $0x30] sm:$0xf]
    %v1080 = vld [vmem:[#allocation17 + $0x34] sm:$0xf]
    %v1081 = vld [vmem:[#allocation17 + $0x38] sm:$0xf]
    %v1082 = vld [vmem:[#allocation17 + $0x3c] sm:$0xf]
    %v1083 = vld [vmem:[#allocation17 + $0x40] sm:$0xf]
    %v1084 = vld [vmem:[#allocation17 + $0x44] sm:$0xf]
    %v1085 = vld [vmem:[#allocation17 + $0x48] sm:$0xf]
    %v1086 = vld [vmem:[#allocation17 + $0x4c] sm:$0xf]
    %v1087 = vld [vmem:[#allocation17 + $0x50] sm:$0xf]
    %v1088 = vld [vmem:[#allocation17 + $0x54] sm:$0xf]
    %v1089 = vld [vmem:[#allocation17 + $0x58] sm:$0xf]
    %v1090 = vld [vmem:[#allocation17 + $0x5c] sm:$0xf]
    %v1091 = vld [vmem:[#allocation17 + $0x60] sm:$0xf]
    %v1092 = vld [vmem:[#allocation17 + $0x64] sm:$0xf]
    %v1093 = vld [vmem:[#allocation17 + $0x68] sm:$0xf]
    %v1094 = vld [vmem:[#allocation17 + $0x6c] sm:$0xf]
    %v1095 = vld [vmem:[#allocation17 + $0x70] sm:$0xf]
    %v1096 = vld [vmem:[#allocation17 + $0x74] sm:$0xf]
    %v1097 = vld [vmem:[#allocation17 + $0x78] sm:$0xf]
    %v1098 = vld [vmem:[#allocation17 + $0x7c] sm:$0xf]
    %v1099 = vld [vmem:[#allocation19] sm:$0x1]
    %v1101 = vlaneseq
    %v1102 = vshrl.u32 %v1101, 7
    %v1103 = vsub.s32 0, %v1102
    %v1104 = vrot.slane %v1099, %v1103
    %v1138 = vunpack.c.l.b16 %v1067
    %v1139 = vunpack.c.l.b16 %v1068
    %v1140 = vunpack.c.l.b16 %v1069
    %v1141 = vunpack.c.l.b16 %v1070
    %v1142 = vunpack.c.l.b16 %v1071
    %v1143 = vunpack.c.l.b16 %v1072
    %v1144 = vunpack.c.l.b16 %v1073
    %v1145 = vunpack.c.l.b16 %v1074
    %v1146 = vunpack.c.l.b16 %v1075
    %v1147 = vunpack.c.l.b16 %v1076
    %v1148 = vunpack.c.l.b16 %v1077
    %v1149 = vunpack.c.l.b16 %v1078
    %v1150 = vunpack.c.l.b16 %v1079
    %v1151 = vunpack.c.l.b16 %v1080
    %v1152 = vunpack.c.l.b16 %v1081
    %v1153 = vunpack.c.l.b16 %v1082
    %v1154 = vunpack.c.l.b16 %v1083
    %v1155 = vunpack.c.l.b16 %v1084
    %v1156 = vunpack.c.l.b16 %v1085
    %v1157 = vunpack.c.l.b16 %v1086
    %v1158 = vunpack.c.l.b16 %v1087
    %v1159 = vunpack.c.l.b16 %v1088
    %v1160 = vunpack.c.l.b16 %v1089
    %v1161 = vunpack.c.l.b16 %v1090
    %v1162 = vunpack.c.l.b16 %v1091
    %v1163 = vunpack.c.l.b16 %v1092
    %v1164 = vunpack.c.l.b16 %v1093
    %v1165 = vunpack.c.l.b16 %v1094
    %v1166 = vunpack.c.l.b16 %v1095
    %v1167 = vunpack.c.l.b16 %v1096
    %v1168 = vunpack.c.l.b16 %v1097
    %v1169 = vunpack.c.l.b16 %v1098
    %v1170 = vpack.c.b16 %v1139, %v1138
    %v1171 = vpack.c.b16 %v1141, %v1140
    %v1172 = vpack.c.b16 %v1143, %v1142
    %v1173 = vpack.c.b16 %v1145, %v1144
    %v1174 = vpack.c.b16 %v1147, %v1146
    %v1175 = vpack.c.b16 %v1149, %v1148
    %v1176 = vpack.c.b16 %v1151, %v1150
    %v1177 = vpack.c.b16 %v1153, %v1152
    %v1178 = vpack.c.b16 %v1155, %v1154
    %v1179 = vpack.c.b16 %v1157, %v1156
    %v1180 = vpack.c.b16 %v1159, %v1158
    %v1181 = vpack.c.b16 %v1161, %v1160
    %v1182 = vpack.c.b16 %v1163, %v1162
    %v1183 = vpack.c.b16 %v1165, %v1164
    %v1184 = vpack.c.b16 %v1167, %v1166
    %v1185 = vpack.c.b16 %v1169, %v1168
    %1202 = vmatprep.subr.bf16.mxu0 0
    %1203 = vmatpush1.bf16.msra.mxu0 %v1170
    %1204 = vmatprep.subr.bf16.mxu0 0
    %1205 = vmatpush1.bf16.msra.mxu0 %v1171
    %1206 = vmatprep.subr.bf16.mxu0 0
    %1207 = vmatpush1.bf16.msra.mxu0 %v1172
    %1208 = vmatprep.subr.bf16.mxu0 0
    %1209 = vmatpush1.bf16.msra.mxu0 %v1173
    %1210 = vmatprep.subr.bf16.mxu0 0
    %1211 = vmatpush1.bf16.msra.mxu0 %v1174
    %1212 = vmatprep.subr.bf16.mxu0 0
    %1213 = vmatpush1.bf16.msra.mxu0 %v1175
    %1214 = vmatprep.subr.bf16.mxu0 0
    %1215 = vmatpush1.bf16.msra.mxu0 %v1176
    %1216 = vmatprep.subr.bf16.mxu0 0
    %1217 = vmatpush1.bf16.msra.mxu0 %v1177
    %1218 = vmatprep.subr.bf16.mxu0 0
    %1219 = vmatpush1.bf16.msra.mxu0 %v1178
    %1220 = vmatprep.subr.bf16.mxu0 0
    %1221 = vmatpush1.bf16.msra.mxu0 %v1179
    %1222 = vmatprep.subr.bf16.mxu0 0
    %1223 = vmatpush1.bf16.msra.mxu0 %v1180
    %1224 = vmatprep.subr.bf16.mxu0 0
    %1225 = vmatpush1.bf16.msra.mxu0 %v1181
    %1226 = vmatprep.subr.bf16.mxu0 0
    %1227 = vmatpush1.bf16.msra.mxu0 %v1182
    %1228 = vmatprep.subr.bf16.mxu0 0
    %1229 = vmatpush1.bf16.msra.mxu0 %v1183
    %1230 = vmatprep.subr.bf16.mxu0 0
    %1231 = vmatpush1.bf16.msra.mxu0 %v1184
    %1232 = vmatprep.subr.bf16.mxu0 0
    %1233 = vmatpush1.bf16.msra.mxu0 %v1185
    %1234 = vmatprep.mubr.bf16.mxu0 %v1066
    %1235 = vmatmul.mubr.bf16.gmra.mrb[0].mxu0 %v1065
    %v1236 = vpop.f32.mrb[0].mxu0
    %v1237 = vadd.f32 %v1104, %v1236
    %v1238 = vpop.f32.mrb[0].mxu0
    %v1239 = vpop.f32.mrb[0].mxu0
    %v1240 = vadd.f32 %v1104, %v1239
    %v1241 = vpop.f32.mrb[0].mxu0
    %1242 = vdwg.mxu0
    %v1243 = vadd.f32 %v907, %v1237
    %v1244 = vadd.f32 %v908, %v1240
    %v1245 = vld [vmem:[#allocation20] sm:$0x1]
    %v1246 = vld [vmem:[#allocation22] sm:$0x1]
    %1247 = vadd.xlane.f32.xlu0 %v1243
    %v1248 = vpop.xlane.xlu0 %1247
    %1249 = vadd.xlane.f32.xlu0 %v1244
    %v1250 = vpop.xlane.xlu0 %1249
    %v1251 = vmul.f32 %v1248, %v874
    %v1252 = vmul.f32 %v1250, %v874
    %v1253 = vsub.f32 %v1243, %v1251
    %v1254 = vsub.f32 %v1244, %v1252
    %v1255 = vmul.f32 %v1253, %v1253
    %v1256 = vmul.f32 %v1254, %v1254
    %1257 = vadd.xlane.f32.xlu0 %v1255
    %v1258 = vpop.xlane.xlu0 %1257
    %1259 = vadd.xlane.f32.xlu0 %v1256
    %v1260 = vpop.xlane.xlu0 %1259
    %v1261 = vmul.f32 %v1258, %v874
    %v1262 = vmul.f32 %v1260, %v874
    %v1263 = vadd.f32 %v1261, 1e-05
    %v1264 = vadd.f32 %v1262, 1e-05
    %v1265 = vrsqrt.pop %v1263
    %v1266 = vrsqrt.pop %v1264
    %v1267 = vmul.f32 %v1253, %v1265
    %v1268 = vmul.f32 %v1254, %v1266
    %v1270 = vlaneseq
    %v1271 = vshrl.u32 %v1270, 7
    %v1272 = vsub.s32 0, %v1271
    %v1273 = vrot.slane %v1245, %v1272
    %v1275 = vmul.f32 %v1267, %v1273
    %v1276 = vmul.f32 %v1268, %v1273
    %v1278 = vlaneseq
    %v1279 = vshrl.u32 %v1278, 7
    %v1280 = vsub.s32 0, %v1279
    %v1281 = vrot.slane %v1246, %v1280
    %v1283 = vadd.f32 %v1275, %v1281
    %v1284 = vadd.f32 %v1276, %v1281
    %v1285 = vpack.c.bf16 %v1284, %v1283
    %s1286 = scalar_lea.vmem [#allocation7], 192
    %v1287 = vld [vmem:[%s1286] sm:$0xff]
    %v1288 = vld [vmem:[%s1286 + $0x8] sm:$0xf]
    %v1289 = vld [vmem:[%s1286 + $0xc] sm:$0xff]
    %v1290 = vld [vmem:[%s1286 + $0x14] sm:$0xf]
    %v1291 = vld [vmem:[%s1286 + $0x18] sm:$0xff]
    %v1292 = vld [vmem:[%s1286 + $0x20] sm:$0xf]
    %v1293 = vld [vmem:[%s1286 + $0x24] sm:$0xff]
    %v1294 = vld [vmem:[%s1286 + $0x2c] sm:$0xf]
    %v1295 = vld [vmem:[%s1286 + $0x30] sm:$0xff]
    %v1296 = vld [vmem:[%s1286 + $0x38] sm:$0xf]
    %v1297 = vld [vmem:[%s1286 + $0x3c] sm:$0xff]
    %v1298 = vld [vmem:[%s1286 + $0x44] sm:$0xf]
    %v1299 = vld [vmem:[%s1286 + $0x48] sm:$0xff]
    %v1300 = vld [vmem:[%s1286 + $0x50] sm:$0xf]
    %v1301 = vld [vmem:[%s1286 + $0x54] sm:$0xff]
    %v1302 = vld [vmem:[%s1286 + $0x5c] sm:$0xf]
    %v1303 = vld [vmem:[%s1286 + $0x60] sm:$0xff]
    %v1304 = vld [vmem:[%s1286 + $0x68] sm:$0xf]
    %v1305 = vld [vmem:[%s1286 + $0x6c] sm:$0xff]
    %v1306 = vld [vmem:[%s1286 + $0x74] sm:$0xf]
    %v1307 = vld [vmem:[%s1286 + $0x78] sm:$0xff]
    %v1308 = vld [vmem:[%s1286 + $0x80] sm:$0xf]
    %v1309 = vld [vmem:[%s1286 + $0x84] sm:$0xff]
    %v1310 = vld [vmem:[%s1286 + $0x8c] sm:$0xf]
    %v1311 = vld [vmem:[%s1286 + $0x90] sm:$0xff]
    %v1312 = vld [vmem:[%s1286 + $0x98] sm:$0xf]
    %v1313 = vld [vmem:[%s1286 + $0x9c] sm:$0xff]
    %v1314 = vld [vmem:[%s1286 + $0xa4] sm:$0xf]
    %v1315 = vld [vmem:[%s1286 + $0xa8] sm:$0xff]
    %v1316 = vld [vmem:[%s1286 + $0xb0] sm:$0xf]
    %v1317 = vld [vmem:[%s1286 + $0xb4] sm:$0xff]
    %v1318 = vld [vmem:[%s1286 + $0xbc] sm:$0xf]
    %s1319 = scalar_lea.vmem [#allocation8], 3
    %v1320 = vld [vmem:[%s1319] sm:$0x7]
    %v1322 = vlaneseq
    %v1323 = vshrl.u32 %v1322, 7
    %v1324 = vsub.s32 0, %v1323
    %v1325 = vrot.slane %v1320, %v1324
    %v1326 = vlaneseq
    %v1327 = vshrl.u32 %v1326, 7
    %v1328 = vsub.s32 1, %v1327
    %v1329 = vrot.slane %v1320, %v1328
    %v1330 = vlaneseq
    %v1331 = vshrl.u32 %v1330, 7
    %v1332 = vsub.s32 2, %v1331
    %v1333 = vrot.slane %v1320, %v1332
    %v1369 = vunpack.c.l.b16 %v1287
    %v1370 = vunpack.c.h.b16 %v1287
    %v1371 = vunpack.c.l.b16 %v1288
    %v1372 = vunpack.c.l.b16 %v1289
    %v1373 = vunpack.c.h.b16 %v1289
    %v1374 = vunpack.c.l.b16 %v1290
    %v1375 = vunpack.c.l.b16 %v1291
    %v1376 = vunpack.c.h.b16 %v1291
    %v1377 = vunpack.c.l.b16 %v1292
    %v1378 = vunpack.c.l.b16 %v1293
    %v1379 = vunpack.c.h.b16 %v1293
    %v1380 = vunpack.c.l.b16 %v1294
    %v1381 = vunpack.c.l.b16 %v1295
    %v1382 = vunpack.c.h.b16 %v1295
    %v1383 = vunpack.c.l.b16 %v1296
    %v1384 = vunpack.c.l.b16 %v1297
    %v1385 = vunpack.c.h.b16 %v1297
    %v1386 = vunpack.c.l.b16 %v1298
    %v1387 = vunpack.c.l.b16 %v1299
    %v1388 = vunpack.c.h.b16 %v1299
    %v1389 = vunpack.c.l.b16 %v1300
    %v1390 = vunpack.c.l.b16 %v1301
    %v1391 = vunpack.c.h.b16 %v1301
    %v1392 = vunpack.c.l.b16 %v1302
    %v1393 = vunpack.c.l.b16 %v1303
    %v1394 = vunpack.c.h.b16 %v1303
    %v1395 = vunpack.c.l.b16 %v1304
    %v1396 = vunpack.c.l.b16 %v1305
    %v1397 = vunpack.c.h.b16 %v1305
    %v1398 = vunpack.c.l.b16 %v1306
    %v1399 = vunpack.c.l.b16 %v1307
    %v1400 = vunpack.c.h.b16 %v1307
    %v1401 = vunpack.c.l.b16 %v1308
    %v1402 = vunpack.c.l.b16 %v1309
    %v1403 = vunpack.c.h.b16 %v1309
    %v1404 = vunpack.c.l.b16 %v1310
    %v1405 = vunpack.c.l.b16 %v1311
    %v1406 = vunpack.c.h.b16 %v1311
    %v1407 = vunpack.c.l.b16 %v1312
    %v1408 = vunpack.c.l.b16 %v1313
    %v1409 = vunpack.c.h.b16 %v1313
    %v1410 = vunpack.c.l.b16 %v1314
    %v1411 = vunpack.c.l.b16 %v1315
    %v1412 = vunpack.c.h.b16 %v1315
    %v1413 = vunpack.c.l.b16 %v1316
    %v1414 = vunpack.c.l.b16 %v1317
    %v1415 = vunpack.c.h.b16 %v1317
    %v1416 = vunpack.c.l.b16 %v1318
    %v1417 = vpack.c.b16 %v1372, %v1369
    %v1418 = vpack.c.b16 %v1373, %v1370
    %v1419 = vpack.c.b16 %v1374, %v1371
    %v1420 = vpack.c.b16 %v1378, %v1375
    %v1421 = vpack.c.b16 %v1379, %v1376
    %v1422 = vpack.c.b16 %v1380, %v1377
    %v1423 = vpack.c.b16 %v1384, %v1381
    %v1424 = vpack.c.b16 %v1385, %v1382
    %v1425 = vpack.c.b16 %v1386, %v1383
    %v1426 = vpack.c.b16 %v1390, %v1387
    %v1427 = vpack.c.b16 %v1391, %v1388
    %v1428 = vpack.c.b16 %v1392, %v1389
    %v1429 = vpack.c.b16 %v1396, %v1393
    %v1430 = vpack.c.b16 %v1397, %v1394
    %v1431 = vpack.c.b16 %v1398, %v1395
    %v1432 = vpack.c.b16 %v1402, %v1399
    %v1433 = vpack.c.b16 %v1403, %v1400
    %v1434 = vpack.c.b16 %v1404, %v1401
    %v1435 = vpack.c.b16 %v1408, %v1405
    %v1436 = vpack.c.b16 %v1409, %v1406
    %v1437 = vpack.c.b16 %v1410, %v1407
    %v1438 = vpack.c.b16 %v1414, %v1411
    %v1439 = vpack.c.b16 %v1415, %v1412
    %v1440 = vpack.c.b16 %v1416, %v1413
    %1465 = vmatprep.subr.bf16.mxu0 %v1418
    %1466 = vmatpush1.bf16.msra.mxu0 %v1417
    %1467 = vmatprep.subr.bf16.mxu0 %v1421
    %1468 = vmatpush1.bf16.msra.mxu0 %v1420
    %1469 = vmatprep.subr.bf16.mxu0 %v1424
    %1470 = vmatpush1.bf16.msra.mxu0 %v1423
    %1471 = vmatprep.subr.bf16.mxu0 %v1427
    %1472 = vmatpush1.bf16.msra.mxu0 %v1426
    %1473 = vmatprep.subr.bf16.mxu0 %v1430
    %1474 = vmatpush1.bf16.msra.mxu0 %v1429
    %1475 = vmatprep.subr.bf16.mxu0 %v1433
    %1476 = vmatpush1.bf16.msra.mxu0 %v1432
    %1477 = vmatprep.subr.bf16.mxu0 %v1436
    %1478 = vmatpush1.bf16.msra.mxu0 %v1435
    %1479 = vmatprep.subr.bf16.mxu0 %v1439
    %1480 = vmatpush1.bf16.msra.mxu0 %v1438
    %1481 = vmatprep.subr.bf16.mxu0 0
    %1482 = vmatpush1.bf16.msra.mxu0 0
    %1483 = vmatprep.subr.bf16.mxu0 0
    %1484 = vmatpush1.bf16.msra.mxu0 0
    %1485 = vmatprep.subr.bf16.mxu0 0
    %1486 = vmatpush1.bf16.msra.mxu0 0
    %1487 = vmatprep.subr.bf16.mxu0 0
    %1488 = vmatpush1.bf16.msra.mxu0 0
    %1489 = vmatprep.subr.bf16.mxu0 0
    %1490 = vmatpush1.bf16.msra.mxu0 0
    %1491 = vmatprep.subr.bf16.mxu0 0
    %1492 = vmatpush1.bf16.msra.mxu0 0
    %1493 = vmatprep.subr.bf16.mxu0 0
    %1494 = vmatpush1.bf16.msra.mxu0 0
    %1495 = vmatprep.subr.bf16.mxu0 0
    %1496 = vmatpush1.bf16.msra.mxu0 0
    %1497 = vmatprep.mubr.bf16.mxu0 0
    %1498 = vmatmul.mubr.bf16.gmra.mrb[0].mxu0 %v1285
    %v1499 = vpop.f32.mrb[0].mxu0
    %v1500 = vadd.f32 %v1325, %v1499
    %v1501 = vpop.f32.mrb[0].mxu0
    %v1502 = vadd.f32 %v1329, %v1501
    %v1503 = vpop.f32.mrb[0].mxu0
    %v1504 = vadd.f32 %v1325, %v1503
    %v1505 = vpop.f32.mrb[0].mxu0
    %v1506 = vadd.f32 %v1329, %v1505
    %1507 = vdwg.mxu0
    %1508 = vmatprep.subr.bf16.mxu0 0
    %1509 = vmatpush1.bf16.msra.mxu0 %v1419
    %1510 = vmatprep.subr.bf16.mxu0 0
    %1511 = vmatpush1.bf16.msra.mxu0 %v1422
    %1512 = vmatprep.subr.bf16.mxu0 0
    %1513 = vmatpush1.bf16.msra.mxu0 %v1425
    %1514 = vmatprep.subr.bf16.mxu0 0
    %1515 = vmatpush1.bf16.msra.mxu0 %v1428
    %1516 = vmatprep.subr.bf16.mxu0 0
    %1517 = vmatpush1.bf16.msra.mxu0 %v1431
    %1518 = vmatprep.subr.bf16.mxu0 0
    %1519 = vmatpush1.bf16.msra.mxu0 %v1434
    %1520 = vmatprep.subr.bf16.mxu0 0
    %1521 = vmatpush1.bf16.msra.mxu0 %v1437
    %1522 = vmatprep.subr.bf16.mxu0 0
    %1523 = vmatpush1.bf16.msra.mxu0 %v1440
    %1524 = vmatprep.subr.bf16.mxu0 0
    %1525 = vmatpush1.bf16.msra.mxu0 0
    %1526 = vmatprep.subr.bf16.mxu0 0
    %1527 = vmatpush1.bf16.msra.mxu0 0
    %1528 = vmatprep.subr.bf16.mxu0 0
    %1529 = vmatpush1.bf16.msra.mxu0 0
    %1530 = vmatprep.subr.bf16.mxu0 0
    %1531 = vmatpush1.bf16.msra.mxu0 0
    %1532 = vmatprep.subr.bf16.mxu0 0
    %1533 = vmatpush1.bf16.msra.mxu0 0
    %1534 = vmatprep.subr.bf16.mxu0 0
    %1535 = vmatpush1.bf16.msra.mxu0 0
    %1536 = vmatprep.subr.bf16.mxu0 0
    %1537 = vmatpush1.bf16.msra.mxu0 0
    %1538 = vmatprep.subr.bf16.mxu0 0
    %1539 = vmatpush1.bf16.msra.mxu0 0
    %1540 = vmatprep.mubr.bf16.mxu0 0
    %1541 = vmatmul.mubr.bf16.gmra.mrb[0].mxu0 %v1285
    %v1542 = vpop.f32.mrb[0].mxu0
    %v1543 = vadd.f32 %v1333, %v1542
    %v1544 = vpop.f32.mrb[0].mxu0
    %v1545 = vpop.f32.mrb[0].mxu0
    %v1546 = vadd.f32 %v1333, %v1545
    %v1547 = vpop.f32.mrb[0].mxu0
    %1548 = vdwg.mxu0
    %v1549 = vpack.c.bf16 %v1504, %v1500
    %v1550 = vpack.c.bf16 %v1506, %v1502
    %v1551 = vpack.c.bf16 %v1546, %v1543
    %v1552 = vmul.bf16 %v1550, %v618
    %v1553 = vmul.bf16 %v1550, %v619
    %v1554 = vmul.bf16 %v1550, %v620
    %v1555 = vmul.bf16 %v1550, %v621
    %v1556 = vmul.bf16 %v1550, %v622
    %v1557 = vmul.bf16 %v1550, %v623
    %v1558 = vmul.bf16 %v1550, %v624
    %v1559 = vmul.bf16 %v1550, %v625
    %v1560 = vmul.bf16 %v1551, %v618
    %v1561 = vmul.bf16 %v1551, %v619
    %v1562 = vmul.bf16 %v1551, %v620
    %v1563 = vmul.bf16 %v1551, %v621
    %v1564 = vmul.bf16 %v1551, %v622
    %v1565 = vmul.bf16 %v1551, %v623
    %v1566 = vmul.bf16 %v1551, %v624
    %v1567 = vmul.bf16 %v1551, %v625
    %1568 = vmatprep.subr.bf16.mxu0 0
    %1569 = vmatpush1.bf16.xpose.msra.mxu0 %v1552
    %1570 = vmatprep.subr.bf16.mxu0 0
    %1571 = vmatpush1.bf16.xpose.msra.mxu0 %v1553
    %1572 = vmatprep.subr.bf16.mxu0 0
    %1573 = vmatpush1.bf16.xpose.msra.mxu0 %v1554
    %1574 = vmatprep.subr.bf16.mxu0 0
    %1575 = vmatpush1.bf16.xpose.msra.mxu0 %v1555
    %1576 = vmatprep.subr.bf16.mxu0 0
    %1577 = vmatpush1.bf16.xpose.msra.mxu0 %v1556
    %1578 = vmatprep.subr.bf16.mxu0 0
    %1579 = vmatpush1.bf16.xpose.msra.mxu0 %v1557
    %1580 = vmatprep.subr.bf16.mxu0 0
    %1581 = vmatpush1.bf16.xpose.msra.mxu0 %v1558
    %1582 = vmatprep.subr.bf16.mxu0 0
    %1583 = vmatpush1.bf16.xpose.msra.mxu0 %v1559
    %1584 = vmatprep.subr.bf16.mxu0 0
    %1585 = vmatpush1.bf16.xpose.msra.mxu0 0
    %1586 = vmatprep.subr.bf16.mxu0 0
    %1587 = vmatpush1.bf16.xpose.msra.mxu0 0
    %1588 = vmatprep.subr.bf16.mxu0 0
    %1589 = vmatpush1.bf16.xpose.msra.mxu0 0
    %1590 = vmatprep.subr.bf16.mxu0 0
    %1591 = vmatpush1.bf16.xpose.msra.mxu0 0
    %1592 = vmatprep.subr.bf16.mxu0 0
    %1593 = vmatpush1.bf16.xpose.msra.mxu0 0
    %1594 = vmatprep.subr.bf16.mxu0 0
    %1595 = vmatpush1.bf16.xpose.msra.mxu0 0
    %1596 = vmatprep.subr.bf16.mxu0 0
    %1597 = vmatpush1.bf16.xpose.msra.mxu0 0
    %1598 = vmatprep.subr.bf16.mxu0 0
    %1599 = vmatpush1.bf16.xpose.msra.mxu0 0
    %1600 = vmatprep.mubr.bf16.mxu0 0
    %1601 = vmatmul.mubr.bf16.gmra.mrb[0].mxu0 %v1549
    %v1602 = vpop.f32.mrb[0].mxu0
    %v1603 = vadd.f32 0.0, %v1602
    %v1604 = vpop.f32.mrb[0].mxu0
    %v1605 = vpop.f32.mrb[0].mxu0
    %v1606 = vadd.f32 0.0, %v1605
    %v1607 = vpop.f32.mrb[0].mxu0
    %1608 = vdwg.mxu0
    %v1609 = vmul.f32 %v1603, 0.25
    %v1610 = vmul.f32 %v1606, 0.25
    %1611 = vmax.xlane.f32.xlu0 %v1609
    %v1612 = vpop.xlane.xlu0 %1611
    %1613 = vmax.xlane.f32.xlu0 %v1610
    %v1614 = vpop.xlane.xlu0 %1613
    %v1615 = vsub.f32 %v1609, %v1612
    %v1616 = vsub.f32 %v1610, %v1614
    %v1617 = vmul.f32 %v1615, 1.442695
    %v1618 = vpow.pop %v1617
    %v1619 = vmul.f32 %v1616, 1.442695
    %v1620 = vpow.pop %v1619
    %v1621 = vmul.f32 %v1618, %v317
    %v1622 = vmul.f32 %v1620, %v318
    %v1623 = vpack.c.bf16 %v1622, %v1621
    %1624 = vmatprep.subr.bf16.mxu0 %v618
    %1625 = vmatpush1.bf16.msra.mxu0 %v1560
    %1626 = vmatprep.subr.bf16.mxu0 %v619
    %1627 = vmatpush1.bf16.msra.mxu0 %v1561
    %1628 = vmatprep.subr.bf16.mxu0 %v620
    %1629 = vmatpush1.bf16.msra.mxu0 %v1562
    %1630 = vmatprep.subr.bf16.mxu0 %v621
    %1631 = vmatpush1.bf16.msra.mxu0 %v1563
    %1632 = vmatprep.subr.bf16.mxu0 %v622
    %1633 = vmatpush1.bf16.msra.mxu0 %v1564
    %1634 = vmatprep.subr.bf16.mxu0 %v623
    %1635 = vmatpush1.bf16.msra.mxu0 %v1565
    %1636 = vmatprep.subr.bf16.mxu0 %v624
    %1637 = vmatpush1.bf16.msra.mxu0 %v1566
    %1638 = vmatprep.subr.bf16.mxu0 %v625
    %1639 = vmatpush1.bf16.msra.mxu0 %v1567
    %1640 = vmatprep.subr.bf16.mxu0 0
    %1641 = vmatpush1.bf16.msra.mxu0 0
    %1642 = vmatprep.subr.bf16.mxu0 0
    %1643 = vmatpush1.bf16.msra.mxu0 0
    %1644 = vmatprep.subr.bf16.mxu0 0
    %1645 = vmatpush1.bf16.msra.mxu0 0
    %1646 = vmatprep.subr.bf16.mxu0 0
    %1647 = vmatpush1.bf16.msra.mxu0 0
    %1648 = vmatprep.subr.bf16.mxu0 0
    %1649 = vmatpush1.bf16.msra.mxu0 0
    %1650 = vmatprep.subr.bf16.mxu0 0
    %1651 = vmatpush1.bf16.msra.mxu0 0
    %1652 = vmatprep.subr.bf16.mxu0 0
    %1653 = vmatpush1.bf16.msra.mxu0 0
    %1654 = vmatprep.subr.bf16.mxu0 0
    %1655 = vmatpush1.bf16.msra.mxu0 0
    %1656 = vmatprep.mubr.bf16.mxu0 0
    %1657 = vmatmul.mubr.bf16.gmra.mrb[0].mxu0 %v1623
    %v1658 = vpop.f32.mrb[0].mxu0
    %v1659 = vadd.f32 0.0, %v1658
    %v1660 = vpop.f32.mrb[0].mxu0
    %v1661 = vadd.f32 0.0, %v1660
    %v1662 = vpop.f32.mrb[0].mxu0
    %v1663 = vadd.f32 0.0, %v1662
    %v1664 = vpop.f32.mrb[0].mxu0
    %v1665 = vadd.f32 0.0, %v1664
    %1666 = vdwg.mxu0
    %v1667 = vrcp.pop %v1661
    %v1668 = vrcp.pop %v1665
    %v1669 = vmul.f32 %v1659, %v1667
    %v1670 = vmul.f32 %v1663, %v1668
    %v1671 = vpack.c.bf16 %v1670, %v1669
    %s1672 = scalar_lea.vmem [#allocation10], 64
    %v1673 = vld [vmem:[%s1672] sm:$0xf]
    %v1674 = vld [vmem:[%s1672 + $0x4] sm:$0xf]
    %v1675 = vld [vmem:[%s1672 + $0x8] sm:$0xf]
    %v1676 = vld [vmem:[%s1672 + $0xc] sm:$0xf]
    %v1677 = vld [vmem:[%s1672 + $0x10] sm:$0xf]
    %v1678 = vld [vmem:[%s1672 + $0x14] sm:$0xf]
    %v1679 = vld [vmem:[%s1672 + $0x18] sm:$0xf]
    %v1680 = vld [vmem:[%s1672 + $0x1c] sm:$0xf]
    %v1681 = vld [vmem:[%s1672 + $0x20] sm:$0xf]
    %v1682 = vld [vmem:[%s1672 + $0x24] sm:$0xf]
    %v1683 = vld [vmem:[%s1672 + $0x28] sm:$0xf]
    %v1684 = vld [vmem:[%s1672 + $0x2c] sm:$0xf]
    %v1685 = vld [vmem:[%s1672 + $0x30] sm:$0xf]
    %v1686 = vld [vmem:[%s1672 + $0x34] sm:$0xf]
    %v1687 = vld [vmem:[%s1672 + $0x38] sm:$0xf]
    %v1688 = vld [vmem:[%s1672 + $0x3c] sm:$0xf]
    %s1689 = scalar_lea.vmem [#allocation11], 1
    %v1690 = vld [vmem:[%s1689] sm:$0x1]
    %v1692 = vlaneseq
    %v1693 = vshrl.u32 %v1692, 7
    %v1694 = vsub.s32 0, %v1693
    %v1695 = vrot.slane %v1690, %v1694
    %v1713 = vunpack.c.l.b16 %v1673
    %v1714 = vunpack.c.l.b16 %v1674
    %v1715 = vunpack.c.l.b16 %v1675
    %v1716 = vunpack.c.l.b16 %v1676
    %v1717 = vunpack.c.l.b16 %v1677
    %v1718 = vunpack.c.l.b16 %v1678
    %v1719 = vunpack.c.l.b16 %v1679
    %v1720 = vunpack.c.l.b16 %v1680
    %v1721 = vunpack.c.l.b16 %v1681
    %v1722 = vunpack.c.l.b16 %v1682
    %v1723 = vunpack.c.l.b16 %v1683
    %v1724 = vunpack.c.l.b16 %v1684
    %v1725 = vunpack.c.l.b16 %v1685
    %v1726 = vunpack.c.l.b16 %v1686
    %v1727 = vunpack.c.l.b16 %v1687
    %v1728 = vunpack.c.l.b16 %v1688
    %v1729 = vpack.c.b16 %v1714, %v1713
    %v1730 = vpack.c.b16 %v1716, %v1715
    %v1731 = vpack.c.b16 %v1718, %v1717
    %v1732 = vpack.c.b16 %v1720, %v1719
    %v1733 = vpack.c.b16 %v1722, %v1721
    %v1734 = vpack.c.b16 %v1724, %v1723
    %v1735 = vpack.c.b16 %v1726, %v1725
    %v1736 = vpack.c.b16 %v1728, %v1727
    %1745 = vmatprep.subr.bf16.mxu0 0
    %1746 = vmatpush1.bf16.msra.mxu0 %v1729
    %1747 = vmatprep.subr.bf16.mxu0 0
    %1748 = vmatpush1.bf16.msra.mxu0 %v1730
    %1749 = vmatprep.subr.bf16.mxu0 0
    %1750 = vmatpush1.bf16.msra.mxu0 %v1731
    %1751 = vmatprep.subr.bf16.mxu0 0
    %1752 = vmatpush1.bf16.msra.mxu0 %v1732
    %1753 = vmatprep.subr.bf16.mxu0 0
    %1754 = vmatpush1.bf16.msra.mxu0 %v1733
    %1755 = vmatprep.subr.bf16.mxu0 0
    %1756 = vmatpush1.bf16.msra.mxu0 %v1734
    %1757 = vmatprep.subr.bf16.mxu0 0
    %1758 = vmatpush1.bf16.msra.mxu0 %v1735
    %1759 = vmatprep.subr.bf16.mxu0 0
    %1760 = vmatpush1.bf16.msra.mxu0 %v1736
    %1761 = vmatprep.subr.bf16.mxu0 0
    %1762 = vmatpush1.bf16.msra.mxu0 0
    %1763 = vmatprep.subr.bf16.mxu0 0
    %1764 = vmatpush1.bf16.msra.mxu0 0
    %1765 = vmatprep.subr.bf16.mxu0 0
    %1766 = vmatpush1.bf16.msra.mxu0 0
    %1767 = vmatprep.subr.bf16.mxu0 0
    %1768 = vmatpush1.bf16.msra.mxu0 0
    %1769 = vmatprep.subr.bf16.mxu0 0
    %1770 = vmatpush1.bf16.msra.mxu0 0
    %1771 = vmatprep.subr.bf16.mxu0 0
    %1772 = vmatpush1.bf16.msra.mxu0 0
    %1773 = vmatprep.subr.bf16.mxu0 0
    %1774 = vmatpush1.bf16.msra.mxu0 0
    %1775 = vmatprep.subr.bf16.mxu0 0
    %1776 = vmatpush1.bf16.msra.mxu0 0
    %1777 = vmatprep.mubr.bf16.mxu0 0
    %1778 = vmatmul.mubr.bf16.gmra.mrb[0].mxu0 %v1671
    %v1779 = vpop.f32.mrb[0].mxu0
    %v1780 = vadd.f32 %v1695, %v1779
    %v1781 = vpop.f32.mrb[0].mxu0
    %v1782 = vpop.f32.mrb[0].mxu0
    %v1783 = vadd.f32 %v1695, %v1782
    %v1784 = vpop.f32.mrb[0].mxu0
    %1785 = vdwg.mxu0
    %v1786 = vadd.f32 %v1283, %v1780
    %v1787 = vadd.f32 %v1284, %v1783
    %s1788 = scalar_lea.vmem [#allocation13], 1
    %v1789 = vld [vmem:[%s1788] sm:$0x1]
    %s1790 = scalar_lea.vmem [#allocation14], 1
    %v1791 = vld [vmem:[%s1790] sm:$0x1]
    %1792 = vadd.xlane.f32.xlu0 %v1786
    %v1793 = vpop.xlane.xlu0 %1792
    %1794 = vadd.xlane.f32.xlu0 %v1787
    %v1795 = vpop.xlane.xlu0 %1794
    %v1796 = vmul.f32 %v1793, %v874
    %v1797 = vmul.f32 %v1795, %v874
    %v1798 = vsub.f32 %v1786, %v1796
    %v1799 = vsub.f32 %v1787, %v1797
    %v1800 = vmul.f32 %v1798, %v1798
    %v1801 = vmul.f32 %v1799, %v1799
    %1802 = vadd.xlane.f32.xlu0 %v1800
    %v1803 = vpop.xlane.xlu0 %1802
    %1804 = vadd.xlane.f32.xlu0 %v1801
    %v1805 = vpop.xlane.xlu0 %1804
    %v1806 = vmul.f32 %v1803, %v874
    %v1807 = vmul.f32 %v1805, %v874
    %v1808 = vadd.f32 %v1806, 1e-05
    %v1809 = vadd.f32 %v1807, 1e-05
    %v1810 = vrsqrt.pop %v1808
    %v1811 = vrsqrt.pop %v1809
    %v1812 = vmul.f32 %v1798, %v1810
    %v1813 = vmul.f32 %v1799, %v1811
    %v1815 = vlaneseq
    %v1816 = vshrl.u32 %v1815, 7
    %v1817 = vsub.s32 0, %v1816
    %v1818 = vrot.slane %v1789, %v1817
    %v1820 = vmul.f32 %v1812, %v1818
    %v1821 = vmul.f32 %v1813, %v1818
    %v1823 = vlaneseq
    %v1824 = vshrl.u32 %v1823, 7
    %v1825 = vsub.s32 0, %v1824
    %v1826 = vrot.slane %v1791, %v1825
    %v1828 = vadd.f32 %v1820, %v1826
    %v1829 = vadd.f32 %v1821, %v1826
    %v1830 = vpack.c.bf16 %v1829, %v1828
    %s1831 = scalar_lea.vmem [#allocation16], 128
    %v1832 = vld [vmem:[%s1831] sm:$0xff]
    %v1833 = vld [vmem:[%s1831 + $0x8] sm:$0xff]
    %v1834 = vld [vmem:[%s1831 + $0x10] sm:$0xff]
    %v1835 = vld [vmem:[%s1831 + $0x18] sm:$0xff]
    %v1836 = vld [vmem:[%s1831 + $0x20] sm:$0xff]
    %v1837 = vld [vmem:[%s1831 + $0x28] sm:$0xff]
    %v1838 = vld [vmem:[%s1831 + $0x30] sm:$0xff]
    %v1839 = vld [vmem:[%s1831 + $0x38] sm:$0xff]
    %v1840 = vld [vmem:[%s1831 + $0x40] sm:$0xff]
    %v1841 = vld [vmem:[%s1831 + $0x48] sm:$0xff]
    %v1842 = vld [vmem:[%s1831 + $0x50] sm:$0xff]
    %v1843 = vld [vmem:[%s1831 + $0x58] sm:$0xff]
    %v1844 = vld [vmem:[%s1831 + $0x60] sm:$0xff]
    %v1845 = vld [vmem:[%s1831 + $0x68] sm:$0xff]
    %v1846 = vld [vmem:[%s1831 + $0x70] sm:$0xff]
    %v1847 = vld [vmem:[%s1831 + $0x78] sm:$0xff]
    %s1848 = scalar_lea.vmem %s11, 2
    %v1849 = vld [vmem:[%s1848] sm:$0x3]
    %v1851 = vlaneseq
    %v1852 = vshrl.u32 %v1851, 7
    %v1853 = vsub.s32 0, %v1852
    %v1854 = vrot.slane %v1849, %v1853
    %v1855 = vlaneseq
    %v1856 = vshrl.u32 %v1855, 7
    %v1857 = vsub.s32 1, %v1856
    %v1858 = vrot.slane %v1849, %v1857
    %v1877 = vunpack.c.l.b16 %v1832
    %v1878 = vunpack.c.h.b16 %v1832
    %v1879 = vunpack.c.l.b16 %v1833
    %v1880 = vunpack.c.h.b16 %v1833
    %v1881 = vunpack.c.l.b16 %v1834
    %v1882 = vunpack.c.h.b16 %v1834
    %v1883 = vunpack.c.l.b16 %v1835
    %v1884 = vunpack.c.h.b16 %v1835
    %v1885 = vunpack.c.l.b16 %v1836
    %v1886 = vunpack.c.h.b16 %v1836
    %v1887 = vunpack.c.l.b16 %v1837
    %v1888 = vunpack.c.h.b16 %v1837
    %v1889 = vunpack.c.l.b16 %v1838
    %v1890 = vunpack.c.h.b16 %v1838
    %v1891 = vunpack.c.l.b16 %v1839
    %v1892 = vunpack.c.h.b16 %v1839
    %v1893 = vunpack.c.l.b16 %v1840
    %v1894 = vunpack.c.h.b16 %v1840
    %v1895 = vunpack.c.l.b16 %v1841
    %v1896 = vunpack.c.h.b16 %v1841
    %v1897 = vunpack.c.l.b16 %v1842
    %v1898 = vunpack.c.h.b16 %v1842
    %v1899 = vunpack.c.l.b16 %v1843
    %v1900 = vunpack.c.h.b16 %v1843
    %v1901 = vunpack.c.l.b16 %v1844
    %v1902 = vunpack.c.h.b16 %v1844
    %v1903 = vunpack.c.l.b16 %v1845
    %v1904 = vunpack.c.h.b16 %v1845
    %v1905 = vunpack.c.l.b16 %v1846
    %v1906 = vunpack.c.h.b16 %v1846
    %v1907 = vunpack.c.l.b16 %v1847
    %v1908 = vunpack.c.h.b16 %v1847
    %v1909 = vpack.c.b16 %v1879, %v1877
    %v1910 = vpack.c.b16 %v1880, %v1878
    %v1911 = vpack.c.b16 %v1883, %v1881
    %v1912 = vpack.c.b16 %v1884, %v1882
    %v1913 = vpack.c.b16 %v1887, %v1885
    %v1914 = vpack.c.b16 %v1888, %v1886
    %v1915 = vpack.c.b16 %v1891, %v1889
    %v1916 = vpack.c.b16 %v1892, %v1890
    %v1917 = vpack.c.b16 %v1895, %v1893
    %v1918 = vpack.c.b16 %v1896, %v1894
    %v1919 = vpack.c.b16 %v1899, %v1897
    %v1920 = vpack.c.b16 %v1900, %v1898
    %v1921 = vpack.c.b16 %v1903, %v1901
    %v1922 = vpack.c.b16 %v1904, %v1902
    %v1923 = vpack.c.b16 %v1907, %v1905
    %v1924 = vpack.c.b16 %v1908, %v1906
    %1941 = vmatprep.subr.bf16.mxu0 %v1910
    %1942 = vmatpush1.bf16.msra.mxu0 %v1909
    %1943 = vmatprep.subr.bf16.mxu0 %v1912
    %1944 = vmatpush1.bf16.msra.mxu0 %v1911
    %1945 = vmatprep.subr.bf16.mxu0 %v1914
    %1946 = vmatpush1.bf16.msra.mxu0 %v1913
    %1947 = vmatprep.subr.bf16.mxu0 %v1916
    %1948 = vmatpush1.bf16.msra.mxu0 %v1915
    %1949 = vmatprep.subr.bf16.mxu0 %v1918
    %1950 = vmatpush1.bf16.msra.mxu0 %v1917
    %1951 = vmatprep.subr.bf16.mxu0 %v1920
    %1952 = vmatpush1.bf16.msra.mxu0 %v1919
    %1953 = vmatprep.subr.bf16.mxu0 %v1922
    %1954 = vmatpush1.bf16.msra.mxu0 %v1921
    %1955 = vmatprep.subr.bf16.mxu0 %v1924
    %1956 = vmatpush1.bf16.msra.mxu0 %v1923
    %1957 = vmatprep.subr.bf16.mxu0 0
    %1958 = vmatpush1.bf16.msra.mxu0 0
    %1959 = vmatprep.subr.bf16.mxu0 0
    %1960 = vmatpush1.bf16.msra.mxu0 0
    %1961 = vmatprep.subr.bf16.mxu0 0
    %1962 = vmatpush1.bf16.msra.mxu0 0
    %1963 = vmatprep.subr.bf16.mxu0 0
    %1964 = vmatpush1.bf16.msra.mxu0 0
    %1965 = vmatprep.subr.bf16.mxu0 0
    %1966 = vmatpush1.bf16.msra.mxu0 0
    %1967 = vmatprep.subr.bf16.mxu0 0
    %1968 = vmatpush1.bf16.msra.mxu0 0
    %1969 = vmatprep.subr.bf16.mxu0 0
    %1970 = vmatpush1.bf16.msra.mxu0 0
    %1971 = vmatprep.subr.bf16.mxu0 0
    %1972 = vmatpush1.bf16.msra.mxu0 0
    %1973 = vmatprep.mubr.bf16.mxu0 0
    %1974 = vmatmul.mubr.bf16.gmra.mrb[0].mxu0 %v1830
    %v1975 = vpop.f32.mrb[0].mxu0
    %v1976 = vadd.f32 %v1854, %v1975
    %v1977 = vpop.f32.mrb[0].mxu0
    %v1978 = vadd.f32 %v1858, %v1977
    %v1979 = vpop.f32.mrb[0].mxu0
    %v1980 = vadd.f32 %v1854, %v1979
    %v1981 = vpop.f32.mrb[0].mxu0
    %v1982 = vadd.f32 %v1858, %v1981
    %1983 = vdwg.mxu0
    %v1984 = vmax.f32 %v1976, 0.0
    %v1985 = vmax.f32 %v1978, 0.0
    %v1986 = vmax.f32 %v1980, 0.0
    %v1987 = vmax.f32 %v1982, 0.0
    %v1988 = vpack.c.bf16 %v1986, %v1984
    %v1989 = vpack.c.bf16 %v1987, %v1985
    %s1990 = scalar_lea.vmem [#allocation17], 128
    %v1991 = vld [vmem:[%s1990] sm:$0xf]
    %v1992 = vld [vmem:[%s1990 + $0x4] sm:$0xf]
    %v1993 = vld [vmem:[%s1990 + $0x8] sm:$0xf]
    %v1994 = vld [vmem:[%s1990 + $0xc] sm:$0xf]
    %v1995 = vld [vmem:[%s1990 + $0x10] sm:$0xf]
    %v1996 = vld [vmem:[%s1990 + $0x14] sm:$0xf]
    %v1997 = vld [vmem:[%s1990 + $0x18] sm:$0xf]
    %v1998 = vld [vmem:[%s1990 + $0x1c] sm:$0xf]
    %v1999 = vld [vmem:[%s1990 + $0x20] sm:$0xf]
    %v2000 = vld [vmem:[%s1990 + $0x24] sm:$0xf]
    %v2001 = vld [vmem:[%s1990 + $0x28] sm:$0xf]
    %v2002 = vld [vmem:[%s1990 + $0x2c] sm:$0xf]
    %v2003 = vld [vmem:[%s1990 + $0x30] sm:$0xf]
    %v2004 = vld [vmem:[%s1990 + $0x34] sm:$0xf]
    %v2005 = vld [vmem:[%s1990 + $0x38] sm:$0xf]
    %v2006 = vld [vmem:[%s1990 + $0x3c] sm:$0xf]
    %v2007 = vld [vmem:[%s1990 + $0x40] sm:$0xf]
    %v2008 = vld [vmem:[%s1990 + $0x44] sm:$0xf]
    %v2009 = vld [vmem:[%s1990 + $0x48] sm:$0xf]
    %v2010 = vld [vmem:[%s1990 + $0x4c] sm:$0xf]
    %v2011 = vld [vmem:[%s1990 + $0x50] sm:$0xf]
    %v2012 = vld [vmem:[%s1990 + $0x54] sm:$0xf]
    %v2013 = vld [vmem:[%s1990 + $0x58] sm:$0xf]
    %v2014 = vld [vmem:[%s1990 + $0x5c] sm:$0xf]
    %v2015 = vld [vmem:[%s1990 + $0x60] sm:$0xf]
    %v2016 = vld [vmem:[%s1990 + $0x64] sm:$0xf]
    %v2017 = vld [vmem:[%s1990 + $0x68] sm:$0xf]
    %v2018 = vld [vmem:[%s1990 + $0x6c] sm:$0xf]
    %v2019 = vld [vmem:[%s1990 + $0x70] sm:$0xf]
    %v2020 = vld [vmem:[%s1990 + $0x74] sm:$0xf]
    %v2021 = vld [vmem:[%s1990 + $0x78] sm:$0xf]
    %v2022 = vld [vmem:[%s1990 + $0x7c] sm:$0xf]
    %s2023 = scalar_lea.vmem [#allocation19], 1
    %v2024 = vld [vmem:[%s2023] sm:$0x1]
    %v2026 = vlaneseq
    %v2027 = vshrl.u32 %v2026, 7
    %v2028 = vsub.s32 0, %v2027
    %v2029 = vrot.slane %v2024, %v2028
    %v2063 = vunpack.c.l.b16 %v1991
    %v2064 = vunpack.c.l.b16 %v1992
    %v2065 = vunpack.c.l.b16 %v1993
    %v2066 = vunpack.c.l.b16 %v1994
    %v2067 = vunpack.c.l.b16 %v1995
    %v2068 = vunpack.c.l.b16 %v1996
    %v2069 = vunpack.c.l.b16 %v1997
    %v2070 = vunpack.c.l.b16 %v1998
    %v2071 = vunpack.c.l.b16 %v1999
    %v2072 = vunpack.c.l.b16 %v2000
    %v2073 = vunpack.c.l.b16 %v2001
    %v2074 = vunpack.c.l.b16 %v2002
    %v2075 = vunpack.c.l.b16 %v2003
    %v2076 = vunpack.c.l.b16 %v2004
    %v2077 = vunpack.c.l.b16 %v2005
    %v2078 = vunpack.c.l.b16 %v2006
    %v2079 = vunpack.c.l.b16 %v2007
    %v2080 = vunpack.c.l.b16 %v2008
    %v2081 = vunpack.c.l.b16 %v2009
    %v2082 = vunpack.c.l.b16 %v2010
    %v2083 = vunpack.c.l.b16 %v2011
    %v2084 = vunpack.c.l.b16 %v2012
    %v2085 = vunpack.c.l.b16 %v2013
    %v2086 = vunpack.c.l.b16 %v2014
    %v2087 = vunpack.c.l.b16 %v2015
    %v2088 = vunpack.c.l.b16 %v2016
    %v2089 = vunpack.c.l.b16 %v2017
    %v2090 = vunpack.c.l.b16 %v2018
    %v2091 = vunpack.c.l.b16 %v2019
    %v2092 = vunpack.c.l.b16 %v2020
    %v2093 = vunpack.c.l.b16 %v2021
    %v2094 = vunpack.c.l.b16 %v2022
    %v2095 = vpack.c.b16 %v2064, %v2063
    %v2096 = vpack.c.b16 %v2066, %v2065
    %v2097 = vpack.c.b16 %v2068, %v2067
    %v2098 = vpack.c.b16 %v2070, %v2069
    %v2099 = vpack.c.b16 %v2072, %v2071
    %v2100 = vpack.c.b16 %v2074, %v2073
    %v2101 = vpack.c.b16 %v2076, %v2075
    %v2102 = vpack.c.b16 %v2078, %v2077
    %v2103 = vpack.c.b16 %v2080, %v2079
    %v2104 = vpack.c.b16 %v2082, %v2081
    %v2105 = vpack.c.b16 %v2084, %v2083
    %v2106 = vpack.c.b16 %v2086, %v2085
    %v2107 = vpack.c.b16 %v2088, %v2087
    %v2108 = vpack.c.b16 %v2090, %v2089
    %v2109 = vpack.c.b16 %v2092, %v2091
    %v2110 = vpack.c.b16 %v2094, %v2093
    %2127 = vmatprep.subr.bf16.mxu0 0
    %2128 = vmatpush1.bf16.msra.mxu0 %v2095
    %2129 = vmatprep.subr.bf16.mxu0 0
    %2130 = vmatpush1.bf16.msra.mxu0 %v2096
    %2131 = vmatprep.subr.bf16.mxu0 0
    %2132 = vmatpush1.bf16.msra.mxu0 %v2097
    %2133 = vmatprep.subr.bf16.mxu0 0
    %2134 = vmatpush1.bf16.msra.mxu0 %v2098
    %2135 = vmatprep.subr.bf16.mxu0 0
    %2136 = vmatpush1.bf16.msra.mxu0 %v2099
    %2137 = vmatprep.subr.bf16.mxu0 0
    %2138 = vmatpush1.bf16.msra.mxu0 %v2100
    %2139 = vmatprep.subr.bf16.mxu0 0
    %2140 = vmatpush1.bf16.msra.mxu0 %v2101
    %2141 = vmatprep.subr.bf16.mxu0 0
    %2142 = vmatpush1.bf16.msra.mxu0 %v2102
    %2143 = vmatprep.subr.bf16.mxu0 0
    %2144 = vmatpush1.bf16.msra.mxu0 %v2103
    %2145 = vmatprep.subr.bf16.mxu0 0
    %2146 = vmatpush1.bf16.msra.mxu0 %v2104
    %2147 = vmatprep.subr.bf16.mxu0 0
    %2148 = vmatpush1.bf16.msra.mxu0 %v2105
    %2149 = vmatprep.subr.bf16.mxu0 0
    %2150 = vmatpush1.bf16.msra.mxu0 %v2106
    %2151 = vmatprep.subr.bf16.mxu0 0
    %2152 = vmatpush1.bf16.msra.mxu0 %v2107
    %2153 = vmatprep.subr.bf16.mxu0 0
    %2154 = vmatpush1.bf16.msra.mxu0 %v2108
    %2155 = vmatprep.subr.bf16.mxu0 0
    %2156 = vmatpush1.bf16.msra.mxu0 %v2109
    %2157 = vmatprep.subr.bf16.mxu0 0
    %2158 = vmatpush1.bf16.msra.mxu0 %v2110
    %2159 = vmatprep.mubr.bf16.mxu0 %v1989
    %2160 = vmatmul.mubr.bf16.gmra.mrb[0].mxu0 %v1988
    %v2161 = vpop.f32.mrb[0].mxu0
    %v2162 = vadd.f32 %v2029, %v2161
    %v2163 = vpop.f32.mrb[0].mxu0
    %v2164 = vpop.f32.mrb[0].mxu0
    %v2165 = vadd.f32 %v2029, %v2164
    %v2166 = vpop.f32.mrb[0].mxu0
    %2167 = vdwg.mxu0
    %v2168 = vadd.f32 %v1828, %v2162
    %v2169 = vadd.f32 %v1829, %v2165
    %s2170 = scalar_lea.vmem [#allocation20], 1
    %v2171 = vld [vmem:[%s2170] sm:$0x1]
    %s2172 = scalar_lea.vmem [#allocation22], 1
    %v2173 = vld [vmem:[%s2172] sm:$0x1]
    %2174 = vadd.xlane.f32.xlu0 %v2168
    %v2175 = vpop.xlane.xlu0 %2174
    %2176 = vadd.xlane.f32.xlu0 %v2169
    %v2177 = vpop.xlane.xlu0 %2176
    %v2178 = vmul.f32 %v2175, %v874
    %v2179 = vmul.f32 %v2177, %v874
    %v2180 = vsub.f32 %v2168, %v2178
    %v2181 = vsub.f32 %v2169, %v2179
    %v2182 = vmul.f32 %v2180, %v2180
    %v2183 = vmul.f32 %v2181, %v2181
    %2184 = vadd.xlane.f32.xlu0 %v2182
    %v2185 = vpop.xlane.xlu0 %2184
    %2186 = vadd.xlane.f32.xlu0 %v2183
    %v2187 = vpop.xlane.xlu0 %2186
    %v2188 = vmul.f32 %v2185, %v874
    %v2189 = vmul.f32 %v2187, %v874
    %v2190 = vadd.f32 %v2188, 1e-05
    %v2191 = vadd.f32 %v2189, 1e-05
    %v2192 = vrsqrt.pop %v2190
    %v2193 = vrsqrt.pop %v2191
    %v2194 = vmul.f32 %v2180, %v2192
    %v2195 = vmul.f32 %v2181, %v2193
    %v2197 = vlaneseq
    %v2198 = vshrl.u32 %v2197, 7
    %v2199 = vsub.s32 0, %v2198
    %v2200 = vrot.slane %v2171, %v2199
    %v2202 = vmul.f32 %v2194, %v2200
    %v2203 = vmul.f32 %v2195, %v2200
    %v2205 = vlaneseq
    %v2206 = vshrl.u32 %v2205, 7
    %v2207 = vsub.s32 0, %v2206
    %v2208 = vrot.slane %v2173, %v2207
    %v2210 = vadd.f32 %v2202, %v2208
    %v2211 = vadd.f32 %v2203, %v2208
    %v2212 = vpack.c.bf16 %v2211, %v2210
    %s2213 = scalar_lea.vmem [#allocation7], 384
    %v2214 = vld [vmem:[%s2213] sm:$0xff]
    %v2215 = vld [vmem:[%s2213 + $0x8] sm:$0xf]
    %v2216 = vld [vmem:[%s2213 + $0xc] sm:$0xff]
    %v2217 = vld [vmem:[%s2213 + $0x14] sm:$0xf]
    %v2218 = vld [vmem:[%s2213 + $0x18] sm:$0xff]
    %v2219 = vld [vmem:[%s2213 + $0x20] sm:$0xf]
    %v2220 = vld [vmem:[%s2213 + $0x24] sm:$0xff]
    %v2221 = vld [vmem:[%s2213 + $0x2c] sm:$0xf]
    %v2222 = vld [vmem:[%s2213 + $0x30] sm:$0xff]
    %v2223 = vld [vmem:[%s2213 + $0x38] sm:$0xf]
    %v2224 = vld [vmem:[%s2213 + $0x3c] sm:$0xff]
    %v2225 = vld [vmem:[%s2213 + $0x44] sm:$0xf]
    %v2226 = vld [vmem:[%s2213 + $0x48] sm:$0xff]
    %v2227 = vld [vmem:[%s2213 + $0x50] sm:$0xf]
    %v2228 = vld [vmem:[%s2213 + $0x54] sm:$0xff]
    %v2229 = vld [vmem:[%s2213 + $0x5c] sm:$0xf]
    %v2230 = vld [vmem:[%s2213 + $0x60] sm:$0xff]
    %v2231 = vld [vmem:[%s2213 + $0x68] sm:$0xf]
    %v2232 = vld [vmem:[%s2213 + $0x6c] sm:$0xff]
    %v2233 = vld [vmem:[%s2213 + $0x74] sm:$0xf]
    %v2234 = vld [vmem:[%s2213 + $0x78] sm:$0xff]
    %v2235 = vld [vmem:[%s2213 + $0x80] sm:$0xf]
    %v2236 = vld [vmem:[%s2213 + $0x84] sm:$0xff]
    %v2237 = vld [vmem:[%s2213 + $0x8c] sm:$0xf]
    %v2238 = vld [vmem:[%s2213 + $0x90] sm:$0xff]
    %v2239 = vld [vmem:[%s2213 + $0x98] sm:$0xf]
    %v2240 = vld [vmem:[%s2213 + $0x9c] sm:$0xff]
    %v2241 = vld [vmem:[%s2213 + $0xa4] sm:$0xf]
    %v2242 = vld [vmem:[%s2213 + $0xa8] sm:$0xff]
    %v2243 = vld [vmem:[%s2213 + $0xb0] sm:$0xf]
    %v2244 = vld [vmem:[%s2213 + $0xb4] sm:$0xff]
    %v2245 = vld [vmem:[%s2213 + $0xbc] sm:$0xf]
    %s2246 = scalar_lea.vmem [#allocation8], 6
    %v2247 = vld [vmem:[%s2246] sm:$0x7]
    %v2249 = vlaneseq
    %v2250 = vshrl.u32 %v2249, 7
    %v2251 = vsub.s32 0, %v2250
    %v2252 = vrot.slane %v2247, %v2251
    %v2253 = vlaneseq
    %v2254 = vshrl.u32 %v2253, 7
    %v2255 = vsub.s32 1, %v2254
    %v2256 = vrot.slane %v2247, %v2255
    %v2257 = vlaneseq
    %v2258 = vshrl.u32 %v2257, 7
    %v2259 = vsub.s32 2, %v2258
    %v2260 = vrot.slane %v2247, %v2259
    %v2296 = vunpack.c.l.b16 %v2214
    %v2297 = vunpack.c.h.b16 %v2214
    %v2298 = vunpack.c.l.b16 %v2215
    %v2299 = vunpack.c.l.b16 %v2216
    %v2300 = vunpack.c.h.b16 %v2216
    %v2301 = vunpack.c.l.b16 %v2217
    %v2302 = vunpack.c.l.b16 %v2218
    %v2303 = vunpack.c.h.b16 %v2218
    %v2304 = vunpack.c.l.b16 %v2219
    %v2305 = vunpack.c.l.b16 %v2220
    %v2306 = vunpack.c.h.b16 %v2220
    %v2307 = vunpack.c.l.b16 %v2221
    %v2308 = vunpack.c.l.b16 %v2222
    %v2309 = vunpack.c.h.b16 %v2222
    %v2310 = vunpack.c.l.b16 %v2223
    %v2311 = vunpack.c.l.b16 %v2224
    %v2312 = vunpack.c.h.b16 %v2224
    %v2313 = vunpack.c.l.b16 %v2225
    %v2314 = vunpack.c.l.b16 %v2226
    %v2315 = vunpack.c.h.b16 %v2226
    %v2316 = vunpack.c.l.b16 %v2227
    %v2317 = vunpack.c.l.b16 %v2228
    %v2318 = vunpack.c.h.b16 %v2228
    %v2319 = vunpack.c.l.b16 %v2229
    %v2320 = vunpack.c.l.b16 %v2230
    %v2321 = vunpack.c.h.b16 %v2230
    %v2322 = vunpack.c.l.b16 %v2231
    %v2323 = vunpack.c.l.b16 %v2232
    %v2324 = vunpack.c.h.b16 %v2232
    %v2325 = vunpack.c.l.b16 %v2233
    %v2326 = vunpack.c.l.b16 %v2234
    %v2327 = vunpack.c.h.b16 %v2234
    %v2328 = vunpack.c.l.b16 %v2235
    %v2329 = vunpack.c.l.b16 %v2236
    %v2330 = vunpack.c.h.b16 %v2236
    %v2331 = vunpack.c.l.b16 %v2237
    %v2332 = vunpack.c.l.b16 %v2238
    %v2333 = vunpack.c.h.b16 %v2238
    %v2334 = vunpack.c.l.b16 %v2239
    %v2335 = vunpack.c.l.b16 %v2240
    %v2336 = vunpack.c.h.b16 %v2240
    %v2337 = vunpack.c.l.b16 %v2241
    %v2338 = vunpack.c.l.b16 %v2242
    %v2339 = vunpack.c.h.b16 %v2242
    %v2340 = vunpack.c.l.b16 %v2243
    %v2341 = vunpack.c.l.b16 %v2244
    %v2342 = vunpack.c.h.b16 %v2244
    %v2343 = vunpack.c.l.b16 %v2245
    %v2344 = vpack.c.b16 %v2299, %v2296
    %v2345 = vpack.c.b16 %v2300, %v2297
    %v2346 = vpack.c.b16 %v2301, %v2298
    %v2347 = vpack.c.b16 %v2305, %v2302
    %v2348 = vpack.c.b16 %v2306, %v2303
    %v2349 = vpack.c.b16 %v2307, %v2304
    %v2350 = vpack.c.b16 %v2311, %v2308
    %v2351 = vpack.c.b16 %v2312, %v2309
    %v2352 = vpack.c.b16 %v2313, %v2310
    %v2353 = vpack.c.b16 %v2317, %v2314
    %v2354 = vpack.c.b16 %v2318, %v2315
    %v2355 = vpack.c.b16 %v2319, %v2316
    %v2356 = vpack.c.b16 %v2323, %v2320
    %v2357 = vpack.c.b16 %v2324, %v2321
    %v2358 = vpack.c.b16 %v2325, %v2322
    %v2359 = vpack.c.b16 %v2329, %v2326
    %v2360 = vpack.c.b16 %v2330, %v2327
    %v2361 = vpack.c.b16 %v2331, %v2328
    %v2362 = vpack.c.b16 %v2335, %v2332
    %v2363 = vpack.c.b16 %v2336, %v2333
    %v2364 = vpack.c.b16 %v2337, %v2334
    %v2365 = vpack.c.b16 %v2341, %v2338
    %v2366 = vpack.c.b16 %v2342, %v2339
    %v2367 = vpack.c.b16 %v2343, %v2340
    %2392 = vmatprep.subr.bf16.mxu0 %v2345
    %2393 = vmatpush1.bf16.msra.mxu0 %v2344
    %2394 = vmatprep.subr.bf16.mxu0 %v2348
    %2395 = vmatpush1.bf16.msra.mxu0 %v2347
    %2396 = vmatprep.subr.bf16.mxu0 %v2351
    %2397 = vmatpush1.bf16.msra.mxu0 %v2350
    %2398 = vmatprep.subr.bf16.mxu0 %v2354
    %2399 = vmatpush1.bf16.msra.mxu0 %v2353
    %2400 = vmatprep.subr.bf16.mxu0 %v2357
    %2401 = vmatpush1.bf16.msra.mxu0 %v2356
    %2402 = vmatprep.subr.bf16.mxu0 %v2360
    %2403 = vmatpush1.bf16.msra.mxu0 %v2359
    %2404 = vmatprep.subr.bf16.mxu0 %v2363
    %2405 = vmatpush1.bf16.msra.mxu0 %v2362
    %2406 = vmatprep.subr.bf16.mxu0 %v2366
    %2407 = vmatpush1.bf16.msra.mxu0 %v2365
    %2408 = vmatprep.subr.bf16.mxu0 0
    %2409 = vmatpush1.bf16.msra.mxu0 0
    %2410 = vmatprep.subr.bf16.mxu0 0
    %2411 = vmatpush1.bf16.msra.mxu0 0
    %2412 = vmatprep.subr.bf16.mxu0 0
    %2413 = vmatpush1.bf16.msra.mxu0 0
    %2414 = vmatprep.subr.bf16.mxu0 0
    %2415 = vmatpush1.bf16.msra.mxu0 0
    %2416 = vmatprep.subr.bf16.mxu0 0
    %2417 = vmatpush1.bf16.msra.mxu0 0
    %2418 = vmatprep.subr.bf16.mxu0 0
    %2419 = vmatpush1.bf16.msra.mxu0 0
    %2420 = vmatprep.subr.bf16.mxu0 0
    %2421 = vmatpush1.bf16.msra.mxu0 0
    %2422 = vmatprep.subr.bf16.mxu0 0
    %2423 = vmatpush1.bf16.msra.mxu0 0
    %2424 = vmatprep.mubr.bf16.mxu0 0
    %2425 = vmatmul.mubr.bf16.gmra.mrb[0].mxu0 %v2212
    %v2426 = vpop.f32.mrb[0].mxu0
    %v2427 = vadd.f32 %v2252, %v2426
    %v2428 = vpop.f32.mrb[0].mxu0
    %v2429 = vadd.f32 %v2256, %v2428
    %v2430 = vpop.f32.mrb[0].mxu0
    %v2431 = vadd.f32 %v2252, %v2430
    %v2432 = vpop.f32.mrb[0].mxu0
    %v2433 = vadd.f32 %v2256, %v2432
    %2434 = vdwg.mxu0
    %2435 = vmatprep.subr.bf16.mxu0 0
    %2436 = vmatpush1.bf16.msra.mxu0 %v2346
    %2437 = vmatprep.subr.bf16.mxu0 0
    %2438 = vmatpush1.bf16.msra.mxu0 %v2349
    %2439 = vmatprep.subr.bf16.mxu0 0
    %2440 = vmatpush1.bf16.msra.mxu0 %v2352
    %2441 = vmatprep.subr.bf16.mxu0 0
    %2442 = vmatpush1.bf16.msra.mxu0 %v2355
    %2443 = vmatprep.subr.bf16.mxu0 0
    %2444 = vmatpush1.bf16.msra.mxu0 %v2358
    %2445 = vmatprep.subr.bf16.mxu0 0
    %2446 = vmatpush1.bf16.msra.mxu0 %v2361
    %2447 = vmatprep.subr.bf16.mxu0 0
    %2448 = vmatpush1.bf16.msra.mxu0 %v2364
    %2449 = vmatprep.subr.bf16.mxu0 0
    %2450 = vmatpush1.bf16.msra.mxu0 %v2367
    %2451 = vmatprep.subr.bf16.mxu0 0
    %2452 = vmatpush1.bf16.msra.mxu0 0
    %2453 = vmatprep.subr.bf16.mxu0 0
    %2454 = vmatpush1.bf16.msra.mxu0 0
    %2455 = vmatprep.subr.bf16.mxu0 0
    %2456 = vmatpush1.bf16.msra.mxu0 0
    %2457 = vmatprep.subr.bf16.mxu0 0
    %2458 = vmatpush1.bf16.msra.mxu0 0
    %2459 = vmatprep.subr.bf16.mxu0 0
    %2460 = vmatpush1.bf16.msra.mxu0 0
    %2461 = vmatprep.subr.bf16.mxu0 0
    %2462 = vmatpush1.bf16.msra.mxu0 0
    %2463 = vmatprep.subr.bf16.mxu0 0
    %2464 = vmatpush1.bf16.msra.mxu0 0
    %2465 = vmatprep.subr.bf16.mxu0 0
    %2466 = vmatpush1.bf16.msra.mxu0 0
    %2467 = vmatprep.mubr.bf16.mxu0 0
    %2468 = vmatmul.mubr.bf16.gmra.mrb[0].mxu0 %v2212
    %v2469 = vpop.f32.mrb[0].mxu0
    %v2470 = vadd.f32 %v2260, %v2469
    %v2471 = vpop.f32.mrb[0].mxu0
    %v2472 = vpop.f32.mrb[0].mxu0
    %v2473 = vadd.f32 %v2260, %v2472
    %v2474 = vpop.f32.mrb[0].mxu0
    %2475 = vdwg.mxu0
    %v2476 = vpack.c.bf16 %v2431, %v2427
    %v2477 = vpack.c.bf16 %v2433, %v2429
    %v2478 = vpack.c.bf16 %v2473, %v2470
    %v2479 = vmul.bf16 %v2477, %v618
    %v2480 = vmul.bf16 %v2477, %v619
    %v2481 = vmul.bf16 %v2477, %v620
    %v2482 = vmul.bf16 %v2477, %v621
    %v2483 = vmul.bf16 %v2477, %v622
    %v2484 = vmul.bf16 %v2477, %v623
    %v2485 = vmul.bf16 %v2477, %v624
    %v2486 = vmul.bf16 %v2477, %v625
    %v2487 = vmul.bf16 %v2478, %v618
    %v2488 = vmul.bf16 %v2478, %v619
    %v2489 = vmul.bf16 %v2478, %v620
    %v2490 = vmul.bf16 %v2478, %v621
    %v2491 = vmul.bf16 %v2478, %v622
    %v2492 = vmul.bf16 %v2478, %v623
    %v2493 = vmul.bf16 %v2478, %v624
    %v2494 = vmul.bf16 %v2478, %v625
    %2495 = vmatprep.subr.bf16.mxu0 0
    %2496 = vmatpush1.bf16.xpose.msra.mxu0 %v2479
    %2497 = vmatprep.subr.bf16.mxu0 0
    %2498 = vmatpush1.bf16.xpose.msra.mxu0 %v2480
    %2499 = vmatprep.subr.bf16.mxu0 0
    %2500 = vmatpush1.bf16.xpose.msra.mxu0 %v2481
    %2501 = vmatprep.subr.bf16.mxu0 0
    %2502 = vmatpush1.bf16.xpose.msra.mxu0 %v2482
    %2503 = vmatprep.subr.bf16.mxu0 0
    %2504 = vmatpush1.bf16.xpose.msra.mxu0 %v2483
    %2505 = vmatprep.subr.bf16.mxu0 0
    %2506 = vmatpush1.bf16.xpose.msra.mxu0 %v2484
    %2507 = vmatprep.subr.bf16.mxu0 0
    %2508 = vmatpush1.bf16.xpose.msra.mxu0 %v2485
    %2509 = vmatprep.subr.bf16.mxu0 0
    %2510 = vmatpush1.bf16.xpose.msra.mxu0 %v2486
    %2511 = vmatprep.subr.bf16.mxu0 0
    %2512 = vmatpush1.bf16.xpose.msra.mxu0 0
    %2513 = vmatprep.subr.bf16.mxu0 0
    %2514 = vmatpush1.bf16.xpose.msra.mxu0 0
    %2515 = vmatprep.subr.bf16.mxu0 0
    %2516 = vmatpush1.bf16.xpose.msra.mxu0 0
    %2517 = vmatprep.subr.bf16.mxu0 0
    %2518 = vmatpush1.bf16.xpose.msra.mxu0 0
    %2519 = vmatprep.subr.bf16.mxu0 0
    %2520 = vmatpush1.bf16.xpose.msra.mxu0 0
    %2521 = vmatprep.subr.bf16.mxu0 0
    %2522 = vmatpush1.bf16.xpose.msra.mxu0 0
    %2523 = vmatprep.subr.bf16.mxu0 0
    %2524 = vmatpush1.bf16.xpose.msra.mxu0 0
    %2525 = vmatprep.subr.bf16.mxu0 0
    %2526 = vmatpush1.bf16.xpose.msra.mxu0 0
    %2527 = vmatprep.mubr.bf16.mxu0 0
    %2528 = vmatmul.mubr.bf16.gmra.mrb[0].mxu0 %v2476
    %v2529 = vpop.f32.mrb[0].mxu0
    %v2530 = vadd.f32 0.0, %v2529
    %v2531 = vpop.f32.mrb[0].mxu0
    %v2532 = vpop.f32.mrb[0].mxu0
    %v2533 = vadd.f32 0.0, %v2532
    %v2534 = vpop.f32.mrb[0].mxu0
    %2535 = vdwg.mxu0
    %v2536 = vmul.f32 %v2530, 0.25
    %v2537 = vmul.f32 %v2533, 0.25
    %2538 = vmax.xlane.f32.xlu0 %v2536
    %v2539 = vpop.xlane.xlu0 %2538
    %2540 = vmax.xlane.f32.xlu0 %v2537
    %v2541 = vpop.xlane.xlu0 %2540
    %v2542 = vsub.f32 %v2536, %v2539
    %v2543 = vsub.f32 %v2537, %v2541
    %v2544 = vmul.f32 %v2542, 1.442695
    %v2545 = vpow.pop %v2544
    %v2546 = vmul.f32 %v2543, 1.442695
    %v2547 = vpow.pop %v2546
    %v2548 = vmul.f32 %v2545, %v317
    %v2549 = vmul.f32 %v2547, %v318
    %v2550 = vpack.c.bf16 %v2549, %v2548
    %2551 = vmatprep.subr.bf16.mxu0 %v618
    %2552 = vmatpush1.bf16.msra.mxu0 %v2487
    %2553 = vmatprep.subr.bf16.mxu0 %v619
    %2554 = vmatpush1.bf16.msra.mxu0 %v2488
    %2555 = vmatprep.subr.bf16.mxu0 %v620
    %2556 = vmatpush1.bf16.msra.mxu0 %v2489
    %2557 = vmatprep.subr.bf16.mxu0 %v621
    %2558 = vmatpush1.bf16.msra.mxu0 %v2490
    %2559 = vmatprep.subr.bf16.mxu0 %v622
    %2560 = vmatpush1.bf16.msra.mxu0 %v2491
    %2561 = vmatprep.subr.bf16.mxu0 %v623
    %2562 = vmatpush1.bf16.msra.mxu0 %v2492
    %2563 = vmatprep.subr.bf16.mxu0 %v624
    %2564 = vmatpush1.bf16.msra.mxu0 %v2493
    %2565 = vmatprep.subr.bf16.mxu0 %v625
    %2566 = vmatpush1.bf16.msra.mxu0 %v2494
    %2567 = vmatprep.subr.bf16.mxu0 0
    %2568 = vmatpush1.bf16.msra.mxu0 0
    %2569 = vmatprep.subr.bf16.mxu0 0
    %2570 = vmatpush1.bf16.msra.mxu0 0
    %2571 = vmatprep.subr.bf16.mxu0 0
    %2572 = vmatpush1.bf16.msra.mxu0 0
    %2573 = vmatprep.subr.bf16.mxu0 0
    %2574 = vmatpush1.bf16.msra.mxu0 0
    %2575 = vmatprep.subr.bf16.mxu0 0
    %2576 = vmatpush1.bf16.msra.mxu0 0
    %2577 = vmatprep.subr.bf16.mxu0 0
    %2578 = vmatpush1.bf16.msra.mxu0 0
    %2579 = vmatprep.subr.bf16.mxu0 0
    %2580 = vmatpush1.bf16.msra.mxu0 0
    %2581 = vmatprep.subr.bf16.mxu0 0
    %2582 = vmatpush1.bf16.msra.mxu0 0
    %2583 = vmatprep.mubr.bf16.mxu0 0
    %2584 = vmatmul.mubr.bf16.gmra.mrb[0].mxu0 %v2550
    %v2585 = vpop.f32.mrb[0].mxu0
    %v2586 = vadd.f32 0.0, %v2585
    %v2587 = vpop.f32.mrb[0].mxu0
    %v2588 = vadd.f32 0.0, %v2587
    %v2589 = vpop.f32.mrb[0].mxu0
    %v2590 = vadd.f32 0.0, %v2589
    %v2591 = vpop.f32.mrb[0].mxu0
    %v2592 = vadd.f32 0.0, %v2591
    %2593 = vdwg.mxu0
    %v2594 = vrcp.pop %v2588
    %v2595 = vrcp.pop %v2592
    %v2596 = vmul.f32 %v2586, %v2594
    %v2597 = vmul.f32 %v2590, %v2595
    %v2598 = vpack.c.bf16 %v2597, %v2596
    %s2599 = scalar_lea.vmem [#allocation10], 128
    %v2600 = vld [vmem:[%s2599] sm:$0xf]
    %v2601 = vld [vmem:[%s2599 + $0x4] sm:$0xf]
    %v2602 = vld [vmem:[%s2599 + $0x8] sm:$0xf]
    %v2603 = vld [vmem:[%s2599 + $0xc] sm:$0xf]
    %v2604 = vld [vmem:[%s2599 + $0x10] sm:$0xf]
    %v2605 = vld [vmem:[%s2599 + $0x14] sm:$0xf]
    %v2606 = vld [vmem:[%s2599 + $0x18] sm:$0xf]
    %v2607 = vld [vmem:[%s2599 + $0x1c] sm:$0xf]
    %v2608 = vld [vmem:[%s2599 + $0x20] sm:$0xf]
    %v2609 = vld [vmem:[%s2599 + $0x24] sm:$0xf]
    %v2610 = vld [vmem:[%s2599 + $0x28] sm:$0xf]
    %v2611 = vld [vmem:[%s2599 + $0x2c] sm:$0xf]
    %v2612 = vld [vmem:[%s2599 + $0x30] sm:$0xf]
    %v2613 = vld [vmem:[%s2599 + $0x34] sm:$0xf]
    %v2614 = vld [vmem:[%s2599 + $0x38] sm:$0xf]
    %v2615 = vld [vmem:[%s2599 + $0x3c] sm:$0xf]
    %s2616 = scalar_lea.vmem [#allocation11], 2
    %v2617 = vld [vmem:[%s2616] sm:$0x1]
    %v2619 = vlaneseq
    %v2620 = vshrl.u32 %v2619, 7
    %v2621 = vsub.s32 0, %v2620
    %v2622 = vrot.slane %v2617, %v2621
    %v2640 = vunpack.c.l.b16 %v2600
    %v2641 = vunpack.c.l.b16 %v2601
    %v2642 = vunpack.c.l.b16 %v2602
    %v2643 = vunpack.c.l.b16 %v2603
    %v2644 = vunpack.c.l.b16 %v2604
    %v2645 = vunpack.c.l.b16 %v2605
    %v2646 = vunpack.c.l.b16 %v2606
    %v2647 = vunpack.c.l.b16 %v2607
    %v2648 = vunpack.c.l.b16 %v2608
    %v2649 = vunpack.c.l.b16 %v2609
    %v2650 = vunpack.c.l.b16 %v2610
    %v2651 = vunpack.c.l.b16 %v2611
    %v2652 = vunpack.c.l.b16 %v2612
    %v2653 = vunpack.c.l.b16 %v2613
    %v2654 = vunpack.c.l.b16 %v2614
    %v2655 = vunpack.c.l.b16 %v2615
    %v2656 = vpack.c.b16 %v2641, %v2640
    %v2657 = vpack.c.b16 %v2643, %v2642
    %v2658 = vpack.c.b16 %v2645, %v2644
    %v2659 = vpack.c.b16 %v2647, %v2646
    %v2660 = vpack.c.b16 %v2649, %v2648
    %v2661 = vpack.c.b16 %v2651, %v2650
    %v2662 = vpack.c.b16 %v2653, %v2652
    %v2663 = vpack.c.b16 %v2655, %v2654
    %2672 = vmatprep.subr.bf16.mxu0 0
    %2673 = vmatpush1.bf16.msra.mxu0 %v2656
    %2674 = vmatprep.subr.bf16.mxu0 0
    %2675 = vmatpush1.bf16.msra.mxu0 %v2657
    %2676 = vmatprep.subr.bf16.mxu0 0
    %2677 = vmatpush1.bf16.msra.mxu0 %v2658
    %2678 = vmatprep.subr.bf16.mxu0 0
    %2679 = vmatpush1.bf16.msra.mxu0 %v2659
    %2680 = vmatprep.subr.bf16.mxu0 0
    %2681 = vmatpush1.bf16.msra.mxu0 %v2660
    %2682 = vmatprep.subr.bf16.mxu0 0
    %2683 = vmatpush1.bf16.msra.mxu0 %v2661
    %2684 = vmatprep.subr.bf16.mxu0 0
    %2685 = vmatpush1.bf16.msra.mxu0 %v2662
    %2686 = vmatprep.subr.bf16.mxu0 0
    %2687 = vmatpush1.bf16.msra.mxu0 %v2663
    %2688 = vmatprep.subr.bf16.mxu0 0
    %2689 = vmatpush1.bf16.msra.mxu0 0
    %2690 = vmatprep.subr.bf16.mxu0 0
    %2691 = vmatpush1.bf16.msra.mxu0 0
    %2692 = vmatprep.subr.bf16.mxu0 0
    %2693 = vmatpush1.bf16.msra.mxu0 0
    %2694 = vmatprep.subr.bf16.mxu0 0
    %2695 = vmatpush1.bf16.msra.mxu0 0
    %2696 = vmatprep.subr.bf16.mxu0 0
    %2697 = vmatpush1.bf16.msra.mxu0 0
    %2698 = vmatprep.subr.bf16.mxu0 0
    %2699 = vmatpush1.bf16.msra.mxu0 0
    %2700 = vmatprep.subr.bf16.mxu0 0
    %2701 = vmatpush1.bf16.msra.mxu0 0
    %2702 = vmatprep.subr.bf16.mxu0 0
    %2703 = vmatpush1.bf16.msra.mxu0 0
    %2704 = vmatprep.mubr.bf16.mxu0 0
    %2705 = vmatmul.mubr.bf16.gmra.mrb[0].mxu0 %v2598
    %v2706 = vpop.f32.mrb[0].mxu0
    %v2707 = vadd.f32 %v2622, %v2706
    %v2708 = vpop.f32.mrb[0].mxu0
    %v2709 = vpop.f32.mrb[0].mxu0
    %v2710 = vadd.f32 %v2622, %v2709
    %v2711 = vpop.f32.mrb[0].mxu0
    %2712 = vdwg.mxu0
    %v2713 = vadd.f32 %v2210, %v2707
    %v2714 = vadd.f32 %v2211, %v2710
    %s2715 = scalar_lea.vmem [#allocation13], 2
    %v2716 = vld [vmem:[%s2715] sm:$0x1]
    %s2717 = scalar_lea.vmem [#allocation14], 2
    %v2718 = vld [vmem:[%s2717] sm:$0x1]
    %2719 = vadd.xlane.f32.xlu0 %v2713
    %v2720 = vpop.xlane.xlu0 %2719
    %2721 = vadd.xlane.f32.xlu0 %v2714
    %v2722 = vpop.xlane.xlu0 %2721
    %v2723 = vmul.f32 %v2720, %v874
    %v2724 = vmul.f32 %v2722, %v874
    %v2725 = vsub.f32 %v2713, %v2723
    %v2726 = vsub.f32 %v2714, %v2724
    %v2727 = vmul.f32 %v2725, %v2725
    %v2728 = vmul.f32 %v2726, %v2726
    %2729 = vadd.xlane.f32.xlu0 %v2727
    %v2730 = vpop.xlane.xlu0 %2729
    %2731 = vadd.xlane.f32.xlu0 %v2728
    %v2732 = vpop.xlane.xlu0 %2731
    %v2733 = vmul.f32 %v2730, %v874
    %v2734 = vmul.f32 %v2732, %v874
    %v2735 = vadd.f32 %v2733, 1e-05
    %v2736 = vadd.f32 %v2734, 1e-05
    %v2737 = vrsqrt.pop %v2735
    %v2738 = vrsqrt.pop %v2736
    %v2739 = vmul.f32 %v2725, %v2737
    %v2740 = vmul.f32 %v2726, %v2738
    %v2742 = vlaneseq
    %v2743 = vshrl.u32 %v2742, 7
    %v2744 = vsub.s32 0, %v2743
    %v2745 = vrot.slane %v2716, %v2744
    %v2747 = vmul.f32 %v2739, %v2745
    %v2748 = vmul.f32 %v2740, %v2745
    %v2750 = vlaneseq
    %v2751 = vshrl.u32 %v2750, 7
    %v2752 = vsub.s32 0, %v2751
    %v2753 = vrot.slane %v2718, %v2752
    %v2755 = vadd.f32 %v2747, %v2753
    %v2756 = vadd.f32 %v2748, %v2753
    %v2757 = vpack.c.bf16 %v2756, %v2755
    %s2758 = scalar_lea.vmem [#allocation16], 256
    %v2759 = vld [vmem:[%s2758] sm:$0xff]
    %v2760 = vld [vmem:[%s2758 + $0x8] sm:$0xff]
    %v2761 = vld [vmem:[%s2758 + $0x10] sm:$0xff]
    %v2762 = vld [vmem:[%s2758 + $0x18] sm:$0xff]
    %v2763 = vld [vmem:[%s2758 + $0x20] sm:$0xff]
    %v2764 = vld [vmem:[%s2758 + $0x28] sm:$0xff]
    %v2765 = vld [vmem:[%s2758 + $0x30] sm:$0xff]
    %v2766 = vld [vmem:[%s2758 + $0x38] sm:$0xff]
    %v2767 = vld [vmem:[%s2758 + $0x40] sm:$0xff]
    %v2768 = vld [vmem:[%s2758 + $0x48] sm:$0xff]
    %v2769 = vld [vmem:[%s2758 + $0x50] sm:$0xff]
    %v2770 = vld [vmem:[%s2758 + $0x58] sm:$0xff]
    %v2771 = vld [vmem:[%s2758 + $0x60] sm:$0xff]
    %v2772 = vld [vmem:[%s2758 + $0x68] sm:$0xff]
    %v2773 = vld [vmem:[%s2758 + $0x70] sm:$0xff]
    %v2774 = vld [vmem:[%s2758 + $0x78] sm:$0xff]
    %s2775 = scalar_lea.vmem %s11, 4
    %v2776 = vld [vmem:[%s2775] sm:$0x3]
    %v2778 = vlaneseq
    %v2779 = vshrl.u32 %v2778, 7
    %v2780 = vsub.s32 0, %v2779
    %v2781 = vrot.slane %v2776, %v2780
    %v2782 = vlaneseq
    %v2783 = vshrl.u32 %v2782, 7
    %v2784 = vsub.s32 1, %v2783
    %v2785 = vrot.slane %v2776, %v2784
    %v2804 = vunpack.c.l.b16 %v2759
    %v2805 = vunpack.c.h.b16 %v2759
    %v2806 = vunpack.c.l.b16 %v2760
    %v2807 = vunpack.c.h.b16 %v2760
    %v2808 = vunpack.c.l.b16 %v2761
    %v2809 = vunpack.c.h.b16 %v2761
    %v2810 = vunpack.c.l.b16 %v2762
    %v2811 = vunpack.c.h.b16 %v2762
    %v2812 = vunpack.c.l.b16 %v2763
    %v2813 = vunpack.c.h.b16 %v2763
    %v2814 = vunpack.c.l.b16 %v2764
    %v2815 = vunpack.c.h.b16 %v2764
    %v2816 = vunpack.c.l.b16 %v2765
    %v2817 = vunpack.c.h.b16 %v2765
    %v2818 = vunpack.c.l.b16 %v2766
    %v2819 = vunpack.c.h.b16 %v2766
    %v2820 = vunpack.c.l.b16 %v2767
    %v2821 = vunpack.c.h.b16 %v2767
    %v2822 = vunpack.c.l.b16 %v2768
    %v2823 = vunpack.c.h.b16 %v2768
    %v2824 = vunpack.c.l.b16 %v2769
    %v2825 = vunpack.c.h.b16 %v2769
    %v2826 = vunpack.c.l.b16 %v2770
    %v2827 = vunpack.c.h.b16 %v2770
    %v2828 = vunpack.c.l.b16 %v2771
    %v2829 = vunpack.c.h.b16 %v2771
    %v2830 = vunpack.c.l.b16 %v2772
    %v2831 = vunpack.c.h.b16 %v2772
    %v2832 = vunpack.c.l.b16 %v2773
    %v2833 = vunpack.c.h.b16 %v2773
    %v2834 = vunpack.c.l.b16 %v2774
    %v2835 = vunpack.c.h.b16 %v2774
    %v2836 = vpack.c.b16 %v2806, %v2804
    %v2837 = vpack.c.b16 %v2807, %v2805
    %v2838 = vpack.c.b16 %v2810, %v2808
    %v2839 = vpack.c.b16 %v2811, %v2809
    %v2840 = vpack.c.b16 %v2814, %v2812
    %v2841 = vpack.c.b16 %v2815, %v2813
    %v2842 = vpack.c.b16 %v2818, %v2816
    %v2843 = vpack.c.b16 %v2819, %v2817
    %v2844 = vpack.c.b16 %v2822, %v2820
    %v2845 = vpack.c.b16 %v2823, %v2821
    %v2846 = vpack.c.b16 %v2826, %v2824
    %v2847 = vpack.c.b16 %v2827, %v2825
    %v2848 = vpack.c.b16 %v2830, %v2828
    %v2849 = vpack.c.b16 %v2831, %v2829
    %v2850 = vpack.c.b16 %v2834, %v2832
    %v2851 = vpack.c.b16 %v2835, %v2833
    %2868 = vmatprep.subr.bf16.mxu0 %v2837
    %2869 = vmatpush1.bf16.msra.mxu0 %v2836
    %2870 = vmatprep.subr.bf16.mxu0 %v2839
    %2871 = vmatpush1.bf16.msra.mxu0 %v2838
    %2872 = vmatprep.subr.bf16.mxu0 %v2841
    %2873 = vmatpush1.bf16.msra.mxu0 %v2840
    %2874 = vmatprep.subr.bf16.mxu0 %v2843
    %2875 = vmatpush1.bf16.msra.mxu0 %v2842
    %2876 = vmatprep.subr.bf16.mxu0 %v2845
    %2877 = vmatpush1.bf16.msra.mxu0 %v2844
    %2878 = vmatprep.subr.bf16.mxu0 %v2847
    %2879 = vmatpush1.bf16.msra.mxu0 %v2846
    %2880 = vmatprep.subr.bf16.mxu0 %v2849
    %2881 = vmatpush1.bf16.msra.mxu0 %v2848
    %2882 = vmatprep.subr.bf16.mxu0 %v2851
    %2883 = vmatpush1.bf16.msra.mxu0 %v2850
    %2884 = vmatprep.subr.bf16.mxu0 0
    %2885 = vmatpush1.bf16.msra.mxu0 0
    %2886 = vmatprep.subr.bf16.mxu0 0
    %2887 = vmatpush1.bf16.msra.mxu0 0
    %2888 = vmatprep.subr.bf16.mxu0 0
    %2889 = vmatpush1.bf16.msra.mxu0 0
    %2890 = vmatprep.subr.bf16.mxu0 0
    %2891 = vmatpush1.bf16.msra.mxu0 0
    %2892 = vmatprep.subr.bf16.mxu0 0
    %2893 = vmatpush1.bf16.msra.mxu0 0
    %2894 = vmatprep.subr.bf16.mxu0 0
    %2895 = vmatpush1.bf16.msra.mxu0 0
    %2896 = vmatprep.subr.bf16.mxu0 0
    %2897 = vmatpush1.bf16.msra.mxu0 0
    %2898 = vmatprep.subr.bf16.mxu0 0
    %2899 = vmatpush1.bf16.msra.mxu0 0
    %2900 = vmatprep.mubr.bf16.mxu0 0
    %2901 = vmatmul.mubr.bf16.gmra.mrb[0].mxu0 %v2757
    %v2902 = vpop.f32.mrb[0].mxu0
    %v2903 = vadd.f32 %v2781, %v2902
    %v2904 = vpop.f32.mrb[0].mxu0
    %v2905 = vadd.f32 %v2785, %v2904
    %v2906 = vpop.f32.mrb[0].mxu0
    %v2907 = vadd.f32 %v2781, %v2906
    %v2908 = vpop.f32.mrb[0].mxu0
    %v2909 = vadd.f32 %v2785, %v2908
    %2910 = vdwg.mxu0
    %v2911 = vmax.f32 %v2903, 0.0
    %v2912 = vmax.f32 %v2905, 0.0
    %v2913 = vmax.f32 %v2907, 0.0
    %v2914 = vmax.f32 %v2909, 0.0
    %v2915 = vpack.c.bf16 %v2913, %v2911
    %v2916 = vpack.c.bf16 %v2914, %v2912
    %s2917 = scalar_lea.vmem [#allocation17], 256
    %v2918 = vld [vmem:[%s2917] sm:$0xf]
    %v2919 = vld [vmem:[%s2917 + $0x4] sm:$0xf]
    %v2920 = vld [vmem:[%s2917 + $0x8] sm:$0xf]
    %v2921 = vld [vmem:[%s2917 + $0xc] sm:$0xf]
    %v2922 = vld [vmem:[%s2917 + $0x10] sm:$0xf]
    %v2923 = vld [vmem:[%s2917 + $0x14] sm:$0xf]
    %v2924 = vld [vmem:[%s2917 + $0x18] sm:$0xf]
    %v2925 = vld [vmem:[%s2917 + $0x1c] sm:$0xf]
    %v2926 = vld [vmem:[%s2917 + $0x20] sm:$0xf]
    %v2927 = vld [vmem:[%s2917 + $0x24] sm:$0xf]
    %v2928 = vld [vmem:[%s2917 + $0x28] sm:$0xf]
    %v2929 = vld [vmem:[%s2917 + $0x2c] sm:$0xf]
    %v2930 = vld [vmem:[%s2917 + $0x30] sm:$0xf]
    %v2931 = vld [vmem:[%s2917 + $0x34] sm:$0xf]
    %v2932 = vld [vmem:[%s2917 + $0x38] sm:$0xf]
    %v2933 = vld [vmem:[%s2917 + $0x3c] sm:$0xf]
    %v2934 = vld [vmem:[%s2917 + $0x40] sm:$0xf]
    %v2935 = vld [vmem:[%s2917 + $0x44] sm:$0xf]
    %v2936 = vld [vmem:[%s2917 + $0x48] sm:$0xf]
    %v2937 = vld [vmem:[%s2917 + $0x4c] sm:$0xf]
    %v2938 = vld [vmem:[%s2917 + $0x50] sm:$0xf]
    %v2939 = vld [vmem:[%s2917 + $0x54] sm:$0xf]
    %v2940 = vld [vmem:[%s2917 + $0x58] sm:$0xf]
    %v2941 = vld [vmem:[%s2917 + $0x5c] sm:$0xf]
    %v2942 = vld [vmem:[%s2917 + $0x60] sm:$0xf]
    %v2943 = vld [vmem:[%s2917 + $0x64] sm:$0xf]
    %v2944 = vld [vmem:[%s2917 + $0x68] sm:$0xf]
    %v2945 = vld [vmem:[%s2917 + $0x6c] sm:$0xf]
    %v2946 = vld [vmem:[%s2917 + $0x70] sm:$0xf]
    %v2947 = vld [vmem:[%s2917 + $0x74] sm:$0xf]
    %v2948 = vld [vmem:[%s2917 + $0x78] sm:$0xf]
    %v2949 = vld [vmem:[%s2917 + $0x7c] sm:$0xf]
    %s2950 = scalar_lea.vmem [#allocation19], 2
    %v2951 = vld [vmem:[%s2950] sm:$0x1]
    %v2953 = vlaneseq
    %v2954 = vshrl.u32 %v2953, 7
    %v2955 = vsub.s32 0, %v2954
    %v2956 = vrot.slane %v2951, %v2955
    %v2990 = vunpack.c.l.b16 %v2918
    %v2991 = vunpack.c.l.b16 %v2919
    %v2992 = vunpack.c.l.b16 %v2920
    %v2993 = vunpack.c.l.b16 %v2921
    %v2994 = vunpack.c.l.b16 %v2922
    %v2995 = vunpack.c.l.b16 %v2923
    %v2996 = vunpack.c.l.b16 %v2924
    %v2997 = vunpack.c.l.b16 %v2925
    %v2998 = vunpack.c.l.b16 %v2926
    %v2999 = vunpack.c.l.b16 %v2927
    %v3000 = vunpack.c.l.b16 %v2928
    %v3001 = vunpack.c.l.b16 %v2929
    %v3002 = vunpack.c.l.b16 %v2930
    %v3003 = vunpack.c.l.b16 %v2931
    %v3004 = vunpack.c.l.b16 %v2932
    %v3005 = vunpack.c.l.b16 %v2933
    %v3006 = vunpack.c.l.b16 %v2934
    %v3007 = vunpack.c.l.b16 %v2935
    %v3008 = vunpack.c.l.b16 %v2936
    %v3009 = vunpack.c.l.b16 %v2937
    %v3010 = vunpack.c.l.b16 %v2938
    %v3011 = vunpack.c.l.b16 %v2939
    %v3012 = vunpack.c.l.b16 %v2940
    %v3013 = vunpack.c.l.b16 %v2941
    %v3014 = vunpack.c.l.b16 %v2942
    %v3015 = vunpack.c.l.b16 %v2943
    %v3016 = vunpack.c.l.b16 %v2944
    %v3017 = vunpack.c.l.b16 %v2945
    %v3018 = vunpack.c.l.b16 %v2946
    %v3019 = vunpack.c.l.b16 %v2947
    %v3020 = vunpack.c.l.b16 %v2948
    %v3021 = vunpack.c.l.b16 %v2949
    %v3022 = vpack.c.b16 %v2991, %v2990
    %v3023 = vpack.c.b16 %v2993, %v2992
    %v3024 = vpack.c.b16 %v2995, %v2994
    %v3025 = vpack.c.b16 %v2997, %v2996
    %v3026 = vpack.c.b16 %v2999, %v2998
    %v3027 = vpack.c.b16 %v3001, %v3000
    %v3028 = vpack.c.b16 %v3003, %v3002
    %v3029 = vpack.c.b16 %v3005, %v3004
    %v3030 = vpack.c.b16 %v3007, %v3006
    %v3031 = vpack.c.b16 %v3009, %v3008
    %v3032 = vpack.c.b16 %v3011, %v3010
    %v3033 = vpack.c.b16 %v3013, %v3012
    %v3034 = vpack.c.b16 %v3015, %v3014
    %v3035 = vpack.c.b16 %v3017, %v3016
    %v3036 = vpack.c.b16 %v3019, %v3018
    %v3037 = vpack.c.b16 %v3021, %v3020
    %3054 = vmatprep.subr.bf16.mxu0 0
    %3055 = vmatpush1.bf16.msra.mxu0 %v3022
    %3056 = vmatprep.subr.bf16.mxu0 0
    %3057 = vmatpush1.bf16.msra.mxu0 %v3023
    %3058 = vmatprep.subr.bf16.mxu0 0
    %3059 = vmatpush1.bf16.msra.mxu0 %v3024
    %3060 = vmatprep.subr.bf16.mxu0 0
    %3061 = vmatpush1.bf16.msra.mxu0 %v3025
    %3062 = vmatprep.subr.bf16.mxu0 0
    %3063 = vmatpush1.bf16.msra.mxu0 %v3026
    %3064 = vmatprep.subr.bf16.mxu0 0
    %3065 = vmatpush1.bf16.msra.mxu0 %v3027
    %3066 = vmatprep.subr.bf16.mxu0 0
    %3067 = vmatpush1.bf16.msra.mxu0 %v3028
    %3068 = vmatprep.subr.bf16.mxu0 0
    %3069 = vmatpush1.bf16.msra.mxu0 %v3029
    %3070 = vmatprep.subr.bf16.mxu0 0
    %3071 = vmatpush1.bf16.msra.mxu0 %v3030
    %3072 = vmatprep.subr.bf16.mxu0 0
    %3073 = vmatpush1.bf16.msra.mxu0 %v3031
    %3074 = vmatprep.subr.bf16.mxu0 0
    %3075 = vmatpush1.bf16.msra.mxu0 %v3032
    %3076 = vmatprep.subr.bf16.mxu0 0
    %3077 = vmatpush1.bf16.msra.mxu0 %v3033
    %3078 = vmatprep.subr.bf16.mxu0 0
    %3079 = vmatpush1.bf16.msra.mxu0 %v3034
    %3080 = vmatprep.subr.bf16.mxu0 0
    %3081 = vmatpush1.bf16.msra.mxu0 %v3035
    %3082 = vmatprep.subr.bf16.mxu0 0
    %3083 = vmatpush1.bf16.msra.mxu0 %v3036
    %3084 = vmatprep.subr.bf16.mxu0 0
    %3085 = vmatpush1.bf16.msra.mxu0 %v3037
    %3086 = vmatprep.mubr.bf16.mxu0 %v2916
    %3087 = vmatmul.mubr.bf16.gmra.mrb[0].mxu0 %v2915
    %v3088 = vpop.f32.mrb[0].mxu0
    %v3089 = vadd.f32 %v2956, %v3088
    %v3090 = vpop.f32.mrb[0].mxu0
    %v3091 = vpop.f32.mrb[0].mxu0
    %v3092 = vadd.f32 %v2956, %v3091
    %v3093 = vpop.f32.mrb[0].mxu0
    %3094 = vdwg.mxu0
    %v3095 = vadd.f32 %v2755, %v3089
    %v3096 = vadd.f32 %v2756, %v3092
    %s3097 = scalar_lea.vmem [#allocation20], 2
    %v3098 = vld [vmem:[%s3097] sm:$0x1]
    %s3099 = scalar_lea.vmem [#allocation22], 2
    %v3100 = vld [vmem:[%s3099] sm:$0x1]
    %3101 = vadd.xlane.f32.xlu0 %v3095
    %v3102 = vpop.xlane.xlu0 %3101
    %3103 = vadd.xlane.f32.xlu0 %v3096
    %v3104 = vpop.xlane.xlu0 %3103
    %v3105 = vmul.f32 %v3102, %v874
    %v3106 = vmul.f32 %v3104, %v874
    %v3107 = vsub.f32 %v3095, %v3105
    %v3108 = vsub.f32 %v3096, %v3106
    %v3109 = vmul.f32 %v3107, %v3107
    %v3110 = vmul.f32 %v3108, %v3108
    %3111 = vadd.xlane.f32.xlu0 %v3109
    %v3112 = vpop.xlane.xlu0 %3111
    %3113 = vadd.xlane.f32.xlu0 %v3110
    %v3114 = vpop.xlane.xlu0 %3113
    %v3115 = vmul.f32 %v3112, %v874
    %v3116 = vmul.f32 %v3114, %v874
    %v3117 = vadd.f32 %v3115, 1e-05
    %v3118 = vadd.f32 %v3116, 1e-05
    %v3119 = vrsqrt.pop %v3117
    %v3120 = vrsqrt.pop %v3118
    %v3121 = vmul.f32 %v3107, %v3119
    %v3122 = vmul.f32 %v3108, %v3120
    %v3124 = vlaneseq
    %v3125 = vshrl.u32 %v3124, 7
    %v3126 = vsub.s32 0, %v3125
    %v3127 = vrot.slane %v3098, %v3126
    %v3129 = vmul.f32 %v3121, %v3127
    %v3130 = vmul.f32 %v3122, %v3127
    %v3132 = vlaneseq
    %v3133 = vshrl.u32 %v3132, 7
    %v3134 = vsub.s32 0, %v3133
    %v3135 = vrot.slane %v3100, %v3134
    %v3137 = vadd.f32 %v3129, %v3135
    %v3138 = vadd.f32 %v3130, %v3135
    %v3139 = vpack.c.bf16 %v3138, %v3137
    %s3140 = scalar_lea.vmem [#allocation7], 576
    %v3141 = vld [vmem:[%s3140] sm:$0xff]
    %v3142 = vld [vmem:[%s3140 + $0x8] sm:$0xf]
    %v3143 = vld [vmem:[%s3140 + $0xc] sm:$0xff]
    %v3144 = vld [vmem:[%s3140 + $0x14] sm:$0xf]
    %v3145 = vld [vmem:[%s3140 + $0x18] sm:$0xff]
    %v3146 = vld [vmem:[%s3140 + $0x20] sm:$0xf]
    %v3147 = vld [vmem:[%s3140 + $0x24] sm:$0xff]
    %v3148 = vld [vmem:[%s3140 + $0x2c] sm:$0xf]
    %v3149 = vld [vmem:[%s3140 + $0x30] sm:$0xff]
    %v3150 = vld [vmem:[%s3140 + $0x38] sm:$0xf]
    %v3151 = vld [vmem:[%s3140 + $0x3c] sm:$0xff]
    %v3152 = vld [vmem:[%s3140 + $0x44] sm:$0xf]
    %v3153 = vld [vmem:[%s3140 + $0x48] sm:$0xff]
    %v3154 = vld [vmem:[%s3140 + $0x50] sm:$0xf]
    %v3155 = vld [vmem:[%s3140 + $0x54] sm:$0xff]
    %v3156 = vld [vmem:[%s3140 + $0x5c] sm:$0xf]
    %v3157 = vld [vmem:[%s3140 + $0x60] sm:$0xff]
    %v3158 = vld [vmem:[%s3140 + $0x68] sm:$0xf]
    %v3159 = vld [vmem:[%s3140 + $0x6c] sm:$0xff]
    %v3160 = vld [vmem:[%s3140 + $0x74] sm:$0xf]
    %v3161 = vld [vmem:[%s3140 + $0x78] sm:$0xff]
    %v3162 = vld [vmem:[%s3140 + $0x80] sm:$0xf]
    %v3163 = vld [vmem:[%s3140 + $0x84] sm:$0xff]
    %v3164 = vld [vmem:[%s3140 + $0x8c] sm:$0xf]
    %v3165 = vld [vmem:[%s3140 + $0x90] sm:$0xff]
    %v3166 = vld [vmem:[%s3140 + $0x98] sm:$0xf]
    %v3167 = vld [vmem:[%s3140 + $0x9c] sm:$0xff]
    %v3168 = vld [vmem:[%s3140 + $0xa4] sm:$0xf]
    %v3169 = vld [vmem:[%s3140 + $0xa8] sm:$0xff]
    %v3170 = vld [vmem:[%s3140 + $0xb0] sm:$0xf]
    %v3171 = vld [vmem:[%s3140 + $0xb4] sm:$0xff]
    %v3172 = vld [vmem:[%s3140 + $0xbc] sm:$0xf]
    %s3173 = scalar_lea.vmem [#allocation8], 9
    %v3174 = vld [vmem:[%s3173] sm:$0x7]
    %v3176 = vlaneseq
    %v3177 = vshrl.u32 %v3176, 7
    %v3178 = vsub.s32 0, %v3177
    %v3179 = vrot.slane %v3174, %v3178
    %v3180 = vlaneseq
    %v3181 = vshrl.u32 %v3180, 7
    %v3182 = vsub.s32 1, %v3181
    %v3183 = vrot.slane %v3174, %v3182
    %v3184 = vlaneseq
    %v3185 = vshrl.u32 %v3184, 7
    %v3186 = vsub.s32 2, %v3185
    %v3187 = vrot.slane %v3174, %v3186
    %v3223 = vunpack.c.l.b16 %v3141
    %v3224 = vunpack.c.h.b16 %v3141
    %v3225 = vunpack.c.l.b16 %v3142
    %v3226 = vunpack.c.l.b16 %v3143
    %v3227 = vunpack.c.h.b16 %v3143
    %v3228 = vunpack.c.l.b16 %v3144
    %v3229 = vunpack.c.l.b16 %v3145
    %v3230 = vunpack.c.h.b16 %v3145
    %v3231 = vunpack.c.l.b16 %v3146
    %v3232 = vunpack.c.l.b16 %v3147
    %v3233 = vunpack.c.h.b16 %v3147
    %v3234 = vunpack.c.l.b16 %v3148
    %v3235 = vunpack.c.l.b16 %v3149
    %v3236 = vunpack.c.h.b16 %v3149
    %v3237 = vunpack.c.l.b16 %v3150
    %v3238 = vunpack.c.l.b16 %v3151
    %v3239 = vunpack.c.h.b16 %v3151
    %v3240 = vunpack.c.l.b16 %v3152
    %v3241 = vunpack.c.l.b16 %v3153
    %v3242 = vunpack.c.h.b16 %v3153
    %v3243 = vunpack.c.l.b16 %v3154
    %v3244 = vunpack.c.l.b16 %v3155
    %v3245 = vunpack.c.h.b16 %v3155
    %v3246 = vunpack.c.l.b16 %v3156
    %v3247 = vunpack.c.l.b16 %v3157
    %v3248 = vunpack.c.h.b16 %v3157
    %v3249 = vunpack.c.l.b16 %v3158
    %v3250 = vunpack.c.l.b16 %v3159
    %v3251 = vunpack.c.h.b16 %v3159
    %v3252 = vunpack.c.l.b16 %v3160
    %v3253 = vunpack.c.l.b16 %v3161
    %v3254 = vunpack.c.h.b16 %v3161
    %v3255 = vunpack.c.l.b16 %v3162
    %v3256 = vunpack.c.l.b16 %v3163
    %v3257 = vunpack.c.h.b16 %v3163
    %v3258 = vunpack.c.l.b16 %v3164
    %v3259 = vunpack.c.l.b16 %v3165
    %v3260 = vunpack.c.h.b16 %v3165
    %v3261 = vunpack.c.l.b16 %v3166
    %v3262 = vunpack.c.l.b16 %v3167
    %v3263 = vunpack.c.h.b16 %v3167
    %v3264 = vunpack.c.l.b16 %v3168
    %v3265 = vunpack.c.l.b16 %v3169
    %v3266 = vunpack.c.h.b16 %v3169
    %v3267 = vunpack.c.l.b16 %v3170
    %v3268 = vunpack.c.l.b16 %v3171
    %v3269 = vunpack.c.h.b16 %v3171
    %v3270 = vunpack.c.l.b16 %v3172
    %v3271 = vpack.c.b16 %v3226, %v3223
    %v3272 = vpack.c.b16 %v3227, %v3224
    %v3273 = vpack.c.b16 %v3228, %v3225
    %v3274 = vpack.c.b16 %v3232, %v3229
    %v3275 = vpack.c.b16 %v3233, %v3230
    %v3276 = vpack.c.b16 %v3234, %v3231
    %v3277 = vpack.c.b16 %v3238, %v3235
    %v3278 = vpack.c.b16 %v3239, %v3236
    %v3279 = vpack.c.b16 %v3240, %v3237
    %v3280 = vpack.c.b16 %v3244, %v3241
    %v3281 = vpack.c.b16 %v3245, %v3242
    %v3282 = vpack.c.b16 %v3246, %v3243
    %v3283 = vpack.c.b16 %v3250, %v3247
    %v3284 = vpack.c.b16 %v3251, %v3248
    %v3285 = vpack.c.b16 %v3252, %v3249
    %v3286 = vpack.c.b16 %v3256, %v3253
    %v3287 = vpack.c.b16 %v3257, %v3254
    %v3288 = vpack.c.b16 %v3258, %v3255
    %v3289 = vpack.c.b16 %v3262, %v3259
    %v3290 = vpack.c.b16 %v3263, %v3260
    %v3291 = vpack.c.b16 %v3264, %v3261
    %v3292 = vpack.c.b16 %v3268, %v3265
    %v3293 = vpack.c.b16 %v3269, %v3266
    %v3294 = vpack.c.b16 %v3270, %v3267
    %3319 = vmatprep.subr.bf16.mxu0 %v3272
    %3320 = vmatpush1.bf16.msra.mxu0 %v3271
    %3321 = vmatprep.subr.bf16.mxu0 %v3275
    %3322 = vmatpush1.bf16.msra.mxu0 %v3274
    %3323 = vmatprep.subr.bf16.mxu0 %v3278
    %3324 = vmatpush1.bf16.msra.mxu0 %v3277
    %3325 = vmatprep.subr.bf16.mxu0 %v3281
    %3326 = vmatpush1.bf16.msra.mxu0 %v3280
    %3327 = vmatprep.subr.bf16.mxu0 %v3284
    %3328 = vmatpush1.bf16.msra.mxu0 %v3283
    %3329 = vmatprep.subr.bf16.mxu0 %v3287
    %3330 = vmatpush1.bf16.msra.mxu0 %v3286
    %3331 = vmatprep.subr.bf16.mxu0 %v3290
    %3332 = vmatpush1.bf16.msra.mxu0 %v3289
    %3333 = vmatprep.subr.bf16.mxu0 %v3293
    %3334 = vmatpush1.bf16.msra.mxu0 %v3292
    %3335 = vmatprep.subr.bf16.mxu0 0
    %3336 = vmatpush1.bf16.msra.mxu0 0
    %3337 = vmatprep.subr.bf16.mxu0 0
    %3338 = vmatpush1.bf16.msra.mxu0 0
    %3339 = vmatprep.subr.bf16.mxu0 0
    %3340 = vmatpush1.bf16.msra.mxu0 0
    %3341 = vmatprep.subr.bf16.mxu0 0
    %3342 = vmatpush1.bf16.msra.mxu0 0
    %3343 = vmatprep.subr.bf16.mxu0 0
    %3344 = vmatpush1.bf16.msra.mxu0 0
    %3345 = vmatprep.subr.bf16.mxu0 0
    %3346 = vmatpush1.bf16.msra.mxu0 0
    %3347 = vmatprep.subr.bf16.mxu0 0
    %3348 = vmatpush1.bf16.msra.mxu0 0
    %3349 = vmatprep.subr.bf16.mxu0 0
    %3350 = vmatpush1.bf16.msra.mxu0 0
    %3351 = vmatprep.mubr.bf16.mxu0 0
    %3352 = vmatmul.mubr.bf16.gmra.mrb[0].mxu0 %v3139
    %v3353 = vpop.f32.mrb[0].mxu0
    %v3354 = vadd.f32 %v3179, %v3353
    %v3355 = vpop.f32.mrb[0].mxu0
    %v3356 = vadd.f32 %v3183, %v3355
    %v3357 = vpop.f32.mrb[0].mxu0
    %v3358 = vadd.f32 %v3179, %v3357
    %v3359 = vpop.f32.mrb[0].mxu0
    %v3360 = vadd.f32 %v3183, %v3359
    %3361 = vdwg.mxu0
    %3362 = vmatprep.subr.bf16.mxu0 0
    %3363 = vmatpush1.bf16.msra.mxu0 %v3273
    %3364 = vmatprep.subr.bf16.mxu0 0
    %3365 = vmatpush1.bf16.msra.mxu0 %v3276
    %3366 = vmatprep.subr.bf16.mxu0 0
    %3367 = vmatpush1.bf16.msra.mxu0 %v3279
    %3368 = vmatprep.subr.bf16.mxu0 0
    %3369 = vmatpush1.bf16.msra.mxu0 %v3282
    %3370 = vmatprep.subr.bf16.mxu0 0
    %3371 = vmatpush1.bf16.msra.mxu0 %v3285
    %3372 = vmatprep.subr.bf16.mxu0 0
    %3373 = vmatpush1.bf16.msra.mxu0 %v3288
    %3374 = vmatprep.subr.bf16.mxu0 0
    %3375 = vmatpush1.bf16.msra.mxu0 %v3291
    %3376 = vmatprep.subr.bf16.mxu0 0
    %3377 = vmatpush1.bf16.msra.mxu0 %v3294
    %3378 = vmatprep.subr.bf16.mxu0 0
    %3379 = vmatpush1.bf16.msra.mxu0 0
    %3380 = vmatprep.subr.bf16.mxu0 0
    %3381 = vmatpush1.bf16.msra.mxu0 0
    %3382 = vmatprep.subr.bf16.mxu0 0
    %3383 = vmatpush1.bf16.msra.mxu0 0
    %3384 = vmatprep.subr.bf16.mxu0 0
    %3385 = vmatpush1.bf16.msra.mxu0 0
    %3386 = vmatprep.subr.bf16.mxu0 0
    %3387 = vmatpush1.bf16.msra.mxu0 0
    %3388 = vmatprep.subr.bf16.mxu0 0
    %3389 = vmatpush1.bf16.msra.mxu0 0
    %3390 = vmatprep.subr.bf16.mxu0 0
    %3391 = vmatpush1.bf16.msra.mxu0 0
    %3392 = vmatprep.subr.bf16.mxu0 0
    %3393 = vmatpush1.bf16.msra.mxu0 0
    %3394 = vmatprep.mubr.bf16.mxu0 0
    %3395 = vmatmul.mubr.bf16.gmra.mrb[0].mxu0 %v3139
    %v3396 = vpop.f32.mrb[0].mxu0
    %v3397 = vadd.f32 %v3187, %v3396
    %v3398 = vpop.f32.mrb[0].mxu0
    %v3399 = vpop.f32.mrb[0].mxu0
    %v3400 = vadd.f32 %v3187, %v3399
    %v3401 = vpop.f32.mrb[0].mxu0
    %3402 = vdwg.mxu0
    %v3403 = vpack.c.bf16 %v3358, %v3354
    %v3404 = vpack.c.bf16 %v3360, %v3356
    %v3405 = vpack.c.bf16 %v3400, %v3397
    %v3406 = vmul.bf16 %v3404, %v618
    %v3407 = vmul.bf16 %v3404, %v619
    %v3408 = vmul.bf16 %v3404, %v620
    %v3409 = vmul.bf16 %v3404, %v621
    %v3410 = vmul.bf16 %v3404, %v622
    %v3411 = vmul.bf16 %v3404, %v623
    %v3412 = vmul.bf16 %v3404, %v624
    %v3413 = vmul.bf16 %v3404, %v625
    %v3414 = vmul.bf16 %v3405, %v618
    %v3415 = vmul.bf16 %v3405, %v619
    %v3416 = vmul.bf16 %v3405, %v620
    %v3417 = vmul.bf16 %v3405, %v621
    %v3418 = vmul.bf16 %v3405, %v622
    %v3419 = vmul.bf16 %v3405, %v623
    %v3420 = vmul.bf16 %v3405, %v624
    %v3421 = vmul.bf16 %v3405, %v625
    %3422 = vmatprep.subr.bf16.mxu0 0
    %3423 = vmatpush1.bf16.xpose.msra.mxu0 %v3406
    %3424 = vmatprep.subr.bf16.mxu0 0
    %3425 = vmatpush1.bf16.xpose.msra.mxu0 %v3407
    %3426 = vmatprep.subr.bf16.mxu0 0
    %3427 = vmatpush1.bf16.xpose.msra.mxu0 %v3408
    %3428 = vmatprep.subr.bf16.mxu0 0
    %3429 = vmatpush1.bf16.xpose.msra.mxu0 %v3409
    %3430 = vmatprep.subr.bf16.mxu0 0
    %3431 = vmatpush1.bf16.xpose.msra.mxu0 %v3410
    %3432 = vmatprep.subr.bf16.mxu0 0
    %3433 = vmatpush1.bf16.xpose.msra.mxu0 %v3411
    %3434 = vmatprep.subr.bf16.mxu0 0
    %3435 = vmatpush1.bf16.xpose.msra.mxu0 %v3412
    %3436 = vmatprep.subr.bf16.mxu0 0
    %3437 = vmatpush1.bf16.xpose.msra.mxu0 %v3413
    %3438 = vmatprep.subr.bf16.mxu0 0
    %3439 = vmatpush1.bf16.xpose.msra.mxu0 0
    %3440 = vmatprep.subr.bf16.mxu0 0
    %3441 = vmatpush1.bf16.xpose.msra.mxu0 0
    %3442 = vmatprep.subr.bf16.mxu0 0
    %3443 = vmatpush1.bf16.xpose.msra.mxu0 0
    %3444 = vmatprep.subr.bf16.mxu0 0
    %3445 = vmatpush1.bf16.xpose.msra.mxu0 0
    %3446 = vmatprep.subr.bf16.mxu0 0
    %3447 = vmatpush1.bf16.xpose.msra.mxu0 0
    %3448 = vmatprep.subr.bf16.mxu0 0
    %3449 = vmatpush1.bf16.xpose.msra.mxu0 0
    %3450 = vmatprep.subr.bf16.mxu0 0
    %3451 = vmatpush1.bf16.xpose.msra.mxu0 0
    %3452 = vmatprep.subr.bf16.mxu0 0
    %3453 = vmatpush1.bf16.xpose.msra.mxu0 0
    %3454 = vmatprep.mubr.bf16.mxu0 0
    %3455 = vmatmul.mubr.bf16.gmra.mrb[0].mxu0 %v3403
    %v3456 = vpop.f32.mrb[0].mxu0
    %v3457 = vadd.f32 0.0, %v3456
    %v3458 = vpop.f32.mrb[0].mxu0
    %v3459 = vpop.f32.mrb[0].mxu0
    %v3460 = vadd.f32 0.0, %v3459
    %v3461 = vpop.f32.mrb[0].mxu0
    %3462 = vdwg.mxu0
    %v3463 = vmul.f32 %v3457, 0.25
    %v3464 = vmul.f32 %v3460, 0.25
    %3465 = vmax.xlane.f32.xlu0 %v3463
    %v3466 = vpop.xlane.xlu0 %3465
    %3467 = vmax.xlane.f32.xlu0 %v3464
    %v3468 = vpop.xlane.xlu0 %3467
    %v3469 = vsub.f32 %v3463, %v3466
    %v3470 = vsub.f32 %v3464, %v3468
    %v3471 = vmul.f32 %v3469, 1.442695
    %v3472 = vpow.pop %v3471
    %v3473 = vmul.f32 %v3470, 1.442695
    %v3474 = vpow.pop %v3473
    %v3475 = vmul.f32 %v3472, %v317
    %v3476 = vmul.f32 %v3474, %v318
    %v3477 = vpack.c.bf16 %v3476, %v3475
    %3478 = vmatprep.subr.bf16.mxu0 %v618
    %3479 = vmatpush1.bf16.msra.mxu0 %v3414
    %3480 = vmatprep.subr.bf16.mxu0 %v619
    %3481 = vmatpush1.bf16.msra.mxu0 %v3415
    %3482 = vmatprep.subr.bf16.mxu0 %v620
    %3483 = vmatpush1.bf16.msra.mxu0 %v3416
    %3484 = vmatprep.subr.bf16.mxu0 %v621
    %3485 = vmatpush1.bf16.msra.mxu0 %v3417
    %3486 = vmatprep.subr.bf16.mxu0 %v622
    %3487 = vmatpush1.bf16.msra.mxu0 %v3418
    %3488 = vmatprep.subr.bf16.mxu0 %v623
    %3489 = vmatpush1.bf16.msra.mxu0 %v3419
    %3490 = vmatprep.subr.bf16.mxu0 %v624
    %3491 = vmatpush1.bf16.msra.mxu0 %v3420
    %3492 = vmatprep.subr.bf16.mxu0 %v625
    %3493 = vmatpush1.bf16.msra.mxu0 %v3421
    %3494 = vmatprep.subr.bf16.mxu0 0
    %3495 = vmatpush1.bf16.msra.mxu0 0
    %3496 = vmatprep.subr.bf16.mxu0 0
    %3497 = vmatpush1.bf16.msra.mxu0 0
    %3498 = vmatprep.subr.bf16.mxu0 0
    %3499 = vmatpush1.bf16.msra.mxu0 0
    %3500 = vmatprep.subr.bf16.mxu0 0
    %3501 = vmatpush1.bf16.msra.mxu0 0
    %3502 = vmatprep.subr.bf16.mxu0 0
    %3503 = vmatpush1.bf16.msra.mxu0 0
    %3504 = vmatprep.subr.bf16.mxu0 0
    %3505 = vmatpush1.bf16.msra.mxu0 0
    %3506 = vmatprep.subr.bf16.mxu0 0
    %3507 = vmatpush1.bf16.msra.mxu0 0
    %3508 = vmatprep.subr.bf16.mxu0 0
    %3509 = vmatpush1.bf16.msra.mxu0 0
    %3510 = vmatprep.mubr.bf16.mxu0 0
    %3511 = vmatmul.mubr.bf16.gmra.mrb[0].mxu0 %v3477
    %v3512 = vpop.f32.mrb[0].mxu0
    %v3513 = vadd.f32 0.0, %v3512
    %v3514 = vpop.f32.mrb[0].mxu0
    %v3515 = vadd.f32 0.0, %v3514
    %v3516 = vpop.f32.mrb[0].mxu0
    %v3517 = vadd.f32 0.0, %v3516
    %v3518 = vpop.f32.mrb[0].mxu0
    %v3519 = vadd.f32 0.0, %v3518
    %3520 = vdwg.mxu0
    %v3521 = vrcp.pop %v3515
    %v3522 = vrcp.pop %v3519
    %v3523 = vmul.f32 %v3513, %v3521
    %v3524 = vmul.f32 %v3517, %v3522
    %v3525 = vpack.c.bf16 %v3524, %v3523
    %s3526 = scalar_lea.vmem [#allocation10], 192
    %v3527 = vld [vmem:[%s3526] sm:$0xf]
    %v3528 = vld [vmem:[%s3526 + $0x4] sm:$0xf]
    %v3529 = vld [vmem:[%s3526 + $0x8] sm:$0xf]
    %v3530 = vld [vmem:[%s3526 + $0xc] sm:$0xf]
    %v3531 = vld [vmem:[%s3526 + $0x10] sm:$0xf]
    %v3532 = vld [vmem:[%s3526 + $0x14] sm:$0xf]
    %v3533 = vld [vmem:[%s3526 + $0x18] sm:$0xf]
    %v3534 = vld [vmem:[%s3526 + $0x1c] sm:$0xf]
    %v3535 = vld [vmem:[%s3526 + $0x20] sm:$0xf]
    %v3536 = vld [vmem:[%s3526 + $0x24] sm:$0xf]
    %v3537 = vld [vmem:[%s3526 + $0x28] sm:$0xf]
    %v3538 = vld [vmem:[%s3526 + $0x2c] sm:$0xf]
    %v3539 = vld [vmem:[%s3526 + $0x30] sm:$0xf]
    %v3540 = vld [vmem:[%s3526 + $0x34] sm:$0xf]
    %v3541 = vld [vmem:[%s3526 + $0x38] sm:$0xf]
    %v3542 = vld [vmem:[%s3526 + $0x3c] sm:$0xf]
    %s3543 = scalar_lea.vmem [#allocation11], 3
    %v3544 = vld [vmem:[%s3543] sm:$0x1]
    %v3546 = vlaneseq
    %v3547 = vshrl.u32 %v3546, 7
    %v3548 = vsub.s32 0, %v3547
    %v3549 = vrot.slane %v3544, %v3548
    %v3567 = vunpack.c.l.b16 %v3527
    %v3568 = vunpack.c.l.b16 %v3528
    %v3569 = vunpack.c.l.b16 %v3529
    %v3570 = vunpack.c.l.b16 %v3530
    %v3571 = vunpack.c.l.b16 %v3531
    %v3572 = vunpack.c.l.b16 %v3532
    %v3573 = vunpack.c.l.b16 %v3533
    %v3574 = vunpack.c.l.b16 %v3534
    %v3575 = vunpack.c.l.b16 %v3535
    %v3576 = vunpack.c.l.b16 %v3536
    %v3577 = vunpack.c.l.b16 %v3537
    %v3578 = vunpack.c.l.b16 %v3538
    %v3579 = vunpack.c.l.b16 %v3539
    %v3580 = vunpack.c.l.b16 %v3540
    %v3581 = vunpack.c.l.b16 %v3541
    %v3582 = vunpack.c.l.b16 %v3542
    %v3583 = vpack.c.b16 %v3568, %v3567
    %v3584 = vpack.c.b16 %v3570, %v3569
    %v3585 = vpack.c.b16 %v3572, %v3571
    %v3586 = vpack.c.b16 %v3574, %v3573
    %v3587 = vpack.c.b16 %v3576, %v3575
    %v3588 = vpack.c.b16 %v3578, %v3577
    %v3589 = vpack.c.b16 %v3580, %v3579
    %v3590 = vpack.c.b16 %v3582, %v3581
    %3599 = vmatprep.subr.bf16.mxu0 0
    %3600 = vmatpush1.bf16.msra.mxu0 %v3583
    %3601 = vmatprep.subr.bf16.mxu0 0
    %3602 = vmatpush1.bf16.msra.mxu0 %v3584
    %3603 = vmatprep.subr.bf16.mxu0 0
    %3604 = vmatpush1.bf16.msra.mxu0 %v3585
    %3605 = vmatprep.subr.bf16.mxu0 0
    %3606 = vmatpush1.bf16.msra.mxu0 %v3586
    %3607 = vmatprep.subr.bf16.mxu0 0
    %3608 = vmatpush1.bf16.msra.mxu0 %v3587
    %3609 = vmatprep.subr.bf16.mxu0 0
    %3610 = vmatpush1.bf16.msra.mxu0 %v3588
    %3611 = vmatprep.subr.bf16.mxu0 0
    %3612 = vmatpush1.bf16.msra.mxu0 %v3589
    %3613 = vmatprep.subr.bf16.mxu0 0
    %3614 = vmatpush1.bf16.msra.mxu0 %v3590
    %3615 = vmatprep.subr.bf16.mxu0 0
    %3616 = vmatpush1.bf16.msra.mxu0 0
    %3617 = vmatprep.subr.bf16.mxu0 0
    %3618 = vmatpush1.bf16.msra.mxu0 0
    %3619 = vmatprep.subr.bf16.mxu0 0
    %3620 = vmatpush1.bf16.msra.mxu0 0
    %3621 = vmatprep.subr.bf16.mxu0 0
    %3622 = vmatpush1.bf16.msra.mxu0 0
    %3623 = vmatprep.subr.bf16.mxu0 0
    %3624 = vmatpush1.bf16.msra.mxu0 0
    %3625 = vmatprep.subr.bf16.mxu0 0
    %3626 = vmatpush1.bf16.msra.mxu0 0
    %3627 = vmatprep.subr.bf16.mxu0 0
    %3628 = vmatpush1.bf16.msra.mxu0 0
    %3629 = vmatprep.subr.bf16.mxu0 0
    %3630 = vmatpush1.bf16.msra.mxu0 0
    %3631 = vmatprep.mubr.bf16.mxu0 0
    %3632 = vmatmul.mubr.bf16.gmra.mrb[0].mxu0 %v3525
    %v3633 = vpop.f32.mrb[0].mxu0
    %v3634 = vadd.f32 %v3549, %v3633
    %v3635 = vpop.f32.mrb[0].mxu0
    %v3636 = vpop.f32.mrb[0].mxu0
    %v3637 = vadd.f32 %v3549, %v3636
    %v3638 = vpop.f32.mrb[0].mxu0
    %3639 = vdwg.mxu0
    %v3640 = vadd.f32 %v3137, %v3634
    %v3641 = vadd.f32 %v3138, %v3637
    %s3642 = scalar_lea.vmem [#allocation13], 3
    %v3643 = vld [vmem:[%s3642] sm:$0x1]
    %s3644 = scalar_lea.vmem [#allocation14], 3
    %v3645 = vld [vmem:[%s3644] sm:$0x1]
    %3646 = vadd.xlane.f32.xlu0 %v3640
    %v3647 = vpop.xlane.xlu0 %3646
    %3648 = vadd.xlane.f32.xlu0 %v3641
    %v3649 = vpop.xlane.xlu0 %3648
    %v3650 = vmul.f32 %v3647, %v874
    %v3651 = vmul.f32 %v3649, %v874
    %v3652 = vsub.f32 %v3640, %v3650
    %v3653 = vsub.f32 %v3641, %v3651
    %v3654 = vmul.f32 %v3652, %v3652
    %v3655 = vmul.f32 %v3653, %v3653
    %3656 = vadd.xlane.f32.xlu0 %v3654
    %v3657 = vpop.xlane.xlu0 %3656
    %3658 = vadd.xlane.f32.xlu0 %v3655
    %v3659 = vpop.xlane.xlu0 %3658
    %v3660 = vmul.f32 %v3657, %v874
    %v3661 = vmul.f32 %v3659, %v874
    %v3662 = vadd.f32 %v3660, 1e-05
    %v3663 = vadd.f32 %v3661, 1e-05
    %v3664 = vrsqrt.pop %v3662
    %v3665 = vrsqrt.pop %v3663
    %v3666 = vmul.f32 %v3652, %v3664
    %v3667 = vmul.f32 %v3653, %v3665
    %v3669 = vlaneseq
    %v3670 = vshrl.u32 %v3669, 7
    %v3671 = vsub.s32 0, %v3670
    %v3672 = vrot.slane %v3643, %v3671
    %v3674 = vmul.f32 %v3666, %v3672
    %v3675 = vmul.f32 %v3667, %v3672
    %v3677 = vlaneseq
    %v3678 = vshrl.u32 %v3677, 7
    %v3679 = vsub.s32 0, %v3678
    %v3680 = vrot.slane %v3645, %v3679
    %v3682 = vadd.f32 %v3674, %v3680
    %v3683 = vadd.f32 %v3675, %v3680
    %v3684 = vpack.c.bf16 %v3683, %v3682
    %s3685 = scalar_lea.vmem [#allocation16], 384
    %v3686 = vld [vmem:[%s3685] sm:$0xff]
    %v3687 = vld [vmem:[%s3685 + $0x8] sm:$0xff]
    %v3688 = vld [vmem:[%s3685 + $0x10] sm:$0xff]
    %v3689 = vld [vmem:[%s3685 + $0x18] sm:$0xff]
    %v3690 = vld [vmem:[%s3685 + $0x20] sm:$0xff]
    %v3691 = vld [vmem:[%s3685 + $0x28] sm:$0xff]
    %v3692 = vld [vmem:[%s3685 + $0x30] sm:$0xff]
    %v3693 = vld [vmem:[%s3685 + $0x38] sm:$0xff]
    %v3694 = vld [vmem:[%s3685 + $0x40] sm:$0xff]
    %v3695 = vld [vmem:[%s3685 + $0x48] sm:$0xff]
    %v3696 = vld [vmem:[%s3685 + $0x50] sm:$0xff]
    %v3697 = vld [vmem:[%s3685 + $0x58] sm:$0xff]
    %v3698 = vld [vmem:[%s3685 + $0x60] sm:$0xff]
    %v3699 = vld [vmem:[%s3685 + $0x68] sm:$0xff]
    %v3700 = vld [vmem:[%s3685 + $0x70] sm:$0xff]
    %v3701 = vld [vmem:[%s3685 + $0x78] sm:$0xff]
    %s3702 = scalar_lea.vmem %s11, 6
    %v3703 = vld [vmem:[%s3702] sm:$0x3]
    %v3705 = vlaneseq
    %v3706 = vshrl.u32 %v3705, 7
    %v3707 = vsub.s32 0, %v3706
    %v3708 = vrot.slane %v3703, %v3707
    %v3709 = vlaneseq
    %v3710 = vshrl.u32 %v3709, 7
    %v3711 = vsub.s32 1, %v3710
    %v3712 = vrot.slane %v3703, %v3711
    %v3731 = vunpack.c.l.b16 %v3686
    %v3732 = vunpack.c.h.b16 %v3686
    %v3733 = vunpack.c.l.b16 %v3687
    %v3734 = vunpack.c.h.b16 %v3687
    %v3735 = vunpack.c.l.b16 %v3688
    %v3736 = vunpack.c.h.b16 %v3688
    %v3737 = vunpack.c.l.b16 %v3689
    %v3738 = vunpack.c.h.b16 %v3689
    %v3739 = vunpack.c.l.b16 %v3690
    %v3740 = vunpack.c.h.b16 %v3690
    %v3741 = vunpack.c.l.b16 %v3691
    %v3742 = vunpack.c.h.b16 %v3691
    %v3743 = vunpack.c.l.b16 %v3692
    %v3744 = vunpack.c.h.b16 %v3692
    %v3745 = vunpack.c.l.b16 %v3693
    %v3746 = vunpack.c.h.b16 %v3693
    %v3747 = vunpack.c.l.b16 %v3694
    %v3748 = vunpack.c.h.b16 %v3694
    %v3749 = vunpack.c.l.b16 %v3695
    %v3750 = vunpack.c.h.b16 %v3695
    %v3751 = vunpack.c.l.b16 %v3696
    %v3752 = vunpack.c.h.b16 %v3696
    %v3753 = vunpack.c.l.b16 %v3697
    %v3754 = vunpack.c.h.b16 %v3697
    %v3755 = vunpack.c.l.b16 %v3698
    %v3756 = vunpack.c.h.b16 %v3698
    %v3757 = vunpack.c.l.b16 %v3699
    %v3758 = vunpack.c.h.b16 %v3699
    %v3759 = vunpack.c.l.b16 %v3700
    %v3760 = vunpack.c.h.b16 %v3700
    %v3761 = vunpack.c.l.b16 %v3701
    %v3762 = vunpack.c.h.b16 %v3701
    %v3763 = vpack.c.b16 %v3733, %v3731
    %v3764 = vpack.c.b16 %v3734, %v3732
    %v3765 = vpack.c.b16 %v3737, %v3735
    %v3766 = vpack.c.b16 %v3738, %v3736
    %v3767 = vpack.c.b16 %v3741, %v3739
    %v3768 = vpack.c.b16 %v3742, %v3740
    %v3769 = vpack.c.b16 %v3745, %v3743
    %v3770 = vpack.c.b16 %v3746, %v3744
    %v3771 = vpack.c.b16 %v3749, %v3747
    %v3772 = vpack.c.b16 %v3750, %v3748
    %v3773 = vpack.c.b16 %v3753, %v3751
    %v3774 = vpack.c.b16 %v3754, %v3752
    %v3775 = vpack.c.b16 %v3757, %v3755
    %v3776 = vpack.c.b16 %v3758, %v3756
    %v3777 = vpack.c.b16 %v3761, %v3759
    %v3778 = vpack.c.b16 %v3762, %v3760
    %3795 = vmatprep.subr.bf16.mxu0 %v3764
    %3796 = vmatpush1.bf16.msra.mxu0 %v3763
    %3797 = vmatprep.subr.bf16.mxu0 %v3766
    %3798 = vmatpush1.bf16.msra.mxu0 %v3765
    %3799 = vmatprep.subr.bf16.mxu0 %v3768
    %3800 = vmatpush1.bf16.msra.mxu0 %v3767
    %3801 = vmatprep.subr.bf16.mxu0 %v3770
    %3802 = vmatpush1.bf16.msra.mxu0 %v3769
    %3803 = vmatprep.subr.bf16.mxu0 %v3772
    %3804 = vmatpush1.bf16.msra.mxu0 %v3771
    %3805 = vmatprep.subr.bf16.mxu0 %v3774
    %3806 = vmatpush1.bf16.msra.mxu0 %v3773
    %3807 = vmatprep.subr.bf16.mxu0 %v3776
    %3808 = vmatpush1.bf16.msra.mxu0 %v3775
    %3809 = vmatprep.subr.bf16.mxu0 %v3778
    %3810 = vmatpush1.bf16.msra.mxu0 %v3777
    %3811 = vmatprep.subr.bf16.mxu0 0
    %3812 = vmatpush1.bf16.msra.mxu0 0
    %3813 = vmatprep.subr.bf16.mxu0 0
    %3814 = vmatpush1.bf16.msra.mxu0 0
    %3815 = vmatprep.subr.bf16.mxu0 0
    %3816 = vmatpush1.bf16.msra.mxu0 0
    %3817 = vmatprep.subr.bf16.mxu0 0
    %3818 = vmatpush1.bf16.msra.mxu0 0
    %3819 = vmatprep.subr.bf16.mxu0 0
    %3820 = vmatpush1.bf16.msra.mxu0 0
    %3821 = vmatprep.subr.bf16.mxu0 0
    %3822 = vmatpush1.bf16.msra.mxu0 0
    %3823 = vmatprep.subr.bf16.mxu0 0
    %3824 = vmatpush1.bf16.msra.mxu0 0
    %3825 = vmatprep.subr.bf16.mxu0 0
    %3826 = vmatpush1.bf16.msra.mxu0 0
    %3827 = vmatprep.mubr.bf16.mxu0 0
    %3828 = vmatmul.mubr.bf16.gmra.mrb[0].mxu0 %v3684
    %v3829 = vpop.f32.mrb[0].mxu0
    %v3830 = vadd.f32 %v3708, %v3829
    %v3831 = vpop.f32.mrb[0].mxu0
    %v3832 = vadd.f32 %v3712, %v3831
    %v3833 = vpop.f32.mrb[0].mxu0
    %v3834 = vadd.f32 %v3708, %v3833
    %v3835 = vpop.f32.mrb[0].mxu0
    %v3836 = vadd.f32 %v3712, %v3835
    %3837 = vdwg.mxu0
    %v3838 = vmax.f32 %v3830, 0.0
    %v3839 = vmax.f32 %v3832, 0.0
    %v3840 = vmax.f32 %v3834, 0.0
    %v3841 = vmax.f32 %v3836, 0.0
    %v3842 = vpack.c.bf16 %v3840, %v3838
    %v3843 = vpack.c.bf16 %v3841, %v3839
    %s3844 = scalar_lea.vmem [#allocation17], 384
    %v3845 = vld [vmem:[%s3844] sm:$0xf]
    %v3846 = vld [vmem:[%s3844 + $0x4] sm:$0xf]
    %v3847 = vld [vmem:[%s3844 + $0x8] sm:$0xf]
    %v3848 = vld [vmem:[%s3844 + $0xc] sm:$0xf]
    %v3849 = vld [vmem:[%s3844 + $0x10] sm:$0xf]
    %v3850 = vld [vmem:[%s3844 + $0x14] sm:$0xf]
    %v3851 = vld [vmem:[%s3844 + $0x18] sm:$0xf]
    %v3852 = vld [vmem:[%s3844 + $0x1c] sm:$0xf]
    %v3853 = vld [vmem:[%s3844 + $0x20] sm:$0xf]
    %v3854 = vld [vmem:[%s3844 + $0x24] sm:$0xf]
    %v3855 = vld [vmem:[%s3844 + $0x28] sm:$0xf]
    %v3856 = vld [vmem:[%s3844 + $0x2c] sm:$0xf]
    %v3857 = vld [vmem:[%s3844 + $0x30] sm:$0xf]
    %v3858 = vld [vmem:[%s3844 + $0x34] sm:$0xf]
    %v3859 = vld [vmem:[%s3844 + $0x38] sm:$0xf]
    %v3860 = vld [vmem:[%s3844 + $0x3c] sm:$0xf]
    %v3861 = vld [vmem:[%s3844 + $0x40] sm:$0xf]
    %v3862 = vld [vmem:[%s3844 + $0x44] sm:$0xf]
    %v3863 = vld [vmem:[%s3844 + $0x48] sm:$0xf]
    %v3864 = vld [vmem:[%s3844 + $0x4c] sm:$0xf]
    %v3865 = vld [vmem:[%s3844 + $0x50] sm:$0xf]
    %v3866 = vld [vmem:[%s3844 + $0x54] sm:$0xf]
    %v3867 = vld [vmem:[%s3844 + $0x58] sm:$0xf]
    %v3868 = vld [vmem:[%s3844 + $0x5c] sm:$0xf]
    %v3869 = vld [vmem:[%s3844 + $0x60] sm:$0xf]
    %v3870 = vld [vmem:[%s3844 + $0x64] sm:$0xf]
    %v3871 = vld [vmem:[%s3844 + $0x68] sm:$0xf]
    %v3872 = vld [vmem:[%s3844 + $0x6c] sm:$0xf]
    %v3873 = vld [vmem:[%s3844 + $0x70] sm:$0xf]
    %v3874 = vld [vmem:[%s3844 + $0x74] sm:$0xf]
    %v3875 = vld [vmem:[%s3844 + $0x78] sm:$0xf]
    %v3876 = vld [vmem:[%s3844 + $0x7c] sm:$0xf]
    %s3877 = scalar_lea.vmem [#allocation19], 3
    %v3878 = vld [vmem:[%s3877] sm:$0x1]
    %v3880 = vlaneseq
    %v3881 = vshrl.u32 %v3880, 7
    %v3882 = vsub.s32 0, %v3881
    %v3883 = vrot.slane %v3878, %v3882
    %v3917 = vunpack.c.l.b16 %v3845
    %v3918 = vunpack.c.l.b16 %v3846
    %v3919 = vunpack.c.l.b16 %v3847
    %v3920 = vunpack.c.l.b16 %v3848
    %v3921 = vunpack.c.l.b16 %v3849
    %v3922 = vunpack.c.l.b16 %v3850
    %v3923 = vunpack.c.l.b16 %v3851
    %v3924 = vunpack.c.l.b16 %v3852
    %v3925 = vunpack.c.l.b16 %v3853
    %v3926 = vunpack.c.l.b16 %v3854
    %v3927 = vunpack.c.l.b16 %v3855
    %v3928 = vunpack.c.l.b16 %v3856
    %v3929 = vunpack.c.l.b16 %v3857
    %v3930 = vunpack.c.l.b16 %v3858
    %v3931 = vunpack.c.l.b16 %v3859
    %v3932 = vunpack.c.l.b16 %v3860
    %v3933 = vunpack.c.l.b16 %v3861
    %v3934 = vunpack.c.l.b16 %v3862
    %v3935 = vunpack.c.l.b16 %v3863
    %v3936 = vunpack.c.l.b16 %v3864
    %v3937 = vunpack.c.l.b16 %v3865
    %v3938 = vunpack.c.l.b16 %v3866
    %v3939 = vunpack.c.l.b16 %v3867
    %v3940 = vunpack.c.l.b16 %v3868
    %v3941 = vunpack.c.l.b16 %v3869
    %v3942 = vunpack.c.l.b16 %v3870
    %v3943 = vunpack.c.l.b16 %v3871
    %v3944 = vunpack.c.l.b16 %v3872
    %v3945 = vunpack.c.l.b16 %v3873
    %v3946 = vunpack.c.l.b16 %v3874
    %v3947 = vunpack.c.l.b16 %v3875
    %v3948 = vunpack.c.l.b16 %v3876
    %v3949 = vpack.c.b16 %v3918, %v3917
    %v3950 = vpack.c.b16 %v3920, %v3919
    %v3951 = vpack.c.b16 %v3922, %v3921
    %v3952 = vpack.c.b16 %v3924, %v3923
    %v3953 = vpack.c.b16 %v3926, %v3925
    %v3954 = vpack.c.b16 %v3928, %v3927
    %v3955 = vpack.c.b16 %v3930, %v3929
    %v3956 = vpack.c.b16 %v3932, %v3931
    %v3957 = vpack.c.b16 %v3934, %v3933
    %v3958 = vpack.c.b16 %v3936, %v3935
    %v3959 = vpack.c.b16 %v3938, %v3937
    %v3960 = vpack.c.b16 %v3940, %v3939
    %v3961 = vpack.c.b16 %v3942, %v3941
    %v3962 = vpack.c.b16 %v3944, %v3943
    %v3963 = vpack.c.b16 %v3946, %v3945
    %v3964 = vpack.c.b16 %v3948, %v3947
    %3981 = vmatprep.subr.bf16.mxu0 0
    %3982 = vmatpush1.bf16.msra.mxu0 %v3949
    %3983 = vmatprep.subr.bf16.mxu0 0
    %3984 = vmatpush1.bf16.msra.mxu0 %v3950
    %3985 = vmatprep.subr.bf16.mxu0 0
    %3986 = vmatpush1.bf16.msra.mxu0 %v3951
    %3987 = vmatprep.subr.bf16.mxu0 0
    %3988 = vmatpush1.bf16.msra.mxu0 %v3952
    %3989 = vmatprep.subr.bf16.mxu0 0
    %3990 = vmatpush1.bf16.msra.mxu0 %v3953
    %3991 = vmatprep.subr.bf16.mxu0 0
    %3992 = vmatpush1.bf16.msra.mxu0 %v3954
    %3993 = vmatprep.subr.bf16.mxu0 0
    %3994 = vmatpush1.bf16.msra.mxu0 %v3955
    %3995 = vmatprep.subr.bf16.mxu0 0
    %3996 = vmatpush1.bf16.msra.mxu0 %v3956
    %3997 = vmatprep.subr.bf16.mxu0 0
    %3998 = vmatpush1.bf16.msra.mxu0 %v3957
    %3999 = vmatprep.subr.bf16.mxu0 0
    %4000 = vmatpush1.bf16.msra.mxu0 %v3958
    %4001 = vmatprep.subr.bf16.mxu0 0
    %4002 = vmatpush1.bf16.msra.mxu0 %v3959
    %4003 = vmatprep.subr.bf16.mxu0 0
    %4004 = vmatpush1.bf16.msra.mxu0 %v3960
    %4005 = vmatprep.subr.bf16.mxu0 0
    %4006 = vmatpush1.bf16.msra.mxu0 %v3961
    %4007 = vmatprep.subr.bf16.mxu0 0
    %4008 = vmatpush1.bf16.msra.mxu0 %v3962
    %4009 = vmatprep.subr.bf16.mxu0 0
    %4010 = vmatpush1.bf16.msra.mxu0 %v3963
    %4011 = vmatprep.subr.bf16.mxu0 0
    %4012 = vmatpush1.bf16.msra.mxu0 %v3964
    %4013 = vmatprep.mubr.bf16.mxu0 %v3843
    %4014 = vmatmul.mubr.bf16.gmra.mrb[0].mxu0 %v3842
    %v4015 = vpop.f32.mrb[0].mxu0
    %v4016 = vadd.f32 %v3883, %v4015
    %v4017 = vpop.f32.mrb[0].mxu0
    %v4018 = vpop.f32.mrb[0].mxu0
    %v4019 = vadd.f32 %v3883, %v4018
    %v4020 = vpop.f32.mrb[0].mxu0
    %4021 = vdwg.mxu0
    %v4022 = vadd.f32 %v3682, %v4016
    %v4023 = vadd.f32 %v3683, %v4019
    %s4024 = scalar_lea.vmem [#allocation20], 3
    %v4025 = vld [vmem:[%s4024] sm:$0x1]
    %s4026 = scalar_lea.vmem [#allocation22], 3
    %v4027 = vld [vmem:[%s4026] sm:$0x1]
    %4028 = vadd.xlane.f32.xlu0 %v4022
    %v4029 = vpop.xlane.xlu0 %4028
    %4030 = vadd.xlane.f32.xlu0 %v4023
    %v4031 = vpop.xlane.xlu0 %4030
    %v4032 = vmul.f32 %v4029, %v874
    %v4033 = vmul.f32 %v4031, %v874
    %v4034 = vsub.f32 %v4022, %v4032
    %v4035 = vsub.f32 %v4023, %v4033
    %v4036 = vmul.f32 %v4034, %v4034
    %v4037 = vmul.f32 %v4035, %v4035
    %4038 = vadd.xlane.f32.xlu0 %v4036
    %v4039 = vpop.xlane.xlu0 %4038
    %4040 = vadd.xlane.f32.xlu0 %v4037
    %v4041 = vpop.xlane.xlu0 %4040
    %v4042 = vmul.f32 %v4039, %v874
    %v4043 = vmul.f32 %v4041, %v874
    %v4044 = vadd.f32 %v4042, 1e-05
    %v4045 = vadd.f32 %v4043, 1e-05
    %v4046 = vrsqrt.pop %v4044
    %v4047 = vrsqrt.pop %v4045
    %v4048 = vmul.f32 %v4034, %v4046
    %v4049 = vmul.f32 %v4035, %v4047
    %v4051 = vlaneseq
    %v4052 = vshrl.u32 %v4051, 7
    %v4053 = vsub.s32 0, %v4052
    %v4054 = vrot.slane %v4025, %v4053
    %v4056 = vmul.f32 %v4048, %v4054
    %v4057 = vmul.f32 %v4049, %v4054
    %v4059 = vlaneseq
    %v4060 = vshrl.u32 %v4059, 7
    %v4061 = vsub.s32 0, %v4060
    %v4062 = vrot.slane %v4027, %v4061
    %v4064 = vadd.f32 %v4056, %v4062
    %v4065 = vadd.f32 %v4057, %v4062
    %v4066 = vld [vmem:[%s3] sm:$0x1]
    %v4067 = vpack.c.bf16 %v4065, %v4064
    %vm4068 = vcmask 130048
    %v4070 = vsel %vm4068, %v4066, 0
    %4072 = vmatprep.subr.bf16.mxu0 0
    %4073 = vmatpush1.bf16.msra.mxu0 %v4067
    %4074 = vmatprep.subr.bf16.mxu0 0
    %4075 = vmatpush1.bf16.msra.mxu0 0
    %4076 = vmatprep.subr.bf16.mxu0 0
    %4077 = vmatpush1.bf16.msra.mxu0 0
    %4078 = vmatprep.subr.bf16.mxu0 0
    %4079 = vmatpush1.bf16.msra.mxu0 0
    %4080 = vmatprep.subr.bf16.mxu0 0
    %4081 = vmatpush1.bf16.msra.mxu0 0
    %4082 = vmatprep.subr.bf16.mxu0 0
    %4083 = vmatpush1.bf16.msra.mxu0 0
    %4084 = vmatprep.subr.bf16.mxu0 0
    %4085 = vmatpush1.bf16.msra.mxu0 0
    %4086 = vmatprep.subr.bf16.mxu0 0
    %4087 = vmatpush1.bf16.msra.mxu0 0
    %4088 = vmatprep.subr.bf16.mxu0 0
    %4089 = vmatpush1.bf16.msra.mxu0 0
    %4090 = vmatprep.subr.bf16.mxu0 0
    %4091 = vmatpush1.bf16.msra.mxu0 0
    %4092 = vmatprep.subr.bf16.mxu0 0
    %4093 = vmatpush1.bf16.msra.mxu0 0
    %4094 = vmatprep.subr.bf16.mxu0 0
    %4095 = vmatpush1.bf16.msra.mxu0 0
    %4096 = vmatprep.subr.bf16.mxu0 0
    %4097 = vmatpush1.bf16.msra.mxu0 0
    %4098 = vmatprep.subr.bf16.mxu0 0
    %4099 = vmatpush1.bf16.msra.mxu0 0
    %4100 = vmatprep.subr.bf16.mxu0 0
    %4101 = vmatpush1.bf16.msra.mxu0 0
    %4102 = vmatprep.subr.bf16.mxu0 0
    %4103 = vmatpush1.bf16.msra.mxu0 0
    %4104 = vmatprep.mubr.bf16.mxu0 0
    %4105 = vmatmul.mubr.bf16.gmra.mrb[0].mxu0 %v4070
    %v4106 = vpop.f32.mrb[0].mxu0
    %v4107 = vadd.f32 0.0, %v4106
    %v4108 = vpop.f32.mrb[0].mxu0
    %v4109 = vpop.f32.mrb[0].mxu0
    %v4110 = vpop.f32.mrb[0].mxu0
    %4111 = vdwg.mxu0
    %v4112 = vpack.c.bf16 %v4107, %v4107
    %v4113 = vld [vmem:[#allocation23] sm:$0xff]
    %v4114 = vld [vmem:[#allocation23 + $0x8] sm:$0xff]
    %v4115 = vld [vmem:[#allocation23 + $0x10] sm:$0xff]
    %v4116 = vld [vmem:[#allocation23 + $0x18] sm:$0xff]
    %v4117 = vld [vmem:[#allocation23 + $0x20] sm:$0xff]
    %v4118 = vld [vmem:[#allocation23 + $0x28] sm:$0xff]
    %v4119 = vld [vmem:[#allocation23 + $0x30] sm:$0xff]
    %v4120 = vld [vmem:[#allocation23 + $0x38] sm:$0xff]
    %v4121 = vld [vmem:[#allocation23 + $0x40] sm:$0xff]
    %v4122 = vld [vmem:[#allocation23 + $0x48] sm:$0xff]
    %v4123 = vld [vmem:[#allocation23 + $0x50] sm:$0xff]
    %v4124 = vld [vmem:[#allocation23 + $0x58] sm:$0xff]
    %v4125 = vld [vmem:[#allocation23 + $0x60] sm:$0xff]
    %v4126 = vld [vmem:[#allocation23 + $0x68] sm:$0xff]
    %v4127 = vld [vmem:[#allocation23 + $0x70] sm:$0xff]
    %v4128 = vld [vmem:[#allocation23 + $0x78] sm:$0xff]
    %v4129 = vld [vmem:[#allocation23 + $0x80] sm:$0xff]
    %v4130 = vld [vmem:[#allocation23 + $0x88] sm:$0xff]
    %v4131 = vld [vmem:[#allocation23 + $0x90] sm:$0xff]
    %v4132 = vld [vmem:[#allocation23 + $0x98] sm:$0xff]
    %v4133 = vld [vmem:[#allocation23 + $0xa0] sm:$0xff]
    %v4134 = vld [vmem:[#allocation23 + $0xa8] sm:$0xff]
    %v4135 = vld [vmem:[#allocation23 + $0xb0] sm:$0xff]
    %v4136 = vld [vmem:[#allocation23 + $0xb8] sm:$0xff]
    %v4137 = vld [vmem:[#allocation23 + $0xc0] sm:$0xff]
    %v4138 = vld [vmem:[#allocation23 + $0xc8] sm:$0xff]
    %v4139 = vld [vmem:[#allocation23 + $0xd0] sm:$0xff]
    %v4140 = vld [vmem:[#allocation23 + $0xd8] sm:$0xff]
    %v4141 = vld [vmem:[#allocation23 + $0xe0] sm:$0xff]
    %v4142 = vld [vmem:[#allocation23 + $0xe8] sm:$0xff]
    %v4143 = vld [vmem:[#allocation23 + $0xf0] sm:$0xff]
    %v4144 = vld [vmem:[#allocation23 + $0xf8] sm:$0xff]
    %v4145 = vld [vmem:[#allocation25] sm:$0xf]
    %v4147 = vlaneseq
    %v4148 = vshrl.u32 %v4147, 7
    %v4149 = vsub.s32 0, %v4148
    %v4150 = vrot.slane %v4145, %v4149
    %v4151 = vlaneseq
    %v4152 = vshrl.u32 %v4151, 7
    %v4153 = vsub.s32 1, %v4152
    %v4154 = vrot.slane %v4145, %v4153
    %v4155 = vlaneseq
    %v4156 = vshrl.u32 %v4155, 7
    %v4157 = vsub.s32 2, %v4156
    %v4158 = vrot.slane %v4145, %v4157
    %v4159 = vlaneseq
    %v4160 = vshrl.u32 %v4159, 7
    %v4161 = vsub.s32 3, %v4160
    %v4162 = vrot.slane %v4145, %v4161
    %v4199 = vunpack.c.l.b16 %v4113
    %v4200 = vunpack.c.h.b16 %v4113
    %v4201 = vunpack.c.l.b16 %v4114
    %v4202 = vunpack.c.h.b16 %v4114
    %v4203 = vunpack.c.l.b16 %v4115
    %v4204 = vunpack.c.h.b16 %v4115
    %v4205 = vunpack.c.l.b16 %v4116
    %v4206 = vunpack.c.h.b16 %v4116
    %v4207 = vunpack.c.l.b16 %v4117
    %v4208 = vunpack.c.h.b16 %v4117
    %v4209 = vunpack.c.l.b16 %v4118
    %v4210 = vunpack.c.h.b16 %v4118
    %v4211 = vunpack.c.l.b16 %v4119
    %v4212 = vunpack.c.h.b16 %v4119
    %v4213 = vunpack.c.l.b16 %v4120
    %v4214 = vunpack.c.h.b16 %v4120
    %v4215 = vunpack.c.l.b16 %v4121
    %v4216 = vunpack.c.h.b16 %v4121
    %v4217 = vunpack.c.l.b16 %v4122
    %v4218 = vunpack.c.h.b16 %v4122
    %v4219 = vunpack.c.l.b16 %v4123
    %v4220 = vunpack.c.h.b16 %v4123
    %v4221 = vunpack.c.l.b16 %v4124
    %v4222 = vunpack.c.h.b16 %v4124
    %v4223 = vunpack.c.l.b16 %v4125
    %v4224 = vunpack.c.h.b16 %v4125
    %v4225 = vunpack.c.l.b16 %v4126
    %v4226 = vunpack.c.h.b16 %v4126
    %v4227 = vunpack.c.l.b16 %v4127
    %v4228 = vunpack.c.h.b16 %v4127
    %v4229 = vunpack.c.l.b16 %v4128
    %v4230 = vunpack.c.h.b16 %v4128
    %v4231 = vunpack.c.l.b16 %v4129
    %v4232 = vunpack.c.h.b16 %v4129
    %v4233 = vunpack.c.l.b16 %v4130
    %v4234 = vunpack.c.h.b16 %v4130
    %v4235 = vunpack.c.l.b16 %v4131
    %v4236 = vunpack.c.h.b16 %v4131
    %v4237 = vunpack.c.l.b16 %v4132
    %v4238 = vunpack.c.h.b16 %v4132
    %v4239 = vunpack.c.l.b16 %v4133
    %v4240 = vunpack.c.h.b16 %v4133
    %v4241 = vunpack.c.l.b16 %v4134
    %v4242 = vunpack.c.h.b16 %v4134
    %v4243 = vunpack.c.l.b16 %v4135
    %v4244 = vunpack.c.h.b16 %v4135
    %v4245 = vunpack.c.l.b16 %v4136
    %v4246 = vunpack.c.h.b16 %v4136
    %v4247 = vunpack.c.l.b16 %v4137
    %v4248 = vunpack.c.h.b16 %v4137
    %v4249 = vunpack.c.l.b16 %v4138
    %v4250 = vunpack.c.h.b16 %v4138
    %v4251 = vunpack.c.l.b16 %v4139
    %v4252 = vunpack.c.h.b16 %v4139
    %v4253 = vunpack.c.l.b16 %v4140
    %v4254 = vunpack.c.h.b16 %v4140
    %v4255 = vunpack.c.l.b16 %v4141
    %v4256 = vunpack.c.h.b16 %v4141
    %v4257 = vunpack.c.l.b16 %v4142
    %v4258 = vunpack.c.h.b16 %v4142
    %v4259 = vunpack.c.l.b16 %v4143
    %v4260 = vunpack.c.h.b16 %v4143
    %v4261 = vunpack.c.l.b16 %v4144
    %v4262 = vunpack.c.h.b16 %v4144
    %v4263 = vpack.c.b16 %v4203, %v4199
    %v4264 = vpack.c.b16 %v4204, %v4200
    %v4265 = vpack.c.b16 %v4205, %v4201
    %v4266 = vpack.c.b16 %v4206, %v4202
    %v4267 = vpack.c.b16 %v4211, %v4207
    %v4268 = vpack.c.b16 %v4212, %v4208
    %v4269 = vpack.c.b16 %v4213, %v4209
    %v4270 = vpack.c.b16 %v4214, %v4210
    %v4271 = vpack.c.b16 %v4219, %v4215
    %v4272 = vpack.c.b16 %v4220, %v4216
    %v4273 = vpack.c.b16 %v4221, %v4217
    %v4274 = vpack.c.b16 %v4222, %v4218
    %v4275 = vpack.c.b16 %v4227, %v4223
    %v4276 = vpack.c.b16 %v4228, %v4224
    %v4277 = vpack.c.b16 %v4229, %v4225
    %v4278 = vpack.c.b16 %v4230, %v4226
    %v4279 = vpack.c.b16 %v4235, %v4231
    %v4280 = vpack.c.b16 %v4236, %v4232
    %v4281 = vpack.c.b16 %v4237, %v4233
    %v4282 = vpack.c.b16 %v4238, %v4234
    %v4283 = vpack.c.b16 %v4243, %v4239
    %v4284 = vpack.c.b16 %v4244, %v4240
    %v4285 = vpack.c.b16 %v4245, %v4241
    %v4286 = vpack.c.b16 %v4246, %v4242
    %v4287 = vpack.c.b16 %v4251, %v4247
    %v4288 = vpack.c.b16 %v4252, %v4248
    %v4289 = vpack.c.b16 %v4253, %v4249
    %v4290 = vpack.c.b16 %v4254, %v4250
    %v4291 = vpack.c.b16 %v4259, %v4255
    %v4292 = vpack.c.b16 %v4260, %v4256
    %v4293 = vpack.c.b16 %v4261, %v4257
    %v4294 = vpack.c.b16 %v4262, %v4258
    %4327 = vmatprep.subr.bf16.mxu0 %v4264
    %4328 = vmatpush1.bf16.msra.mxu0 %v4263
    %4329 = vmatprep.subr.bf16.mxu0 %v4268
    %4330 = vmatpush1.bf16.msra.mxu0 %v4267
    %4331 = vmatprep.subr.bf16.mxu0 %v4272
    %4332 = vmatpush1.bf16.msra.mxu0 %v4271
    %4333 = vmatprep.subr.bf16.mxu0 %v4276
    %4334 = vmatpush1.bf16.msra.mxu0 %v4275
    %4335 = vmatprep.subr.bf16.mxu0 %v4280
    %4336 = vmatpush1.bf16.msra.mxu0 %v4279
    %4337 = vmatprep.subr.bf16.mxu0 %v4284
    %4338 = vmatpush1.bf16.msra.mxu0 %v4283
    %4339 = vmatprep.subr.bf16.mxu0 %v4288
    %4340 = vmatpush1.bf16.msra.mxu0 %v4287
    %4341 = vmatprep.subr.bf16.mxu0 %v4292
    %4342 = vmatpush1.bf16.msra.mxu0 %v4291
    %4343 = vmatprep.subr.bf16.mxu0 0
    %4344 = vmatpush1.bf16.msra.mxu0 0
    %4345 = vmatprep.subr.bf16.mxu0 0
    %4346 = vmatpush1.bf16.msra.mxu0 0
    %4347 = vmatprep.subr.bf16.mxu0 0
    %4348 = vmatpush1.bf16.msra.mxu0 0
    %4349 = vmatprep.subr.bf16.mxu0 0
    %4350 = vmatpush1.bf16.msra.mxu0 0
    %4351 = vmatprep.subr.bf16.mxu0 0
    %4352 = vmatpush1.bf16.msra.mxu0 0
    %4353 = vmatprep.subr.bf16.mxu0 0
    %4354 = vmatpush1.bf16.msra.mxu0 0
    %4355 = vmatprep.subr.bf16.mxu0 0
    %4356 = vmatpush1.bf16.msra.mxu0 0
    %4357 = vmatprep.subr.bf16.mxu0 0
    %4358 = vmatpush1.bf16.msra.mxu0 0
    %4359 = vmatprep.mubr.bf16.mxu0 0
    %4360 = vmatmul.mubr.bf16.gmra.mrb[0].mxu0 %v4112
    %v4361 = vpop.f32.mrb[0].mxu0
    %v4362 = vadd.f32 %v4150, %v4361
    %v4363 = vpop.f32.mrb[0].mxu0
    %v4364 = vadd.f32 %v4154, %v4363
    %v4365 = vpop.f32.mrb[0].mxu0
    %v4366 = vpop.f32.mrb[0].mxu0
    %4367 = vdwg.mxu0
    %4368 = vmatprep.subr.bf16.mxu0 %v4266
    %4369 = vmatpush1.bf16.msra.mxu0 %v4265
    %4370 = vmatprep.subr.bf16.mxu0 %v4270
    %4371 = vmatpush1.bf16.msra.mxu0 %v4269
    %4372 = vmatprep.subr.bf16.mxu0 %v4274
    %4373 = vmatpush1.bf16.msra.mxu0 %v4273
    %4374 = vmatprep.subr.bf16.mxu0 %v4278
    %4375 = vmatpush1.bf16.msra.mxu0 %v4277
    %4376 = vmatprep.subr.bf16.mxu0 %v4282
    %4377 = vmatpush1.bf16.msra.mxu0 %v4281
    %4378 = vmatprep.subr.bf16.mxu0 %v4286
    %4379 = vmatpush1.bf16.msra.mxu0 %v4285
    %4380 = vmatprep.subr.bf16.mxu0 %v4290
    %4381 = vmatpush1.bf16.msra.mxu0 %v4289
    %4382 = vmatprep.subr.bf16.mxu0 %v4294
    %4383 = vmatpush1.bf16.msra.mxu0 %v4293
    %4384 = vmatprep.subr.bf16.mxu0 0
    %4385 = vmatpush1.bf16.msra.mxu0 0
    %4386 = vmatprep.subr.bf16.mxu0 0
    %4387 = vmatpush1.bf16.msra.mxu0 0
    %4388 = vmatprep.subr.bf16.mxu0 0
    %4389 = vmatpush1.bf16.msra.mxu0 0
    %4390 = vmatprep.subr.bf16.mxu0 0
    %4391 = vmatpush1.bf16.msra.mxu0 0
    %4392 = vmatprep.subr.bf16.mxu0 0
    %4393 = vmatpush1.bf16.msra.mxu0 0
    %4394 = vmatprep.subr.bf16.mxu0 0
    %4395 = vmatpush1.bf16.msra.mxu0 0
    %4396 = vmatprep.subr.bf16.mxu0 0
    %4397 = vmatpush1.bf16.msra.mxu0 0
    %4398 = vmatprep.subr.bf16.mxu0 0
    %4399 = vmatpush1.bf16.msra.mxu0 0
    %4400 = vmatprep.mubr.bf16.mxu0 0
    %4401 = vmatmul.mubr.bf16.gmra.mrb[0].mxu0 %v4112
    %v4402 = vpop.f32.mrb[0].mxu0
    %v4403 = vadd.f32 %v4158, %v4402
    %v4404 = vpop.f32.mrb[0].mxu0
    %v4405 = vadd.f32 %v4162, %v4404
    %v4406 = vpop.f32.mrb[0].mxu0
    %v4407 = vpop.f32.mrb[0].mxu0
    %4408 = vdwg.mxu0
    %v4409 = vmax.f32 %v4362, 0.0
    %v4410 = vmax.f32 %v4364, 0.0
    %v4411 = vmax.f32 %v4403, 0.0
    %v4412 = vmax.f32 %v4405, 0.0
    %v4413 = vpack.c.bf16 %v4409, %v4409
    %v4414 = vpack.c.bf16 %v4410, %v4410
    %v4415 = vpack.c.bf16 %v4411, %v4411
    %v4416 = vpack.c.bf16 %v4412, %v4412
    %v4417 = vld [vmem:[#allocation26] sm:$0xf]
    %v4418 = vld [vmem:[#allocation26 + $0x4] sm:$0xf]
    %v4419 = vld [vmem:[#allocation26 + $0x8] sm:$0xf]
    %v4420 = vld [vmem:[#allocation26 + $0xc] sm:$0xf]
    %v4421 = vld [vmem:[#allocation26 + $0x10] sm:$0xf]
    %v4422 = vld [vmem:[#allocation26 + $0x14] sm:$0xf]
    %v4423 = vld [vmem:[#allocation26 + $0x18] sm:$0xf]
    %v4424 = vld [vmem:[#allocation26 + $0x1c] sm:$0xf]
    %v4425 = vld [vmem:[#allocation26 + $0x20] sm:$0xf]
    %v4426 = vld [vmem:[#allocation26 + $0x24] sm:$0xf]
    %v4427 = vld [vmem:[#allocation26 + $0x28] sm:$0xf]
    %v4428 = vld [vmem:[#allocation26 + $0x2c] sm:$0xf]
    %v4429 = vld [vmem:[#allocation26 + $0x30] sm:$0xf]
    %v4430 = vld [vmem:[#allocation26 + $0x34] sm:$0xf]
    %v4431 = vld [vmem:[#allocation26 + $0x38] sm:$0xf]
    %v4432 = vld [vmem:[#allocation26 + $0x3c] sm:$0xf]
    %v4433 = vld [vmem:[#allocation26 + $0x40] sm:$0xf]
    %v4434 = vld [vmem:[#allocation26 + $0x44] sm:$0xf]
    %v4435 = vld [vmem:[#allocation26 + $0x48] sm:$0xf]
    %v4436 = vld [vmem:[#allocation26 + $0x4c] sm:$0xf]
    %v4437 = vld [vmem:[#allocation26 + $0x50] sm:$0xf]
    %v4438 = vld [vmem:[#allocation26 + $0x54] sm:$0xf]
    %v4439 = vld [vmem:[#allocation26 + $0x58] sm:$0xf]
    %v4440 = vld [vmem:[#allocation26 + $0x5c] sm:$0xf]
    %v4441 = vld [vmem:[#allocation26 + $0x60] sm:$0xf]
    %v4442 = vld [vmem:[#allocation26 + $0x64] sm:$0xf]
    %v4443 = vld [vmem:[#allocation26 + $0x68] sm:$0xf]
    %v4444 = vld [vmem:[#allocation26 + $0x6c] sm:$0xf]
    %v4445 = vld [vmem:[#allocation26 + $0x70] sm:$0xf]
    %v4446 = vld [vmem:[#allocation26 + $0x74] sm:$0xf]
    %v4447 = vld [vmem:[#allocation26 + $0x78] sm:$0xf]
    %v4448 = vld [vmem:[#allocation26 + $0x7c] sm:$0xf]
    %v4449 = vld [vmem:[#allocation26 + $0x80] sm:$0xf]
    %v4450 = vld [vmem:[#allocation26 + $0x84] sm:$0xf]
    %v4451 = vld [vmem:[#allocation26 + $0x88] sm:$0xf]
    %v4452 = vld [vmem:[#allocation26 + $0x8c] sm:$0xf]
    %v4453 = vld [vmem:[#allocation26 + $0x90] sm:$0xf]
    %v4454 = vld [vmem:[#allocation26 + $0x94] sm:$0xf]
    %v4455 = vld [vmem:[#allocation26 + $0x98] sm:$0xf]
    %v4456 = vld [vmem:[#allocation26 + $0x9c] sm:$0xf]
    %v4457 = vld [vmem:[#allocation26 + $0xa0] sm:$0xf]
    %v4458 = vld [vmem:[#allocation26 + $0xa4] sm:$0xf]
    %v4459 = vld [vmem:[#allocation26 + $0xa8] sm:$0xf]
    %v4460 = vld [vmem:[#allocation26 + $0xac] sm:$0xf]
    %v4461 = vld [vmem:[#allocation26 + $0xb0] sm:$0xf]
    %v4462 = vld [vmem:[#allocation26 + $0xb4] sm:$0xf]
    %v4463 = vld [vmem:[#allocation26 + $0xb8] sm:$0xf]
    %v4464 = vld [vmem:[#allocation26 + $0xbc] sm:$0xf]
    %v4465 = vld [vmem:[#allocation26 + $0xc0] sm:$0xf]
    %v4466 = vld [vmem:[#allocation26 + $0xc4] sm:$0xf]
    %v4467 = vld [vmem:[#allocation26 + $0xc8] sm:$0xf]
    %v4468 = vld [vmem:[#allocation26 + $0xcc] sm:$0xf]
    %v4469 = vld [vmem:[#allocation26 + $0xd0] sm:$0xf]
    %v4470 = vld [vmem:[#allocation26 + $0xd4] sm:$0xf]
    %v4471 = vld [vmem:[#allocation26 + $0xd8] sm:$0xf]
    %v4472 = vld [vmem:[#allocation26 + $0xdc] sm:$0xf]
    %v4473 = vld [vmem:[#allocation26 + $0xe0] sm:$0xf]
    %v4474 = vld [vmem:[#allocation26 + $0xe4] sm:$0xf]
    %v4475 = vld [vmem:[#allocation26 + $0xe8] sm:$0xf]
    %v4476 = vld [vmem:[#allocation26 + $0xec] sm:$0xf]
    %v4477 = vld [vmem:[#allocation26 + $0xf0] sm:$0xf]
    %v4478 = vld [vmem:[#allocation26 + $0xf4] sm:$0xf]
    %v4479 = vld [vmem:[#allocation26 + $0xf8] sm:$0xf]
    %v4480 = vld [vmem:[#allocation26 + $0xfc] sm:$0xf]
    %v4481 = vld [vmem:[%s19] sm:$0x1]
    %v4483 = vlaneseq
    %v4484 = vshrl.u32 %v4483, 7
    %v4485 = vsub.s32 0, %v4484
    %v4486 = vrot.slane %v4481, %v4485
    %v4552 = vunpack.c.l.b16 %v4417
    %v4553 = vunpack.c.l.b16 %v4418
    %v4554 = vunpack.c.l.b16 %v4419
    %v4555 = vunpack.c.l.b16 %v4420
    %v4556 = vunpack.c.l.b16 %v4421
    %v4557 = vunpack.c.l.b16 %v4422
    %v4558 = vunpack.c.l.b16 %v4423
    %v4559 = vunpack.c.l.b16 %v4424
    %v4560 = vunpack.c.l.b16 %v4425
    %v4561 = vunpack.c.l.b16 %v4426
    %v4562 = vunpack.c.l.b16 %v4427
    %v4563 = vunpack.c.l.b16 %v4428
    %v4564 = vunpack.c.l.b16 %v4429
    %v4565 = vunpack.c.l.b16 %v4430
    %v4566 = vunpack.c.l.b16 %v4431
    %v4567 = vunpack.c.l.b16 %v4432
    %v4568 = vunpack.c.l.b16 %v4433
    %v4569 = vunpack.c.l.b16 %v4434
    %v4570 = vunpack.c.l.b16 %v4435
    %v4571 = vunpack.c.l.b16 %v4436
    %v4572 = vunpack.c.l.b16 %v4437
    %v4573 = vunpack.c.l.b16 %v4438
    %v4574 = vunpack.c.l.b16 %v4439
    %v4575 = vunpack.c.l.b16 %v4440
    %v4576 = vunpack.c.l.b16 %v4441
    %v4577 = vunpack.c.l.b16 %v4442
    %v4578 = vunpack.c.l.b16 %v4443
    %v4579 = vunpack.c.l.b16 %v4444
    %v4580 = vunpack.c.l.b16 %v4445
    %v4581 = vunpack.c.l.b16 %v4446
    %v4582 = vunpack.c.l.b16 %v4447
    %v4583 = vunpack.c.l.b16 %v4448
    %v4584 = vunpack.c.l.b16 %v4449
    %v4585 = vunpack.c.l.b16 %v4450
    %v4586 = vunpack.c.l.b16 %v4451
    %v4587 = vunpack.c.l.b16 %v4452
    %v4588 = vunpack.c.l.b16 %v4453
    %v4589 = vunpack.c.l.b16 %v4454
    %v4590 = vunpack.c.l.b16 %v4455
    %v4591 = vunpack.c.l.b16 %v4456
    %v4592 = vunpack.c.l.b16 %v4457
    %v4593 = vunpack.c.l.b16 %v4458
    %v4594 = vunpack.c.l.b16 %v4459
    %v4595 = vunpack.c.l.b16 %v4460
    %v4596 = vunpack.c.l.b16 %v4461
    %v4597 = vunpack.c.l.b16 %v4462
    %v4598 = vunpack.c.l.b16 %v4463
    %v4599 = vunpack.c.l.b16 %v4464
    %v4600 = vunpack.c.l.b16 %v4465
    %v4601 = vunpack.c.l.b16 %v4466
    %v4602 = vunpack.c.l.b16 %v4467
    %v4603 = vunpack.c.l.b16 %v4468
    %v4604 = vunpack.c.l.b16 %v4469
    %v4605 = vunpack.c.l.b16 %v4470
    %v4606 = vunpack.c.l.b16 %v4471
    %v4607 = vunpack.c.l.b16 %v4472
    %v4608 = vunpack.c.l.b16 %v4473
    %v4609 = vunpack.c.l.b16 %v4474
    %v4610 = vunpack.c.l.b16 %v4475
    %v4611 = vunpack.c.l.b16 %v4476
    %v4612 = vunpack.c.l.b16 %v4477
    %v4613 = vunpack.c.l.b16 %v4478
    %v4614 = vunpack.c.l.b16 %v4479
    %v4615 = vunpack.c.l.b16 %v4480
    %v4616 = vpack.c.b16 %v4553, %v4552
    %v4617 = vpack.c.b16 %v4555, %v4554
    %v4618 = vpack.c.b16 %v4557, %v4556
    %v4619 = vpack.c.b16 %v4559, %v4558
    %v4620 = vpack.c.b16 %v4561, %v4560
    %v4621 = vpack.c.b16 %v4563, %v4562
    %v4622 = vpack.c.b16 %v4565, %v4564
    %v4623 = vpack.c.b16 %v4567, %v4566
    %v4624 = vpack.c.b16 %v4569, %v4568
    %v4625 = vpack.c.b16 %v4571, %v4570
    %v4626 = vpack.c.b16 %v4573, %v4572
    %v4627 = vpack.c.b16 %v4575, %v4574
    %v4628 = vpack.c.b16 %v4577, %v4576
    %v4629 = vpack.c.b16 %v4579, %v4578
    %v4630 = vpack.c.b16 %v4581, %v4580
    %v4631 = vpack.c.b16 %v4583, %v4582
    %v4632 = vpack.c.b16 %v4585, %v4584
    %v4633 = vpack.c.b16 %v4587, %v4586
    %v4634 = vpack.c.b16 %v4589, %v4588
    %v4635 = vpack.c.b16 %v4591, %v4590
    %v4636 = vpack.c.b16 %v4593, %v4592
    %v4637 = vpack.c.b16 %v4595, %v4594
    %v4638 = vpack.c.b16 %v4597, %v4596
    %v4639 = vpack.c.b16 %v4599, %v4598
    %v4640 = vpack.c.b16 %v4601, %v4600
    %v4641 = vpack.c.b16 %v4603, %v4602
    %v4642 = vpack.c.b16 %v4605, %v4604
    %v4643 = vpack.c.b16 %v4607, %v4606
    %v4644 = vpack.c.b16 %v4609, %v4608
    %v4645 = vpack.c.b16 %v4611, %v4610
    %v4646 = vpack.c.b16 %v4613, %v4612
    %v4647 = vpack.c.b16 %v4615, %v4614
    %4680 = vmatprep.subr.bf16.mxu0 0
    %4681 = vmatpush1.bf16.msra.mxu0 %v4616
    %4682 = vmatprep.subr.bf16.mxu0 0
    %4683 = vmatpush1.bf16.msra.mxu0 %v4617
    %4684 = vmatprep.subr.bf16.mxu0 0
    %4685 = vmatpush1.bf16.msra.mxu0 %v4618
    %4686 = vmatprep.subr.bf16.mxu0 0
    %4687 = vmatpush1.bf16.msra.mxu0 %v4619
    %4688 = vmatprep.subr.bf16.mxu0 0
    %4689 = vmatpush1.bf16.msra.mxu0 %v4620
    %4690 = vmatprep.subr.bf16.mxu0 0
    %4691 = vmatpush1.bf16.msra.mxu0 %v4621
    %4692 = vmatprep.subr.bf16.mxu0 0
    %4693 = vmatpush1.bf16.msra.mxu0 %v4622
    %4694 = vmatprep.subr.bf16.mxu0 0
    %4695 = vmatpush1.bf16.msra.mxu0 %v4623
    %4696 = vmatprep.subr.bf16.mxu0 0
    %4697 = vmatpush1.bf16.msra.mxu0 %v4624
    %4698 = vmatprep.subr.bf16.mxu0 0
    %4699 = vmatpush1.bf16.msra.mxu0 %v4625
    %4700 = vmatprep.subr.bf16.mxu0 0
    %4701 = vmatpush1.bf16.msra.mxu0 %v4626
    %4702 = vmatprep.subr.bf16.mxu0 0
    %4703 = vmatpush1.bf16.msra.mxu0 %v4627
    %4704 = vmatprep.subr.bf16.mxu0 0
    %4705 = vmatpush1.bf16.msra.mxu0 %v4628
    %4706 = vmatprep.subr.bf16.mxu0 0
    %4707 = vmatpush1.bf16.msra.mxu0 %v4629
    %4708 = vmatprep.subr.bf16.mxu0 0
    %4709 = vmatpush1.bf16.msra.mxu0 %v4630
    %4710 = vmatprep.subr.bf16.mxu0 0
    %4711 = vmatpush1.bf16.msra.mxu0 %v4631
    %4712 = vmatprep.mubr.bf16.mxu0 %v4414
    %4713 = vmatmul.mubr.bf16.gmra.mrb[0].mxu0 %v4413
    %v4714 = vpop.f32.mrb[0].mxu0
    %v4715 = vadd.f32 %v4486, %v4714
    %v4716 = vpop.f32.mrb[0].mxu0
    %v4717 = vpop.f32.mrb[0].mxu0
    %v4718 = vpop.f32.mrb[0].mxu0
    %4719 = vdwg.mxu0
    %4720 = vmatprep.subr.bf16.mxu0 0
    %4721 = vmatpush1.bf16.msra.mxu0 %v4632
    %4722 = vmatprep.subr.bf16.mxu0 0
    %4723 = vmatpush1.bf16.msra.mxu0 %v4633
    %4724 = vmatprep.subr.bf16.mxu0 0
    %4725 = vmatpush1.bf16.msra.mxu0 %v4634
    %4726 = vmatprep.subr.bf16.mxu0 0
    %4727 = vmatpush1.bf16.msra.mxu0 %v4635
    %4728 = vmatprep.subr.bf16.mxu0 0
    %4729 = vmatpush1.bf16.msra.mxu0 %v4636
    %4730 = vmatprep.subr.bf16.mxu0 0
    %4731 = vmatpush1.bf16.msra.mxu0 %v4637
    %4732 = vmatprep.subr.bf16.mxu0 0
    %4733 = vmatpush1.bf16.msra.mxu0 %v4638
    %4734 = vmatprep.subr.bf16.mxu0 0
    %4735 = vmatpush1.bf16.msra.mxu0 %v4639
    %4736 = vmatprep.subr.bf16.mxu0 0
    %4737 = vmatpush1.bf16.msra.mxu0 %v4640
    %4738 = vmatprep.subr.bf16.mxu0 0
    %4739 = vmatpush1.bf16.msra.mxu0 %v4641
    %4740 = vmatprep.subr.bf16.mxu0 0
    %4741 = vmatpush1.bf16.msra.mxu0 %v4642
    %4742 = vmatprep.subr.bf16.mxu0 0
    %4743 = vmatpush1.bf16.msra.mxu0 %v4643
    %4744 = vmatprep.subr.bf16.mxu0 0
    %4745 = vmatpush1.bf16.msra.mxu0 %v4644
    %4746 = vmatprep.subr.bf16.mxu0 0
    %4747 = vmatpush1.bf16.msra.mxu0 %v4645
    %4748 = vmatprep.subr.bf16.mxu0 0
    %4749 = vmatpush1.bf16.msra.mxu0 %v4646
    %4750 = vmatprep.subr.bf16.mxu0 0
    %4751 = vmatpush1.bf16.msra.mxu0 %v4647
    %4752 = vmatprep.mubr.bf16.mxu0 %v4416
    %4753 = vmatmul.mubr.bf16.gmra.mrb[0].mxu0 %v4415
    %v4754 = vpop.f32.mrb[0].mxu0
    %v4755 = vadd.f32 %v4715, %v4754
    %v4756 = vpop.f32.mrb[0].mxu0
    %v4757 = vpop.f32.mrb[0].mxu0
    %v4758 = vpop.f32.mrb[0].mxu0
    %4759 = vdwg.mxu0
    %v4760 = vpack.c.bf16 %v4755, %v4755
    %v4761 = vld [vmem:[#allocation28] sm:$0xf]
    %v4762 = vld [vmem:[#allocation28 + $0x4] sm:$0xf]
    %v4763 = vld [vmem:[#allocation28 + $0x8] sm:$0xf]
    %v4764 = vld [vmem:[#allocation28 + $0xc] sm:$0xf]
    %v4765 = vld [vmem:[#allocation28 + $0x10] sm:$0xf]
    %v4766 = vld [vmem:[#allocation28 + $0x14] sm:$0xf]
    %v4767 = vld [vmem:[#allocation28 + $0x18] sm:$0xf]
    %v4768 = vld [vmem:[#allocation28 + $0x1c] sm:$0xf]
    %v4769 = vld [vmem:[#allocation28 + $0x20] sm:$0xf]
    %v4770 = vld [vmem:[#allocation28 + $0x24] sm:$0xf]
    %v4771 = vld [vmem:[#allocation28 + $0x28] sm:$0xf]
    %v4772 = vld [vmem:[#allocation28 + $0x2c] sm:$0xf]
    %v4773 = vld [vmem:[#allocation28 + $0x30] sm:$0xf]
    %v4774 = vld [vmem:[#allocation28 + $0x34] sm:$0xf]
    %v4775 = vld [vmem:[#allocation28 + $0x38] sm:$0xf]
    %v4776 = vld [vmem:[#allocation28 + $0x3c] sm:$0xf]
    %v4777 = vld [vmem:[%s21] sm:$0x1]
    %v4779 = vlaneseq
    %v4780 = vshrl.u32 %v4779, 7
    %v4781 = vsub.s32 0, %v4780
    %v4782 = vrot.slane %v4777, %v4781
    %v4800 = vunpack.c.l.b16 %v4761
    %v4801 = vunpack.c.l.b16 %v4762
    %v4802 = vunpack.c.l.b16 %v4763
    %v4803 = vunpack.c.l.b16 %v4764
    %v4804 = vunpack.c.l.b16 %v4765
    %v4805 = vunpack.c.l.b16 %v4766
    %v4806 = vunpack.c.l.b16 %v4767
    %v4807 = vunpack.c.l.b16 %v4768
    %v4808 = vunpack.c.l.b16 %v4769
    %v4809 = vunpack.c.l.b16 %v4770
    %v4810 = vunpack.c.l.b16 %v4771
    %v4811 = vunpack.c.l.b16 %v4772
    %v4812 = vunpack.c.l.b16 %v4773
    %v4813 = vunpack.c.l.b16 %v4774
    %v4814 = vunpack.c.l.b16 %v4775
    %v4815 = vunpack.c.l.b16 %v4776
    %v4816 = vpack.c.b16 %v4801, %v4800
    %v4817 = vpack.c.b16 %v4803, %v4802
    %v4818 = vpack.c.b16 %v4805, %v4804
    %v4819 = vpack.c.b16 %v4807, %v4806
    %v4820 = vpack.c.b16 %v4809, %v4808
    %v4821 = vpack.c.b16 %v4811, %v4810
    %v4822 = vpack.c.b16 %v4813, %v4812
    %v4823 = vpack.c.b16 %v4815, %v4814
    %4832 = vmatprep.subr.bf16.mxu0 0
    %4833 = vmatpush1.bf16.msra.mxu0 %v4816
    %4834 = vmatprep.subr.bf16.mxu0 0
    %4835 = vmatpush1.bf16.msra.mxu0 %v4817
    %4836 = vmatprep.subr.bf16.mxu0 0
    %4837 = vmatpush1.bf16.msra.mxu0 %v4818
    %4838 = vmatprep.subr.bf16.mxu0 0
    %4839 = vmatpush1.bf16.msra.mxu0 %v4819
    %4840 = vmatprep.subr.bf16.mxu0 0
    %4841 = vmatpush1.bf16.msra.mxu0 %v4820
    %4842 = vmatprep.subr.bf16.mxu0 0
    %4843 = vmatpush1.bf16.msra.mxu0 %v4821
    %4844 = vmatprep.subr.bf16.mxu0 0
    %4845 = vmatpush1.bf16.msra.mxu0 %v4822
    %4846 = vmatprep.subr.bf16.mxu0 0
    %4847 = vmatpush1.bf16.msra.mxu0 %v4823
    %4848 = vmatprep.subr.bf16.mxu0 0
    %4849 = vmatpush1.bf16.msra.mxu0 0
    %4850 = vmatprep.subr.bf16.mxu0 0
    %4851 = vmatpush1.bf16.msra.mxu0 0
    %4852 = vmatprep.subr.bf16.mxu0 0
    %4853 = vmatpush1.bf16.msra.mxu0 0
    %4854 = vmatprep.subr.bf16.mxu0 0
    %4855 = vmatpush1.bf16.msra.mxu0 0
    %4856 = vmatprep.subr.bf16.mxu0 0
    %4857 = vmatpush1.bf16.msra.mxu0 0
    %4858 = vmatprep.subr.bf16.mxu0 0
    %4859 = vmatpush1.bf16.msra.mxu0 0
    %4860 = vmatprep.subr.bf16.mxu0 0
    %4861 = vmatpush1.bf16.msra.mxu0 0
    %4862 = vmatprep.subr.bf16.mxu0 0
    %4863 = vmatpush1.bf16.msra.mxu0 0
    %4864 = vmatprep.mubr.bf16.mxu0 0
    %4865 = vmatmul.mubr.bf16.gmra.mrb[0].mxu0 %v4760
    %v4866 = vpop.f32.mrb[0].mxu0
    %v4867 = vadd.f32 %v4782, %v4866
    %v4868 = vpop.f32.mrb[0].mxu0
    %v4869 = vpop.f32.mrb[0].mxu0
    %v4870 = vpop.f32.mrb[0].mxu0
    %4871 = vdwg.mxu0
    %4872 = vst [vmem:[#allocation29] sm:$0x3] %v4867
    // Predicated region
    $region158: #{shared_model_forward.1} parent=1 // pred_check
      _
    $region159: #{shared_model_forward.1} parent=1 // pred_check_branch
      %4874 = sbr.rel (0) target = $region161
    $region160: #{shared_model_forward.1} parent=1 // pred_region
      %s4876 = ssub.s32 32, 32
      %4877 = vsyncadd [#allocation4], %s4876
      %s4879 = sshll.u32 [#allocation29], 4
      %s4880 = int_to_ptr.vmem [resolvable:$true] %s4879
      %4882 = dma.vmem_to_hbm [thread:$0]  %s4880, 32, %s22, [#allocation4]
    $region161: #{shared_model_forward.1} parent=1 // pred_fallthru
      _
    // Predicated region
    $region162: #{shared_model_forward.1} parent=1 // pred_check
      _
    $region163: #{shared_model_forward.1} parent=1 // pred_check_branch
      %4884 = sbr.rel (0) target = $region165
    $region164: #{shared_model_forward.1} parent=1 // pred_region
      %4885 = dma.done [#allocation4], 32
    $region165: #{shared_model_forward.1} parent=1 // pred_fallthru
      _
    %4886 = vsyncpa [#allocation3], 1
    %4887 = vsyncpa [#allocation6], 1
    %4888 = vsyncpa [#allocation9], 1
    %4889 = vsyncpa [#allocation12], 1
    %4890 = vsyncpa [#allocation15], 1
    %4891 = vsyncpa [#allocation18], 1
    %4892 = vsyncpa [#allocation21], 1
    %4893 = vsyncpa [#allocation24], 1
    %4894 = vsyncpa [#allocation27], 1
    %4895 = vsyncpa [#allocation4], 1

</llo_original>
